<compile_context>
chip_gen: v6e
topology: v6e:2x2x1
jax: 0.10.0
libtpu: 0.0.40
codegen_flags: <defaults>
</compile_context>

<pallas_src>
import functools

import jax
import jax.numpy as jnp
from jax import lax
from jax.experimental import pallas as pl
from jax.experimental.pallas import tpu as pltpu


# ----------------------------------------------------------------------------
# Fused kernel
# ----------------------------------------------------------------------------
def _fsum(a):
    # (R, C) -> (1, 1): lane reduce then sublane reduce
    return jnp.sum(jnp.sum(a, axis=1, keepdims=True), axis=0, keepdims=True)


def vicreg_kernel(exy_ref, lam_ref, w1_ref, b1_ref, g_ref, beta_ref, w2_ref,
                  scal_ref, gram_ref, h_ref, *, b):
    """One grid step = one (H, TN) chunk of the second Linear + loss partials.

    grid = (NC, n_j): axis 0 ("parallel") splits D tiles across TensorCores,
    axis 1 ("arbitrary") walks the D chunks of this core.
    """
    j = pl.program_id(1)

    @pl.when(j == 0)
    def _init_and_stage1():
        # Zero the resident output accumulators for this core.
        scal_ref[...] = jnp.zeros_like(scal_ref)
        gram_ref[...] = jnp.zeros_like(gram_ref)

        # ---- stage 1: Linear(E->H) + BatchNorm1d + ReLU, once per core ----
        h = jnp.dot(exy_ref[...], w1_ref[...],
                    preferred_element_type=jnp.float32) + b1_ref[...]
        g = g_ref[...]
        bt = beta_ref[...]

        def bn(hs):
            mu = jnp.mean(hs, axis=0, keepdims=True)
            var = jnp.mean((hs - mu) * (hs - mu), axis=0, keepdims=True)
            return (hs - mu) * lax.rsqrt(var + 1e-5) * g + bt

        # BatchNorm statistics MUST stay per projector pass: rows [0:2b] are
        # projector(embed) (batch 2b), rows [2b:3b] are projector(embed_z)
        # (batch b).  Computing them over all 3b rows would change the model.
        h_xy = bn(h[: 2 * b])
        h_z = bn(h[2 * b:])
        h_relu = jnp.maximum(jnp.concatenate([h_xy, h_z], axis=0), 0.0)
        h_ref[...] = h_relu.astype(h_ref.dtype)          # bf16 for the MXU

    # ---- stage 2: Linear(H -> TN chunk), bf16 MXU / f32 accumulate ----
    xy = jnp.dot(h_ref[...], w2_ref[...],
                 preferred_element_type=jnp.float32)      # (3b, TN) f32

    x = xy[:b]
    y = xy[b:2 * b]
    z = xy[2 * b:]
    lam = lam_ref[...]                                    # (b, 1) f32

    # repr_loss partial: sum over this feature chunk of (z - mix)^2
    diff = z - (lam * x + (1.0 - lam) * y)
    repr_p = _fsum(diff * diff)                           # (1, 1)

    # center per chunk (mean over the batch axis is local to each feature)
    xc = x - jnp.mean(x, axis=0, keepdims=True)
    yc = y - jnp.mean(y, axis=0, keepdims=True)

    # std loss partials (unbiased variance, matches torch.var default)
    inv_bm1 = 1.0 / float(b - 1)
    var_x = jnp.sum(xc * xc, axis=0, keepdims=True) * inv_bm1   # (1, TN)
    var_y = jnp.sum(yc * yc, axis=0, keepdims=True) * inv_bm1
    hx_p = jnp.sum(jnp.maximum(1.0 - jnp.sqrt(var_x + 1e-4), 0.0),
                   axis=1, keepdims=True)
    hy_p = jnp.sum(jnp.maximum(1.0 - jnp.sqrt(var_y + 1e-4), 0.0),
                   axis=1, keepdims=True)
    svx_p = jnp.sum(var_x * var_x, axis=1, keepdims=True)        # sum(var^2)
    svy_p = jnp.sum(var_y * var_y, axis=1, keepdims=True)

    # merged Gram partial (keep f32 — do NOT cast to bf16):
    #   G += [xc; yc] @ [xc; yc]^T, only the two diagonal b x b blocks are
    #   used by the wrapper (Gx, Gy).
    xyc = jnp.concatenate([xc, yc], axis=0)               # (2b, TN)
    dn = (((1,), (1,)), ((), ()))                         # contract feature axis
    gram_ref[...] += lax.dot_general(xyc, xyc, dn,
                                     preferred_element_type=jnp.float32)

    # single lane-dense scalar slab: lanes 0..4 hold the five partial sums
    lane = lax.broadcasted_iota(jnp.int32, (1, 128), 1)
    scal_ref[...] += (jnp.where(lane == 0, repr_p, 0.0)
                      + jnp.where(lane == 1, hx_p, 0.0)
                      + jnp.where(lane == 2, hy_p, 0.0)
                      + jnp.where(lane == 3, svx_p, 0.0)
                      + jnp.where(lane == 4, svy_p, 0.0))


# ----------------------------------------------------------------------------
# Forward wrapper (glue in plain JAX)
# ----------------------------------------------------------------------------
def _num_core_splits():
    # TODO(synk): heuristic chip-generation gate; v7x exposes 2 TensorCores per
    # device, v5e/v6e have 1 (splitting there would be pure overhead).
    try:
        kind = jax.devices()[0].device_kind.lower()
    except Exception:
        return 1
    return 2 if ("v7" in kind or "7x" in kind) else 1


def _pick_tn(d_per_core):
    for tn in (512, 256, 128):
        if d_per_core % tn == 0:
            return tn
    return d_per_core


def vicreg_forward(embed, embed_z, lam, params,
                   sim_coeff=25.0, std_coeff=25.0, cov_coeff=1.0):
    w1, b1, gamma, beta, w2 = params
    b = embed_z.shape[0]
    e = embed.shape[1]
    h = w1.shape[1]
    d = w2.shape[1]

    nc = _num_core_splits()
    if d % nc != 0:
        nc = 1
    tn = _pick_tn(d // nc)
    n_j = (d // nc) // tn

    # One fused projector input: rows [0:2b] = embed, rows [2b:3b] = embed_z.
    # bf16 weights/activations for the MXU (f32 accumulation in-kernel);
    # BN / variance / loss arithmetic stays in f32.
    exy = jnp.concatenate([embed, embed_z], axis=0).astype(jnp.bfloat16)
    w1_bf = w1.astype(jnp.bfloat16)
    w2_bf = w2.astype(jnp.bfloat16)

    kernel = functools.partial(vicreg_kernel, b=b)
    scal, gram = pl.pallas_call(
        kernel,
        out_shape=(jax.ShapeDtypeStruct((nc, 1, 128), jnp.float32),
                   jax.ShapeDtypeStruct((nc, 2 * b, 2 * b), jnp.float32)),
        grid=(nc, n_j),
        in_specs=[
            pl.BlockSpec((3 * b, e), lambda c, j: (0, 0)),        # exy (resident)
            pl.BlockSpec((b, 1), lambda c, j: (0, 0)),            # lam
            pl.BlockSpec((e, h), lambda c, j: (0, 0)),            # w1
            pl.BlockSpec((1, h), lambda c, j: (0, 0)),            # b1
            pl.BlockSpec((1, h), lambda c, j: (0, 0)),            # gamma
            pl.BlockSpec((1, h), lambda c, j: (0, 0)),            # beta
            pl.BlockSpec((h, tn), lambda c, j: (0, c * n_j + j)), # w2 chunk
        ],
        out_specs=(
            pl.BlockSpec((None, 1, 128), lambda c, j: (c, 0, 0)),      # scalar slab
            pl.BlockSpec((None, 2 * b, 2 * b), lambda c, j: (c, 0, 0)),# Gram acc
        ),
        scratch_shapes=[pltpu.VMEM((3 * b, h), jnp.bfloat16)],          # ReLU(BN(h))
        compiler_params=pltpu.CompilerParams(
            dimension_semantics=("parallel", "arbitrary"),
            vmem_limit_bytes=8 << 20),
    )(exy, lam, w1_bf, b1, gamma, beta, w2_bf)

    # Finalize (trivial XLA-side math on tiny tensors): sum per-core partials.
    scal = jnp.sum(scal, axis=0)                 # (1, 128)
    gram = jnp.sum(gram, axis=0)                 # (2b, 2b)

    repr_loss = scal[0, 0] / float(b * d)
    std_loss = 0.5 * (scal[0, 1] + scal[0, 2]) / float(d)
    gx = gram[:b, :b]
    gy = gram[b:, b:]
    frob = jnp.sum(gx * gx) + jnp.sum(gy * gy)
    cov_loss = (frob / float((b - 1) * (b - 1))
                - (scal[0, 3] + scal[0, 4])) / float(d)
    loss = sim_coeff * repr_loss + std_coeff * std_loss + cov_coeff * cov_loss
    return {"embedding": embed, "repr_loss": repr_loss, "std_loss": std_loss,
            "cov_loss": cov_loss, "loss": loss}


# ----------------------------------------------------------------------------
# Pure-JAX reference (same bf16-matmul / f32-accumulate policy as the kernel,
# but with the naive D x D masked covariance formulation)
# ----------------------------------------------------------------------------
def _projector_ref(e, w1, b1, gamma, beta, w2):
    h = jnp.dot(e.astype(jnp.bfloat16), w1.astype(jnp.bfloat16),
                preferred_element_type=jnp.float32) + b1
    mu = h.mean(0, keepdims=True)
    var = ((h - mu) ** 2).mean(0, keepdims=True)
    h = (h - mu) / jnp.sqrt(var + 1e-5) * gamma + beta
    h = jnp.maximum(h, 0.0)
    return jnp.dot(h.astype(jnp.bfloat16), w2.astype(jnp.bfloat16),
                   preferred_element_type=jnp.float32)


def _forward_ref(embed, embed_z, lam, params):
    w1, b1, gamma, beta, w2 = params
    b = embed_z.shape[0]
    d = w2.shape[1]
    x_y = _projector_ref(embed, w1, b1, gamma, beta, w2)
    x, y = x_y[:b], x_y[b:]
    z = _projector_ref(embed_z, w1, b1, gamma, beta, w2)
    repr_loss = jnp.mean((z - (lam * x + (1.0 - lam) * y)) ** 2)
    x = x - x.mean(0)
    y = y - y.mean(0)
    std_x = jnp.sqrt(x.var(0, ddof=1) + 1e-4)
    std_y = jnp.sqrt(y.var(0, ddof=1) + 1e-4)
    std_loss = (jnp.mean(jnp.maximum(1 - std_x, 0)) / 2
                + jnp.mean(jnp.maximum(1 - std_y, 0)) / 2)
    cov_x = x.T @ x / (b - 1)
    cov_y = y.T @ y / (b - 1)
    mask = 1.0 - jnp.eye(d, dtype=jnp.float32)
    cov_loss = (jnp.sum((cov_x * mask) ** 2) / d
                + jnp.sum((cov_y * mask) ** 2) / d)
    loss = 25.0 * repr_loss + 25.0 * std_loss + 1.0 * cov_loss
    return repr_loss, std_loss, cov_loss, loss


# ----------------------------------------------------------------------------
if __name__ == "__main__":
    key = jax.random.PRNGKey(0)
    B = 8        # batch_size (len(wave) == 2 * B)
    E = 320      # embedding_size (backbone output channels)
    H = 1280     # mlp='1280-1280-1280' -> projector hidden / output = num_features

    ks = jax.random.split(key, 8)

    # Surrogate backbone outputs (see TODO(synk) above).
    embed = jax.random.normal(ks[0], (2 * B, E), jnp.float32)      # backbone(spec)
    embed_z = jax.random.normal(ks[1], (B, E), jnp.float32)        # backbone(mixed spec)

    # Projector parameters: Linear(320,1280) + BN(1280) + ReLU + Linear(1280,1280,no bias)
    lim1 = float(E) ** -0.5
    lim2 = float(H) ** -0.5
    w1 = jax.random.uniform(ks[2], (E, H), jnp.float32, -lim1, lim1)
    b1 = jax.random.uniform(ks[3], (1, H), jnp.float32, -lim1, lim1)
    gamma = jnp.ones((1, H), jnp.float32)
    beta = jnp.zeros((1, H), jnp.float32)
    w2 = jax.random.uniform(ks[4], (H, H), jnp.float32, -lim2, lim2)
    params = (w1, b1, gamma, beta, w2)

    # lam ~ Beta(0.5, 0.5), shape (B, 1)  (deterministic replacement for np.random.beta)
    lam = jax.random.beta(ks[5], 0.5, 0.5, (B, 1)).astype(jnp.float32)

    out = vicreg_forward(embed, embed_z, lam, params)
    out = jax.tree_util.tree_map(jax.block_until_ready, out)

    # Sanity-check against a pure-JAX reference with the same dtype policy.
    r_ref, s_ref, c_ref, l_ref = _forward_ref(embed, embed_z, lam, params)
    assert jnp.allclose(out["repr_loss"], r_ref, rtol=2e-2, atol=1e-3)
    assert jnp.allclose(out["std_loss"], s_ref, rtol=2e-2, atol=1e-3)
    assert jnp.allclose(out["cov_loss"], c_ref, rtol=2e-2, atol=1e-2)
    assert jnp.allclose(out["loss"], l_ref, rtol=2e-2, atol=1e-2)
    assert bool(jnp.isfinite(out["loss"]))

    print("KERNEL_OK")
</pallas_src>

<mosaic_0001>
module attributes {stable_mosaic.version = 11 : i64} {
  func.func @vicreg_kernel(%arg0: i32, %arg1: i32, %arg2: memref<24x320xbf16, #tpu.memory_space<vmem>>, %arg3: memref<8x1xf32, #tpu.memory_space<vmem>>, %arg4: memref<320x1280xbf16, #tpu.memory_space<vmem>>, %arg5: memref<1x1280xf32, #tpu.memory_space<vmem>>, %arg6: memref<1x1280xf32, #tpu.memory_space<vmem>>, %arg7: memref<1x1280xf32, #tpu.memory_space<vmem>>, %arg8: memref<1280x256xbf16, #tpu.memory_space<vmem>>, %arg9: memref<1x1x128xf32, #tpu.memory_space<vmem>>, %arg10: memref<1x16x16xf32, #tpu.memory_space<vmem>>, %arg11: memref<24x1280xbf16, #tpu.memory_space<vmem>>) attributes {dimension_semantics = [#tpu.dimension_semantics<parallel>, #tpu.dimension_semantics<arbitrary>], iteration_bounds = array<i64: 1, 5>, scalar_prefetch = 0 : i64, scratch_operands = 1 : i64, tpu.core_type = #tpu.core_type<tc>, window_params = [{pipeline_mode = #tpu.pipeline_mode<synchronous>, transform_indices = @transform_0, window_bounds = array<i64: 24, 320>}, {pipeline_mode = #tpu.pipeline_mode<synchronous>, transform_indices = @transform_1, window_bounds = array<i64: 8, 1>}, {pipeline_mode = #tpu.pipeline_mode<synchronous>, transform_indices = @transform_2, window_bounds = array<i64: 320, 1280>}, {pipeline_mode = #tpu.pipeline_mode<synchronous>, transform_indices = @transform_3, window_bounds = array<i64: 1, 1280>}, {pipeline_mode = #tpu.pipeline_mode<synchronous>, transform_indices = @transform_4, window_bounds = array<i64: 1, 1280>}, {pipeline_mode = #tpu.pipeline_mode<synchronous>, transform_indices = @transform_5, window_bounds = array<i64: 1, 1280>}, {transform_indices = @transform_6, window_bounds = array<i64: 1280, 256>}, {transform_indices = @transform_7, window_bounds = array<i64: 1, 1, 128>}, {transform_indices = @transform_8, window_bounds = array<i64: 1, 16, 16>}]} {
    %c0_i32 = arith.constant 0 : i32
    %0 = arith.cmpi eq, %arg1, %c0_i32 : i32
    %1 = arith.extui %0 : i1 to i32
    %c0_i32_0 = arith.constant 0 : i32
    %2 = arith.cmpi ne, %1, %c0_i32_0 : i32
    scf.if %2 {
      %cst_46 = arith.constant 0.000000e+00 : f32
      %118 = vector.broadcast %cst_46 : f32 to vector<1x128xf32>
      %c0_47 = arith.constant 0 : index
      %c0_48 = arith.constant 0 : index
      %c0_49 = arith.constant 0 : index
      %119 = vector.load %arg9[%c0_47, %c0_48, %c0_49] : memref<1x1x128xf32, #tpu.memory_space<vmem>>, vector<1x1x128xf32>
      %120 = vector.shape_cast %119 : vector<1x1x128xf32> to vector<1x128xf32>
      %121 = vector.shape_cast %118 : vector<1x128xf32> to vector<1x1x128xf32>
      tpu.vector_store %arg9[%c0_47, %c0_48, %c0_49], %121 {strides = array<i32>} : memref<1x1x128xf32, #tpu.memory_space<vmem>>, vector<1x1x128xf32>,
      %cst_50 = arith.constant 0.000000e+00 : f32
      %122 = vector.broadcast %cst_50 : f32 to vector<16x16xf32>
      %c0_51 = arith.constant 0 : index
      %c0_52 = arith.constant 0 : index
      %c0_53 = arith.constant 0 : index
      %123 = vector.load %arg10[%c0_51, %c0_52, %c0_53] : memref<1x16x16xf32, #tpu.memory_space<vmem>>, vector<1x16x16xf32>
      %124 = vector.shape_cast %123 : vector<1x16x16xf32> to vector<16x16xf32>
      %125 = vector.shape_cast %122 : vector<16x16xf32> to vector<1x16x16xf32>
      tpu.vector_store %arg10[%c0_51, %c0_52, %c0_53], %125 {strides = array<i32>} : memref<1x16x16xf32, #tpu.memory_space<vmem>>, vector<1x16x16xf32>,
      %c0_54 = arith.constant 0 : index
      %c0_55 = arith.constant 0 : index
      %126 = vector.load %arg2[%c0_54, %c0_55] : memref<24x320xbf16, #tpu.memory_space<vmem>>, vector<24x320xbf16>
      %c0_56 = arith.constant 0 : index
      %c0_57 = arith.constant 0 : index
      %127 = vector.load %arg4[%c0_56, %c0_57] : memref<320x1280xbf16, #tpu.memory_space<vmem>>, vector<320x1280xbf16>
      %cst_58 = arith.constant dense<0.000000e+00> : vector<24x1280xf32>
      %128 = tpu.matmul %126, %127, %cst_58 {dimension_numbers = #tpu.dot_dimension_numbers<[1], [0], [0], [1], [0, 0, 1, 1], [], []>} : vector<24x320xbf16>, vector<320x1280xbf16>, vector<24x1280xf32> -> vector<24x1280xf32>
      %c0_59 = arith.constant 0 : index
      %c0_60 = arith.constant 0 : index
      %129 = vector.load %arg5[%c0_59, %c0_60] : memref<1x1280xf32, #tpu.memory_space<vmem>>, vector<1x1280xf32>
      %130 = vector.broadcast %129 : vector<1x1280xf32> to vector<24x1280xf32>
      %131 = arith.addf %128, %130 : vector<24x1280xf32>
      %c0_61 = arith.constant 0 : index
      %c0_62 = arith.constant 0 : index
      %132 = vector.load %arg6[%c0_61, %c0_62] : memref<1x1280xf32, #tpu.memory_space<vmem>>, vector<1x1280xf32>
      %c0_63 = arith.constant 0 : index
      %c0_64 = arith.constant 0 : index
      %133 = vector.load %arg7[%c0_63, %c0_64] : memref<1x1280xf32, #tpu.memory_space<vmem>>, vector<1x1280xf32>
      %134 = vector.extract_strided_slice %131 {offsets = [0, 0], sizes = [16, 1280], strides = [1, 1]} : vector<24x1280xf32> to vector<16x1280xf32>
      %cst_65 = arith.constant dense<0.000000e+00> : vector<1280xf32>
      %135 = vector.multi_reduction <add>, %134, %cst_65 [0] : vector<16x1280xf32> to vector<1280xf32>
      %136 = vector.shape_cast %135 : vector<1280xf32> to vector<1x1280xf32>
      %cst_66 = arith.constant 1.600000e+01 : f32
      %137 = vector.broadcast %cst_66 : f32 to vector<1x1280xf32>
      %138 = arith.divf %136, %137 : vector<1x1280xf32>
      %139 = vector.broadcast %138 : vector<1x1280xf32> to vector<16x1280xf32>
      %140 = arith.subf %134, %139 : vector<16x1280xf32>
      %141 = vector.broadcast %138 : vector<1x1280xf32> to vector<16x1280xf32>
      %142 = arith.subf %134, %141 : vector<16x1280xf32>
      %143 = arith.mulf %140, %142 : vector<16x1280xf32>
      %cst_67 = arith.constant dense<0.000000e+00> : vector<1280xf32>
      %144 = vector.multi_reduction <add>, %143, %cst_67 [0] : vector<16x1280xf32> to vector<1280xf32>
      %145 = vector.shape_cast %144 : vector<1280xf32> to vector<1x1280xf32>
      %cst_68 = arith.constant 1.600000e+01 : f32
      %146 = vector.broadcast %cst_68 : f32 to vector<1x1280xf32>
      %147 = arith.divf %145, %146 : vector<1x1280xf32>
      %148 = vector.broadcast %138 : vector<1x1280xf32> to vector<16x1280xf32>
      %149 = arith.subf %134, %148 : vector<16x1280xf32>
      %cst_69 = arith.constant 9.99999974E-6 : f32
      %150 = vector.broadcast %cst_69 : f32 to vector<1x1280xf32>
      %151 = arith.addf %147, %150 : vector<1x1280xf32>
      %152 = math.rsqrt %151 : vector<1x1280xf32>
      %153 = vector.broadcast %152 : vector<1x1280xf32> to vector<16x1280xf32>
      %154 = arith.mulf %149, %153 : vector<16x1280xf32>
      %155 = vector.broadcast %132 : vector<1x1280xf32> to vector<16x1280xf32>
      %156 = arith.mulf %154, %155 : vector<16x1280xf32>
      %157 = vector.broadcast %133 : vector<1x1280xf32> to vector<16x1280xf32>
      %158 = arith.addf %156, %157 : vector<16x1280xf32>
      %159 = vector.extract_strided_slice %131 {offsets = [16, 0], sizes = [8, 1280], strides = [1, 1]} : vector<24x1280xf32> to vector<8x1280xf32>
      %cst_70 = arith.constant dense<0.000000e+00> : vector<1280xf32>
      %160 = vector.multi_reduction <add>, %159, %cst_70 [0] : vector<8x1280xf32> to vector<1280xf32>
      %161 = vector.shape_cast %160 : vector<1280xf32> to vector<1x1280xf32>
      %cst_71 = arith.constant 8.000000e+00 : f32
      %162 = vector.broadcast %cst_71 : f32 to vector<1x1280xf32>
      %163 = arith.divf %161, %162 : vector<1x1280xf32>
      %164 = vector.broadcast %163 : vector<1x1280xf32> to vector<8x1280xf32>
      %165 = arith.subf %159, %164 : vector<8x1280xf32>
      %166 = vector.broadcast %163 : vector<1x1280xf32> to vector<8x1280xf32>
      %167 = arith.subf %159, %166 : vector<8x1280xf32>
      %168 = arith.mulf %165, %167 : vector<8x1280xf32>
      %cst_72 = arith.constant dense<0.000000e+00> : vector<1280xf32>
      %169 = vector.multi_reduction <add>, %168, %cst_72 [0] : vector<8x1280xf32> to vector<1280xf32>
      %170 = vector.shape_cast %169 : vector<1280xf32> to vector<1x1280xf32>
      %cst_73 = arith.constant 8.000000e+00 : f32
      %171 = vector.broadcast %cst_73 : f32 to vector<1x1280xf32>
      %172 = arith.divf %170, %171 : vector<1x1280xf32>
      %173 = vector.broadcast %163 : vector<1x1280xf32> to vector<8x1280xf32>
      %174 = arith.subf %159, %173 : vector<8x1280xf32>
      %cst_74 = arith.constant 9.99999974E-6 : f32
      %175 = vector.broadcast %cst_74 : f32 to vector<1x1280xf32>
      %176 = arith.addf %172, %175 : vector<1x1280xf32>
      %177 = math.rsqrt %176 : vector<1x1280xf32>
      %178 = vector.broadcast %177 : vector<1x1280xf32> to vector<8x1280xf32>
      %179 = arith.mulf %174, %178 : vector<8x1280xf32>
      %180 = vector.broadcast %132 : vector<1x1280xf32> to vector<8x1280xf32>
      %181 = arith.mulf %179, %180 : vector<8x1280xf32>
      %182 = vector.broadcast %133 : vector<1x1280xf32> to vector<8x1280xf32>
      %183 = arith.addf %181, %182 : vector<8x1280xf32>
      %184 = tpu.concatenate %158, %183 in 0 : vector<16x1280xf32>, vector<8x1280xf32> -> vector<24x1280xf32>
      %cst_75 = arith.constant 0.000000e+00 : f32
      %185 = vector.broadcast %cst_75 : f32 to vector<24x1280xf32>
      %186 = arith.maximumf %184, %185 : vector<24x1280xf32>
      %187 = arith.truncf %186 : vector<24x1280xf32> to vector<24x1280xbf16>
      %c0_76 = arith.constant 0 : index
      %c0_77 = arith.constant 0 : index
      %188 = vector.load %arg11[%c0_76, %c0_77] : memref<24x1280xbf16, #tpu.memory_space<vmem>>, vector<24x1280xbf16>
      tpu.vector_store %arg11[%c0_76, %c0_77], %187 {strides = array<i32>} : memref<24x1280xbf16, #tpu.memory_space<vmem>>, vector<24x1280xbf16>,
    } else {
    }
    %c0 = arith.constant 0 : index
    %c0_1 = arith.constant 0 : index
    %3 = vector.load %arg11[%c0, %c0_1] : memref<24x1280xbf16, #tpu.memory_space<vmem>>, vector<24x1280xbf16>
    %c0_2 = arith.constant 0 : index
    %c0_3 = arith.constant 0 : index
    %4 = vector.load %arg8[%c0_2, %c0_3] : memref<1280x256xbf16, #tpu.memory_space<vmem>>, vector<1280x256xbf16>
    %cst = arith.constant dense<0.000000e+00> : vector<24x256xf32>
    %5 = tpu.matmul %3, %4, %cst {dimension_numbers = #tpu.dot_dimension_numbers<[1], [0], [0], [1], [0, 0, 1, 1], [], []>} : vector<24x1280xbf16>, vector<1280x256xbf16>, vector<24x256xf32> -> vector<24x256xf32>
    %6 = vector.extract_strided_slice %5 {offsets = [0, 0], sizes = [8, 256], strides = [1, 1]} : vector<24x256xf32> to vector<8x256xf32>
    %7 = vector.extract_strided_slice %5 {offsets = [8, 0], sizes = [8, 256], strides = [1, 1]} : vector<24x256xf32> to vector<8x256xf32>
    %8 = vector.extract_strided_slice %5 {offsets = [16, 0], sizes = [8, 256], strides = [1, 1]} : vector<24x256xf32> to vector<8x256xf32>
    %c0_4 = arith.constant 0 : index
    %c0_5 = arith.constant 0 : index
    %9 = vector.load %arg3[%c0_4, %c0_5] : memref<8x1xf32, #tpu.memory_space<vmem>>, vector<8x1xf32>
    %10 = vector.broadcast %9 : vector<8x1xf32> to vector<8x256xf32>
    %11 = arith.mulf %10, %6 : vector<8x256xf32>
    %cst_6 = arith.constant 1.000000e+00 : f32
    %12 = vector.broadcast %cst_6 : f32 to vector<8x1xf32>
    %13 = arith.subf %12, %9 : vector<8x1xf32>
    %14 = vector.broadcast %13 : vector<8x1xf32> to vector<8x256xf32>
    %15 = arith.mulf %14, %7 : vector<8x256xf32>
    %16 = arith.addf %11, %15 : vector<8x256xf32>
    %17 = arith.subf %8, %16 : vector<8x256xf32>
    %18 = arith.mulf %17, %17 : vector<8x256xf32>
    %cst_7 = arith.constant dense<0.000000e+00> : vector<8xf32>
    %19 = vector.multi_reduction <add>, %18, %cst_7 [1] : vector<8x256xf32> to vector<8xf32>
    %20 = vector.shape_cast %19 : vector<8xf32> to vector<8x1xf32>
    %cst_8 = arith.constant dense<0.000000e+00> : vector<1xf32>
    %21 = vector.multi_reduction <add>, %20, %cst_8 [0] : vector<8x1xf32> to vector<1xf32>
    %22 = vector.shape_cast %21 : vector<1xf32> to vector<1x1xf32>
    %cst_9 = arith.constant dense<0.000000e+00> : vector<256xf32>
    %23 = vector.multi_reduction <add>, %6, %cst_9 [0] : vector<8x256xf32> to vector<256xf32>
    %24 = vector.shape_cast %23 : vector<256xf32> to vector<1x256xf32>
    %cst_10 = arith.constant 8.000000e+00 : f32
    %25 = vector.broadcast %cst_10 : f32 to vector<1x256xf32>
    %26 = arith.divf %24, %25 : vector<1x256xf32>
    %27 = vector.broadcast %26 : vector<1x256xf32> to vector<8x256xf32>
    %28 = arith.subf %6, %27 : vector<8x256xf32>
    %cst_11 = arith.constant dense<0.000000e+00> : vector<256xf32>
    %29 = vector.multi_reduction <add>, %7, %cst_11 [0] : vector<8x256xf32> to vector<256xf32>
    %30 = vector.shape_cast %29 : vector<256xf32> to vector<1x256xf32>
    %cst_12 = arith.constant 8.000000e+00 : f32
    %31 = vector.broadcast %cst_12 : f32 to vector<1x256xf32>
    %32 = arith.divf %30, %31 : vector<1x256xf32>
    %33 = vector.broadcast %32 : vector<1x256xf32> to vector<8x256xf32>
    %34 = arith.subf %7, %33 : vector<8x256xf32>
    %35 = arith.mulf %28, %28 : vector<8x256xf32>
    %cst_13 = arith.constant dense<0.000000e+00> : vector<256xf32>
    %36 = vector.multi_reduction <add>, %35, %cst_13 [0] : vector<8x256xf32> to vector<256xf32>
    %37 = vector.shape_cast %36 : vector<256xf32> to vector<1x256xf32>
    %cst_14 = arith.constant 0.142857149 : f32
    %38 = vector.broadcast %cst_14 : f32 to vector<1x256xf32>
    %39 = arith.mulf %37, %38 : vector<1x256xf32>
    %40 = arith.mulf %34, %34 : vector<8x256xf32>
    %cst_15 = arith.constant dense<0.000000e+00> : vector<256xf32>
    %41 = vector.multi_reduction <add>, %40, %cst_15 [0] : vector<8x256xf32> to vector<256xf32>
    %42 = vector.shape_cast %41 : vector<256xf32> to vector<1x256xf32>
    %cst_16 = arith.constant 0.142857149 : f32
    %43 = vector.broadcast %cst_16 : f32 to vector<1x256xf32>
    %44 = arith.mulf %42, %43 : vector<1x256xf32>
    %cst_17 = arith.constant 9.99999974E-5 : f32
    %45 = vector.broadcast %cst_17 : f32 to vector<1x256xf32>
    %46 = arith.addf %39, %45 : vector<1x256xf32>
    %47 = math.sqrt %46 : vector<1x256xf32>
    %cst_18 = arith.constant 1.000000e+00 : f32
    %48 = vector.broadcast %cst_18 : f32 to vector<1x256xf32>
    %49 = arith.subf %48, %47 : vector<1x256xf32>
    %cst_19 = arith.constant 0.000000e+00 : f32
    %50 = vector.broadcast %cst_19 : f32 to vector<1x256xf32>
    %51 = arith.maximumf %49, %50 : vector<1x256xf32>
    %cst_20 = arith.constant dense<0.000000e+00> : vector<1xf32>
    %52 = vector.multi_reduction <add>, %51, %cst_20 [1] : vector<1x256xf32> to vector<1xf32>
    %53 = vector.shape_cast %52 : vector<1xf32> to vector<1x1xf32>
    %cst_21 = arith.constant 9.99999974E-5 : f32
    %54 = vector.broadcast %cst_21 : f32 to vector<1x256xf32>
    %55 = arith.addf %44, %54 : vector<1x256xf32>
    %56 = math.sqrt %55 : vector<1x256xf32>
    %cst_22 = arith.constant 1.000000e+00 : f32
    %57 = vector.broadcast %cst_22 : f32 to vector<1x256xf32>
    %58 = arith.subf %57, %56 : vector<1x256xf32>
    %cst_23 = arith.constant 0.000000e+00 : f32
    %59 = vector.broadcast %cst_23 : f32 to vector<1x256xf32>
    %60 = arith.maximumf %58, %59 : vector<1x256xf32>
    %cst_24 = arith.constant dense<0.000000e+00> : vector<1xf32>
    %61 = vector.multi_reduction <add>, %60, %cst_24 [1] : vector<1x256xf32> to vector<1xf32>
    %62 = vector.shape_cast %61 : vector<1xf32> to vector<1x1xf32>
    %63 = arith.mulf %39, %39 : vector<1x256xf32>
    %cst_25 = arith.constant dense<0.000000e+00> : vector<1xf32>
    %64 = vector.multi_reduction <add>, %63, %cst_25 [1] : vector<1x256xf32> to vector<1xf32>
    %65 = vector.shape_cast %64 : vector<1xf32> to vector<1x1xf32>
    %66 = arith.mulf %44, %44 : vector<1x256xf32>
    %cst_26 = arith.constant dense<0.000000e+00> : vector<1xf32>
    %67 = vector.multi_reduction <add>, %66, %cst_26 [1] : vector<1x256xf32> to vector<1xf32>
    %68 = vector.shape_cast %67 : vector<1xf32> to vector<1x1xf32>
    %69 = tpu.concatenate %28, %34 in 0 : vector<8x256xf32>, vector<8x256xf32> -> vector<16x256xf32>
    %c0_27 = arith.constant 0 : index
    %c0_28 = arith.constant 0 : index
    %c0_29 = arith.constant 0 : index
    %70 = vector.load %arg10[%c0_27, %c0_28, %c0_29] : memref<1x16x16xf32, #tpu.memory_space<vmem>>, vector<1x16x16xf32>
    %71 = vector.shape_cast %70 : vector<1x16x16xf32> to vector<16x16xf32>
    %cst_30 = arith.constant dense<0.000000e+00> : vector<16x16xf32>
    %72 = tpu.matmul %69, %69, %cst_30 {dimension_numbers = #tpu.dot_dimension_numbers<[1], [1], [0], [0], [0, 0, 1, 0], [], []>} : vector<16x256xf32>, vector<16x256xf32>, vector<16x16xf32> -> vector<16x16xf32>
    %73 = arith.addf %71, %72 : vector<16x16xf32>
    %c0_31 = arith.constant 0 : index
    %c0_32 = arith.constant 0 : index
    %c0_33 = arith.constant 0 : index
    %74 = vector.load %arg10[%c0_31, %c0_32, %c0_33] : memref<1x16x16xf32, #tpu.memory_space<vmem>>, vector<1x16x16xf32>
    %75 = vector.shape_cast %74 : vector<1x16x16xf32> to vector<16x16xf32>
    %76 = vector.shape_cast %73 : vector<16x16xf32> to vector<1x16x16xf32>
    tpu.vector_store %arg10[%c0_31, %c0_32, %c0_33], %76 {strides = array<i32>} : memref<1x16x16xf32, #tpu.memory_space<vmem>>, vector<1x16x16xf32>,
    %77 = tpu.iota {dimensions = array<i32: 1>} : vector<1x128xi32>
    %c0_34 = arith.constant 0 : index
    %c0_35 = arith.constant 0 : index
    %c0_36 = arith.constant 0 : index
    %78 = vector.load %arg9[%c0_34, %c0_35, %c0_36] : memref<1x1x128xf32, #tpu.memory_space<vmem>>, vector<1x1x128xf32>
    %79 = vector.shape_cast %78 : vector<1x1x128xf32> to vector<1x128xf32>
    %c0_i32_37 = arith.constant 0 : i32
    %80 = vector.broadcast %c0_i32_37 : i32 to vector<1x128xi32>
    %81 = arith.cmpi eq, %77, %80 : vector<1x128xi32>
    %cst_38 = arith.constant 0.000000e+00 : f32
    %82 = vector.shape_cast %22 : vector<1x1xf32> to vector<1x1xf32>
    %83 = vector.broadcast %82 : vector<1x1xf32> to vector<1x128xf32>
    %84 = vector.broadcast %cst_38 : f32 to vector<1x128xf32>
    %85 = arith.select %81, %83, %84 : vector<1x128xi1>, vector<1x128xf32>
    %c1_i32 = arith.constant 1 : i32
    %86 = vector.broadcast %c1_i32 : i32 to vector<1x128xi32>
    %87 = arith.cmpi eq, %77, %86 : vector<1x128xi32>
    %cst_39 = arith.constant 0.000000e+00 : f32
    %88 = vector.shape_cast %53 : vector<1x1xf32> to vector<1x1xf32>
    %89 = vector.broadcast %88 : vector<1x1xf32> to vector<1x128xf32>
    %90 = vector.broadcast %cst_39 : f32 to vector<1x128xf32>
    %91 = arith.select %87, %89, %90 : vector<1x128xi1>, vector<1x128xf32>
    %92 = arith.addf %85, %91 : vector<1x128xf32>
    %c2_i32 = arith.constant 2 : i32
    %93 = vector.broadcast %c2_i32 : i32 to vector<1x128xi32>
    %94 = arith.cmpi eq, %77, %93 : vector<1x128xi32>
    %cst_40 = arith.constant 0.000000e+00 : f32
    %95 = vector.shape_cast %62 : vector<1x1xf32> to vector<1x1xf32>
    %96 = vector.broadcast %95 : vector<1x1xf32> to vector<1x128xf32>
    %97 = vector.broadcast %cst_40 : f32 to vector<1x128xf32>
    %98 = arith.select %94, %96, %97 : vector<1x128xi1>, vector<1x128xf32>
    %99 = arith.addf %92, %98 : vector<1x128xf32>
    %c3_i32 = arith.constant 3 : i32
    %100 = vector.broadcast %c3_i32 : i32 to vector<1x128xi32>
    %101 = arith.cmpi eq, %77, %100 : vector<1x128xi32>
    %cst_41 = arith.constant 0.000000e+00 : f32
    %102 = vector.shape_cast %65 : vector<1x1xf32> to vector<1x1xf32>
    %103 = vector.broadcast %102 : vector<1x1xf32> to vector<1x128xf32>
    %104 = vector.broadcast %cst_41 : f32 to vector<1x128xf32>
    %105 = arith.select %101, %103, %104 : vector<1x128xi1>, vector<1x128xf32>
    %106 = arith.addf %99, %105 : vector<1x128xf32>
    %c4_i32 = arith.constant 4 : i32
    %107 = vector.broadcast %c4_i32 : i32 to vector<1x128xi32>
    %108 = arith.cmpi eq, %77, %107 : vector<1x128xi32>
    %cst_42 = arith.constant 0.000000e+00 : f32
    %109 = vector.shape_cast %68 : vector<1x1xf32> to vector<1x1xf32>
    %110 = vector.broadcast %109 : vector<1x1xf32> to vector<1x128xf32>
    %111 = vector.broadcast %cst_42 : f32 to vector<1x128xf32>
    %112 = arith.select %108, %110, %111 : vector<1x128xi1>, vector<1x128xf32>
    %113 = arith.addf %106, %112 : vector<1x128xf32>
    %114 = arith.addf %79, %113 : vector<1x128xf32>
    %c0_43 = arith.constant 0 : index
    %c0_44 = arith.constant 0 : index
    %c0_45 = arith.constant 0 : index
    %115 = vector.load %arg9[%c0_43, %c0_44, %c0_45] : memref<1x1x128xf32, #tpu.memory_space<vmem>>, vector<1x1x128xf32>
    %116 = vector.shape_cast %115 : vector<1x1x128xf32> to vector<1x128xf32>
    %117 = vector.shape_cast %114 : vector<1x128xf32> to vector<1x1x128xf32>
    tpu.vector_store %arg9[%c0_43, %c0_44, %c0_45], %117 {strides = array<i32>} : memref<1x1x128xf32, #tpu.memory_space<vmem>>, vector<1x1x128xf32>,
    return
  }
  func.func @transform_0(%arg0: i32, %arg1: i32) -> (i32, i32) {
    %c0_i32 = arith.constant 0 : i32
    %c0_i32_0 = arith.constant 0 : i32
    %c0_i32_1 = arith.constant 0 : i32
    return %c0_i32, %c0_i32_0 : i32, i32
  }
  func.func @transform_1(%arg0: i32, %arg1: i32) -> (i32, i32) {
    %c0_i32 = arith.constant 0 : i32
    %c0_i32_0 = arith.constant 0 : i32
    %c0_i32_1 = arith.constant 0 : i32
    return %c0_i32, %c0_i32_0 : i32, i32
  }
  func.func @transform_2(%arg0: i32, %arg1: i32) -> (i32, i32) {
    %c0_i32 = arith.constant 0 : i32
    %c0_i32_0 = arith.constant 0 : i32
    %c0_i32_1 = arith.constant 0 : i32
    return %c0_i32, %c0_i32_0 : i32, i32
  }
  func.func @transform_3(%arg0: i32, %arg1: i32) -> (i32, i32) {
    %c0_i32 = arith.constant 0 : i32
    %c0_i32_0 = arith.constant 0 : i32
    %c0_i32_1 = arith.constant 0 : i32
    return %c0_i32, %c0_i32_0 : i32, i32
  }
  func.func @transform_4(%arg0: i32, %arg1: i32) -> (i32, i32) {
    %c0_i32 = arith.constant 0 : i32
    %c0_i32_0 = arith.constant 0 : i32
    %c0_i32_1 = arith.constant 0 : i32
    return %c0_i32, %c0_i32_0 : i32, i32
  }
  func.func @transform_5(%arg0: i32, %arg1: i32) -> (i32, i32) {
    %c0_i32 = arith.constant 0 : i32
    %c0_i32_0 = arith.constant 0 : i32
    %c0_i32_1 = arith.constant 0 : i32
    return %c0_i32, %c0_i32_0 : i32, i32
  }
  func.func @transform_6(%arg0: i32, %arg1: i32) -> (i32, i32) {
    %c5_i32 = arith.constant 5 : i32
    %0 = arith.muli %arg0, %c5_i32 : i32
    %1 = arith.addi %0, %arg1 : i32
    %c0_i32 = arith.constant 0 : i32
    %c0_i32_0 = arith.constant 0 : i32
    return %c0_i32, %1 : i32, i32
  }
  func.func @transform_7(%arg0: i32, %arg1: i32) -> (i32, i32, i32) {
    %c0_i32 = arith.constant 0 : i32
    %c0_i32_0 = arith.constant 0 : i32
    %c0_i32_1 = arith.constant 0 : i32
    return %arg0, %c0_i32, %c0_i32_0 : i32, i32, i32
  }
  func.func @transform_8(%arg0: i32, %arg1: i32) -> (i32, i32, i32) {
    %c0_i32 = arith.constant 0 : i32
    %c0_i32_0 = arith.constant 0 : i32
    %c0_i32_1 = arith.constant 0 : i32
    return %arg0, %c0_i32, %c0_i32_0 : i32, i32, i32
  }
}

</mosaic_0001>

<llo_original>
// kernel: tpu_custom_call.1
$region0: #{tpu_custom_call.1}
  #allocation0 [shape = 'u32[]', space=smem, size = 0x4, offset = 0x4, fixed_abs, tag = 'smem constant byte address 0x4 - core index']
  #allocation1 [shape = 'u32[144,128]{1,0:T(1,128)}', space=vmem, size = 0x12000, scoped, tag = 'internal scratch']
  #allocation2 [shape = 'bf16[24,1280]{1,0:T(8,128)(2,1)}', space=vmem, size = 0xf000, scoped, tag = 'scratch operand']
  %s0 = inlined_call_operand.hbm [shape: bf16[24,320], index: 0, kind: input, shape index: {}]
  %s1 = inlined_call_operand.vmem [shape: f32[8,1], index: 1, kind: input, shape index: {}]
  %s2 = inlined_call_operand.hbm [shape: bf16[320,1280], index: 2, kind: input, shape index: {}]
  %s3 = inlined_call_operand.hbm [shape: f32[1,1280], index: 3, kind: input, shape index: {}]
  %s4 = inlined_call_operand.hbm [shape: f32[1,1280], index: 4, kind: input, shape index: {}]
  %s5 = inlined_call_operand.hbm [shape: f32[1,1280], index: 5, kind: input, shape index: {}]
  %s6 = inlined_call_operand.hbm [shape: bf16[1280,1280], index: 6, kind: input, shape index: {}]
  %s7 = inlined_call_operand.hbm [shape: f32[1,1,128], index: 7, kind: output, shape index: {0}]
  %s8 = inlined_call_operand.hbm [shape: f32[1,16,16], index: 8, kind: output, shape index: {1}]
  %9 = xla_tuple %s7, %s8
  %s10 = sld [smem:[#allocation0]]
  $region97: #{tpu_custom_call.1} parent=0
    _
  %s12 = ssub.s32 1, %s10
  %s13 = scalar_select 0, %s12, %s10
  $region1: #{tpu_custom_call.1} parent=0
    #allocation3 [shape = 'u8[18432]{0}', space=vmem, size = 0x4800, scoped, tag = 'input window, operand 0, single buffered']
    #allocation4 [shape = 's32[2]{0}', space=sflag, size = 0x8, scoped, tag = 'scoped memory for tpu_custom_call.1']
    #allocation5 [shape = 's32[2]{0}', space=sflag, size = 0x8, scoped, tag = 'scoped memory for tpu_custom_call.1']
    #allocation6 [shape = 'u8[819200]{0}', space=vmem, size = 0xc8000, scoped, tag = 'input window, operand 2, single buffered']
    #allocation7 [shape = 's32[1]{0}', space=sflag, size = 0x4, scoped, tag = 'scoped memory for tpu_custom_call.1']
    #allocation8 [shape = 'u8[5120]{0}', space=vmem, size = 0x1400, scoped, tag = 'input window, operand 3, single buffered']
    #allocation9 [shape = 'u8[5120]{0}', space=vmem, size = 0x1400, scoped, tag = 'input window, operand 4, single buffered']
    #allocation10 [shape = 's32[1]{0}', space=sflag, size = 0x4, scoped, tag = 'scoped memory for tpu_custom_call.1']
    #allocation11 [shape = 'u8[5120]{0}', space=vmem, size = 0x1400, scoped, tag = 'input window, operand 5, single buffered']
    #allocation12 [shape = 'u8[1310720]{0}', space=vmem, size = 0x140000, scoped, tag = 'input window, operand 6']
    #allocation13 [shape = 's32[2]{0}', space=sflag, size = 0x8, scoped, tag = 'scoped memory for tpu_custom_call.1']
    #allocation14 [shape = 'u8[512]{0}', space=vmem, size = 0x400, scoped, tag = 'output window, operand 0, single buffered']
    #allocation15 [shape = 'u8[8192]{0}', space=vmem, size = 0x2000, scoped, tag = 'output window, operand 1, single buffered']
    #allocation16 [shape = 's32[1]{0}', space=sflag, size = 0x4, scoped, tag = 'scoped memory for tpu_custom_call.1']
    %14 = vsyncpa [#allocation4], 0
    %15 = vsyncpa [#allocation7], 0
    %16 = vsyncpa [#allocation10], 0
    %17 = vsyncpa [#allocation13], 0
    %s18 = scalar_lea.sflag [#allocation13], 1
    %19 = vsyncpa %s18, 0
    %20 = vsyncpa [#allocation5], 0
    %21 = vsyncpa [#allocation16], 0
    loop: start=0, step=1, limit=7
    $region2: #{tpu_custom_call.1} parent=1 // loop_pre_header
      _
    $region3: #{tpu_custom_call.1} parent=1 // loop_header
      %s23 = sphi 0, %s27
      %p24 = scmp.ge.s32.totalorder %s23, 7
      %s30 = sphi 0, %s42
      %s31 = sphi 0, %s38
      %s32 = sphi 0, %s30
      %s33 = sphi 0, %s31
      %s34 = sphi 0, %s32
      %s35 = sphi 0, %s33
      %s43 = sphi 0, %s43
      %s45 = sphi 0, %s43
      %s46 = sphi 0, %s45
      %s60 = sphi 0, %s46
      %s64 = sphi 0, %s64
      %s66 = sphi 0, %s64
      %s67 = sphi 0, %s66
      %s81 = sphi 0, %s67
      %s85 = sphi 0, %s85
      %s87 = sphi 0, %s85
      %s88 = sphi 0, %s87
      %s102 = sphi 0, %s88
      %s106 = sphi 0, %s106
      %s108 = sphi 0, %s106
      %s109 = sphi 0, %s108
      %s123 = sphi 0, %s109
      %s127 = sphi 0, %s127
      %s129 = sphi 0, %s127
      %s130 = sphi 0, %s129
      %s144 = sphi 0, %s130
      %s148 = sphi 0, %s148
      %s150 = sphi 0, %s148
      %s151 = sphi 0, %s150
      %s165 = sphi 0, %s151
      %s175 = sphi 0, %s177
      %s178 = sphi 0, %s175
      %s179 = sphi 0, %s178
      %s195 = sphi 0, %s179
      %s201 = sphi 0, %s203
      %s204 = sphi 0, %s201
      %s205 = sphi 0, %s204
      %s221 = sphi 0, %s205
      %s227 = sphi 0, %s229
      %s230 = sphi 0, %s227
      %s231 = sphi 0, %s230
      %s247 = sphi 0, %s231
    $region4: #{tpu_custom_call.1} parent=1 // loop_header_branch
      %26 = sbr.rel (%p24) target = $region8
    $region5: #{tpu_custom_call.1} parent=1 // loop_body
      %s28 = ssub.s32 %s23, 1
      %s29 = ssub.s32 %s23, 2
      %s36 = sadd.s32 1, %s31
      %p37 = scmp.ge.s32.totalorder %s36, 5
      %s38 = scalar_select %p37, 0, %s36
      %s39 = sadd.s32 1, %s30
      %s40 = scalar_select %p37, %s39, %s30
      %p41 = scmp.ge.s32.totalorder %s40, 1
      %s42 = scalar_select %p41, 0, %s40
      %s44 = sadd.s32 %s43, 1
      %p47 = scmp.eq.s32.totalorder %s23, 4
      %p48 = scmp.ne.s32.totalorder %s43, %s45
      %p49 = scmp.eq.s32.totalorder %s23, 0
      %p50 = por %p48, %p49
      %p51 = scmp.ne.s32.totalorder %s43, %s45
      %p52 = scmp.eq.s32.totalorder %s28, 4
      %p53 = por %p51, %p52
      %p54 = scmp.ne.s32.totalorder %s45, %s46
      %p55 = scmp.eq.s32.totalorder %s28, 0
      %p56 = por %p54, %p55
      %p57 = scmp.ne.s32.totalorder %s45, %s46
      %p58 = scmp.eq.s32.totalorder %s29, 4
      %p59 = por %p57, %p58
      %p61 = scmp.ne.s32.totalorder %s46, %s60
      %p62 = scmp.eq.s32.totalorder %s29, 0
      %p63 = por %p61, %p62
      %s65 = sadd.s32 %s64, 1
      %p68 = scmp.eq.s32.totalorder %s23, 4
      %p69 = scmp.ne.s32.totalorder %s64, %s66
      %p70 = scmp.eq.s32.totalorder %s23, 0
      %p71 = por %p69, %p70
      %p72 = scmp.ne.s32.totalorder %s64, %s66
      %p73 = scmp.eq.s32.totalorder %s28, 4
      %p74 = por %p72, %p73
      %p75 = scmp.ne.s32.totalorder %s66, %s67
      %p76 = scmp.eq.s32.totalorder %s28, 0
      %p77 = por %p75, %p76
      %p78 = scmp.ne.s32.totalorder %s66, %s67
      %p79 = scmp.eq.s32.totalorder %s29, 4
      %p80 = por %p78, %p79
      %p82 = scmp.ne.s32.totalorder %s67, %s81
      %p83 = scmp.eq.s32.totalorder %s29, 0
      %p84 = por %p82, %p83
      %s86 = sadd.s32 %s85, 1
      %p89 = scmp.eq.s32.totalorder %s23, 4
      %p90 = scmp.ne.s32.totalorder %s85, %s87
      %p91 = scmp.eq.s32.totalorder %s23, 0
      %p92 = por %p90, %p91
      %p93 = scmp.ne.s32.totalorder %s85, %s87
      %p94 = scmp.eq.s32.totalorder %s28, 4
      %p95 = por %p93, %p94
      %p96 = scmp.ne.s32.totalorder %s87, %s88
      %p97 = scmp.eq.s32.totalorder %s28, 0
      %p98 = por %p96, %p97
      %p99 = scmp.ne.s32.totalorder %s87, %s88
      %p100 = scmp.eq.s32.totalorder %s29, 4
      %p101 = por %p99, %p100
      %p103 = scmp.ne.s32.totalorder %s88, %s102
      %p104 = scmp.eq.s32.totalorder %s29, 0
      %p105 = por %p103, %p104
      %s107 = sadd.s32 %s106, 1
      %p110 = scmp.eq.s32.totalorder %s23, 4
      %p111 = scmp.ne.s32.totalorder %s106, %s108
      %p112 = scmp.eq.s32.totalorder %s23, 0
      %p113 = por %p111, %p112
      %p114 = scmp.ne.s32.totalorder %s106, %s108
      %p115 = scmp.eq.s32.totalorder %s28, 4
      %p116 = por %p114, %p115
      %p117 = scmp.ne.s32.totalorder %s108, %s109
      %p118 = scmp.eq.s32.totalorder %s28, 0
      %p119 = por %p117, %p118
      %p120 = scmp.ne.s32.totalorder %s108, %s109
      %p121 = scmp.eq.s32.totalorder %s29, 4
      %p122 = por %p120, %p121
      %p124 = scmp.ne.s32.totalorder %s109, %s123
      %p125 = scmp.eq.s32.totalorder %s29, 0
      %p126 = por %p124, %p125
      %s128 = sadd.s32 %s127, 1
      %p131 = scmp.eq.s32.totalorder %s23, 4
      %p132 = scmp.ne.s32.totalorder %s127, %s129
      %p133 = scmp.eq.s32.totalorder %s23, 0
      %p134 = por %p132, %p133
      %p135 = scmp.ne.s32.totalorder %s127, %s129
      %p136 = scmp.eq.s32.totalorder %s28, 4
      %p137 = por %p135, %p136
      %p138 = scmp.ne.s32.totalorder %s129, %s130
      %p139 = scmp.eq.s32.totalorder %s28, 0
      %p140 = por %p138, %p139
      %p141 = scmp.ne.s32.totalorder %s129, %s130
      %p142 = scmp.eq.s32.totalorder %s29, 4
      %p143 = por %p141, %p142
      %p145 = scmp.ne.s32.totalorder %s130, %s144
      %p146 = scmp.eq.s32.totalorder %s29, 0
      %p147 = por %p145, %p146
      %s149 = sadd.s32 %s148, 1
      %p152 = scmp.eq.s32.totalorder %s23, 4
      %p153 = scmp.ne.s32.totalorder %s148, %s150
      %p154 = scmp.eq.s32.totalorder %s23, 0
      %p155 = por %p153, %p154
      %p156 = scmp.ne.s32.totalorder %s148, %s150
      %p157 = scmp.eq.s32.totalorder %s28, 4
      %p158 = por %p156, %p157
      %p159 = scmp.ne.s32.totalorder %s150, %s151
      %p160 = scmp.eq.s32.totalorder %s28, 0
      %p161 = por %p159, %p160
      %p162 = scmp.ne.s32.totalorder %s150, %s151
      %p163 = scmp.eq.s32.totalorder %s29, 4
      %p164 = por %p162, %p163
      %p166 = scmp.ne.s32.totalorder %s151, %s165
      %p167 = scmp.eq.s32.totalorder %s29, 0
      %p168 = por %p166, %p167
      %s169 = smul.u32 %s30, 5
      %s170 = sadd.s32 %s169, %s31
      %s171 = smul.u32 %s42, 5
      %s172 = sadd.s32 %s171, %s38
      %s173 = ssub.s32 %s170, %s172
      %p174 = scmp.eq.s32.totalorder %s173, 0
      %s176 = sadd.s32 %s175, 1
      %s177 = scalar_select %p174, %s175, %s176
      %p180 = pneg %p174
      %p181 = scmp.eq.s32.totalorder %s23, 4
      %p182 = por %p180, %p181
      %p183 = scmp.ne.s32.totalorder %s175, %s178
      %p184 = scmp.eq.s32.totalorder %s23, 0
      %p185 = por %p183, %p184
      %p186 = scmp.ne.s32.totalorder %s175, %s178
      %p187 = scmp.eq.s32.totalorder %s28, 4
      %p188 = por %p186, %p187
      %p189 = scmp.ne.s32.totalorder %s178, %s179
      %p190 = scmp.eq.s32.totalorder %s28, 0
      %p191 = por %p189, %p190
      %p192 = scmp.ne.s32.totalorder %s178, %s179
      %p193 = scmp.eq.s32.totalorder %s29, 4
      %p194 = por %p192, %p193
      %p196 = scmp.ne.s32.totalorder %s179, %s195
      %p197 = scmp.eq.s32.totalorder %s29, 0
      %p198 = por %p196, %p197
      %s199 = ssub.s32 %s30, %s42
      %p200 = scmp.eq.s32.totalorder %s199, 0
      %s202 = sadd.s32 %s201, 1
      %s203 = scalar_select %p200, %s201, %s202
      %p206 = pneg %p200
      %p207 = scmp.eq.s32.totalorder %s23, 4
      %p208 = por %p206, %p207
      %p209 = scmp.ne.s32.totalorder %s201, %s204
      %p210 = scmp.eq.s32.totalorder %s23, 0
      %p211 = por %p209, %p210
      %p212 = scmp.ne.s32.totalorder %s201, %s204
      %p213 = scmp.eq.s32.totalorder %s28, 4
      %p214 = por %p212, %p213
      %p215 = scmp.ne.s32.totalorder %s204, %s205
      %p216 = scmp.eq.s32.totalorder %s28, 0
      %p217 = por %p215, %p216
      %p218 = scmp.ne.s32.totalorder %s204, %s205
      %p219 = scmp.eq.s32.totalorder %s29, 4
      %p220 = por %p218, %p219
      %p222 = scmp.ne.s32.totalorder %s205, %s221
      %p223 = scmp.eq.s32.totalorder %s29, 0
      %p224 = por %p222, %p223
      %s225 = ssub.s32 %s30, %s42
      %p226 = scmp.eq.s32.totalorder %s225, 0
      %s228 = sadd.s32 %s227, 1
      %s229 = scalar_select %p226, %s227, %s228
      %p232 = pneg %p226
      %p233 = scmp.eq.s32.totalorder %s23, 4
      %p234 = por %p232, %p233
      %p235 = scmp.ne.s32.totalorder %s227, %s230
      %p236 = scmp.eq.s32.totalorder %s23, 0
      %p237 = por %p235, %p236
      %p238 = scmp.ne.s32.totalorder %s227, %s230
      %p239 = scmp.eq.s32.totalorder %s28, 4
      %p240 = por %p238, %p239
      %p241 = scmp.ne.s32.totalorder %s230, %s231
      %p242 = scmp.eq.s32.totalorder %s28, 0
      %p243 = por %p241, %p242
      %p244 = scmp.ne.s32.totalorder %s230, %s231
      %p245 = scmp.eq.s32.totalorder %s29, 4
      %p246 = por %p244, %p245
      %p248 = scmp.ne.s32.totalorder %s231, %s247
      %p249 = scmp.eq.s32.totalorder %s29, 0
      %p250 = por %p248, %p249
      %p251 = scmp.le.s32.totalorder 1, %s23
      %p252 = scmp.lt.s32.totalorder %s23, 6
      %p253 = pnand %p251, %p252
      %p254 = pneg %p253
      // Predicated region
      $region9: #{tpu_custom_call.1} parent=5 // pred_check
        _
      $region10: #{tpu_custom_call.1} parent=5 // pred_check_branch
        %256 = sbr.rel (%p253) target = $region12
      $region11: #{tpu_custom_call.1} parent=5 // pred_region
        %s257 = ssub.s32 %s23, 1
        // Predicated region
        $region13: #{tpu_custom_call.1} parent=11 // pred_check
          %p258 = pneg %p56
        $region14: #{tpu_custom_call.1} parent=11 // pred_check_branch
          %260 = sbr.rel (%p258) target = $region16
        $region15: #{tpu_custom_call.1} parent=11 // pred_region
          %s262 = ssub.s32 576, 576
          %263 = vsyncadd [#allocation4], %s262
          %s264 = sshll.u32 [#allocation3], 4
          %s265 = int_to_ptr.vmem [resolvable:$true] %s264
          %270 = dma.hbm_to_vmem [thread:$0]  %s0, 576, %s265, [#allocation4], 192, 192, 12
        $region16: #{tpu_custom_call.1} parent=11 // pred_fallthru
          _
        // Predicated region
        $region17: #{tpu_custom_call.1} parent=11 // pred_check
          %p271 = pneg %p77
        $region18: #{tpu_custom_call.1} parent=11 // pred_check_branch
          %273 = sbr.rel (%p271) target = $region20
        $region19: #{tpu_custom_call.1} parent=11 // pred_region
          _
        $region20: #{tpu_custom_call.1} parent=11 // pred_fallthru
          _
        // Predicated region
        $region21: #{tpu_custom_call.1} parent=11 // pred_check
          %p274 = pneg %p98
        $region22: #{tpu_custom_call.1} parent=11 // pred_check_branch
          %276 = sbr.rel (%p274) target = $region24
        $region23: #{tpu_custom_call.1} parent=11 // pred_region
          %s278 = ssub.s32 25600, 25600
          %279 = vsyncadd [#allocation7], %s278
          %s280 = sshll.u32 [#allocation6], 4
          %s281 = int_to_ptr.vmem [resolvable:$true] %s280
          %286 = dma.hbm_to_vmem [thread:$0]  %s2, 25600, %s281, [#allocation7], 640, 640, 40
        $region24: #{tpu_custom_call.1} parent=11 // pred_fallthru
          _
        // Predicated region
        $region25: #{tpu_custom_call.1} parent=11 // pred_check
          %p287 = pneg %p119
        $region26: #{tpu_custom_call.1} parent=11 // pred_check_branch
          %289 = sbr.rel (%p287) target = $region28
        $region27: #{tpu_custom_call.1} parent=11 // pred_region
          %s291 = ssub.s32 160, 160
          %292 = vsyncadd [#allocation7], %s291
          %s294 = sshll.u32 [#allocation8], 4
          %s295 = int_to_ptr.vmem [resolvable:$true] %s294
          %297 = dma.hbm_to_vmem [thread:$0]  %s3, 160, %s295, [#allocation7]
        $region28: #{tpu_custom_call.1} parent=11 // pred_fallthru
          _
        // Predicated region
        $region29: #{tpu_custom_call.1} parent=11 // pred_check
          %p298 = pneg %p140
        $region30: #{tpu_custom_call.1} parent=11 // pred_check_branch
          %300 = sbr.rel (%p298) target = $region32
        $region31: #{tpu_custom_call.1} parent=11 // pred_region
          %s302 = ssub.s32 160, 160
          %303 = vsyncadd [#allocation10], %s302
          %s305 = sshll.u32 [#allocation9], 4
          %s306 = int_to_ptr.vmem [resolvable:$true] %s305
          %308 = dma.hbm_to_vmem [thread:$0]  %s4, 160, %s306, [#allocation10]
        $region32: #{tpu_custom_call.1} parent=11 // pred_fallthru
          _
        // Predicated region
        $region33: #{tpu_custom_call.1} parent=11 // pred_check
          %p309 = pneg %p161
        $region34: #{tpu_custom_call.1} parent=11 // pred_check_branch
          %311 = sbr.rel (%p309) target = $region36
        $region35: #{tpu_custom_call.1} parent=11 // pred_region
          %s313 = ssub.s32 160, 160
          %314 = vsyncadd [#allocation10], %s313
          %s316 = sshll.u32 [#allocation11], 4
          %s317 = int_to_ptr.vmem [resolvable:$true] %s316
          %319 = dma.hbm_to_vmem [thread:$0]  %s5, 160, %s317, [#allocation10]
        $region36: #{tpu_custom_call.1} parent=11 // pred_fallthru
          _
      $region12: #{tpu_custom_call.1} parent=5 // pred_fallthru
        _
      %p320 = scmp.lt.s32.totalorder %s23, 5
      // Predicated region
      $region37: #{tpu_custom_call.1} parent=5 // pred_check
        %p321 = pneg %p320
      $region38: #{tpu_custom_call.1} parent=5 // pred_check_branch
        %323 = sbr.rel (%p321) target = $region40
      $region39: #{tpu_custom_call.1} parent=5 // pred_region
        // Predicated region
        $region41: #{tpu_custom_call.1} parent=39 // pred_check
          %p324 = pneg %p185
        $region42: #{tpu_custom_call.1} parent=39 // pred_check_branch
          %326 = sbr.rel (%p324) target = $region44
        $region43: #{tpu_custom_call.1} parent=39 // pred_region
          %s327 = sand.u32 %s175, 1
          %s328 = scalar_lea.sflag [#allocation13], %s327
          %s329 = sand.u32 %s175, 1
          %s330 = smul.addr %s329, 1280
          %s331 = scalar_lea.vmem [#allocation12], %s330
          %s332 = smul.u32 %s30, 5
          %s333 = sadd.s32 %s332, %s31
          %s334 = smul.u32 2, %s333
          %s336 = ssub.s32 20480, 20480
          %337 = vsyncadd %s328, %s336
          %s338 = smul.addr %s334, 64
          %s339 = scalar_lea.hbm %s6, %s338
          %s340 = sshll.u32 %s331, 4
          %s341 = int_to_ptr.vmem [resolvable:$true] %s340
          %346 = dma.hbm_to_vmem [thread:$0]  %s339, 20480, %s341, %s328, 640, 128, 8
        $region44: #{tpu_custom_call.1} parent=39 // pred_fallthru
          _
      $region40: #{tpu_custom_call.1} parent=5 // pred_fallthru
        _
      %p347 = scmp.le.s32.totalorder 1, %s23
      %p348 = scmp.lt.s32.totalorder %s23, 6
      %p349 = pnand %p347, %p348
      %p350 = pneg %p349
      // Predicated region
      $region45: #{tpu_custom_call.1} parent=5 // pred_check
        _
      $region46: #{tpu_custom_call.1} parent=5 // pred_check_branch
        %352 = sbr.rel (%p349) target = $region48
      $region47: #{tpu_custom_call.1} parent=5 // pred_region
        %s353 = ssub.s32 %s23, 1
        // Predicated region
        $region49: #{tpu_custom_call.1} parent=47 // pred_check
          %p354 = pneg %p56
        $region50: #{tpu_custom_call.1} parent=47 // pred_check_branch
          %356 = sbr.rel (%p354) target = $region52
        $region51: #{tpu_custom_call.1} parent=47 // pred_region
          %357 = dma.done [#allocation4], 576
        $region52: #{tpu_custom_call.1} parent=47 // pred_fallthru
          _
        // Predicated region
        $region53: #{tpu_custom_call.1} parent=47 // pred_check
          %p358 = pneg %p98
        $region54: #{tpu_custom_call.1} parent=47 // pred_check_branch
          %360 = sbr.rel (%p358) target = $region56
        $region55: #{tpu_custom_call.1} parent=47 // pred_region
          %361 = dma.done [#allocation7], 25600
        $region56: #{tpu_custom_call.1} parent=47 // pred_fallthru
          _
        // Predicated region
        $region57: #{tpu_custom_call.1} parent=47 // pred_check
          %p362 = pneg %p119
        $region58: #{tpu_custom_call.1} parent=47 // pred_check_branch
          %364 = sbr.rel (%p362) target = $region60
        $region59: #{tpu_custom_call.1} parent=47 // pred_region
          %365 = dma.done [#allocation7], 160
        $region60: #{tpu_custom_call.1} parent=47 // pred_fallthru
          _
        // Predicated region
        $region61: #{tpu_custom_call.1} parent=47 // pred_check
          %p366 = pneg %p140
        $region62: #{tpu_custom_call.1} parent=47 // pred_check_branch
          %368 = sbr.rel (%p366) target = $region64
        $region63: #{tpu_custom_call.1} parent=47 // pred_region
          %369 = dma.done [#allocation10], 160
        $region64: #{tpu_custom_call.1} parent=47 // pred_fallthru
          _
        // Predicated region
        $region65: #{tpu_custom_call.1} parent=47 // pred_check
          %p370 = pneg %p161
        $region66: #{tpu_custom_call.1} parent=47 // pred_check_branch
          %372 = sbr.rel (%p370) target = $region68
        $region67: #{tpu_custom_call.1} parent=47 // pred_region
          %373 = dma.done [#allocation10], 160
        $region68: #{tpu_custom_call.1} parent=47 // pred_fallthru
          _
        %s374 = sand.u32 %s178, 1
        %s375 = scalar_lea.sflag [#allocation13], %s374
        %s376 = sand.u32 %s178, 1
        %s377 = smul.addr %s376, 1280
        %s378 = scalar_lea.vmem [#allocation12], %s377
        // Predicated region
        $region69: #{tpu_custom_call.1} parent=47 // pred_check
          %p379 = pneg %p191
        $region70: #{tpu_custom_call.1} parent=47 // pred_check_branch
          %381 = sbr.rel (%p379) target = $region72
        $region71: #{tpu_custom_call.1} parent=47 // pred_region
          %382 = dma.done %s375, 20480
        $region72: #{tpu_custom_call.1} parent=47 // pred_fallthru
          _
        %p383 = pneg %p56
        %p384 = pneg %p53
        %p385 = pneg %p77
        %p386 = pneg %p74
        %p387 = pneg %p98
        %p388 = pneg %p95
        %p389 = pneg %p119
        %p390 = pneg %p116
        %p391 = pneg %p140
        %p392 = pneg %p137
        %p393 = pneg %p161
        %p394 = pneg %p158
        %s395 = sand.u32 %s178, 1
        %s396 = scalar_lea.sflag [#allocation13], %s395
        %s397 = sand.u32 %s178, 1
        %s398 = smul.addr %s397, 1280
        %s399 = scalar_lea.vmem [#allocation12], %s398
        %p400 = pneg %p191
        %p401 = pneg %p188
        %p402 = pneg %p217
        %p403 = pneg %p214
        %p404 = pneg %p243
        %p405 = pneg %p240
        %s406 = smul.u32 %s32, 5
        %s407 = sadd.s32 %s406, %s33
        %s408 = smul.u32 2, %s407
        %p410 = scmp.eq.s32.totalorder %s33, 0
        // Predicated region
        $region73: #{tpu_custom_call.1} parent=47 // pred_check
          %p411 = pneg %p410
        $region74: #{tpu_custom_call.1} parent=47 // pred_check_branch
          %413 = sbr.rel (%p411) target = $region76
        $region75: #{tpu_custom_call.1} parent=47 // pred_region
          %414 = vst [vmem:[#allocation14] sm:$0x1] 0.0
          %vm415 = vcmask 130048
          %416 = vst.msk [vmem:[#allocation15] sm:$0xff] %vm415, 0.0
          %417 = vst.msk [vmem:[#allocation15 + $0x8] sm:$0xff] %vm415, 0.0
          %v418 = vld [vmem:[#allocation3] sm:$0xff]
          %v419 = vld [vmem:[#allocation3 + $0x8] sm:$0xf]
          %v420 = vld [vmem:[#allocation3 + $0xc] sm:$0xff]
          %v421 = vld [vmem:[#allocation3 + $0x14] sm:$0xf]
          %v422 = vld [vmem:[#allocation3 + $0x18] sm:$0xff]
          %v423 = vld [vmem:[#allocation3 + $0x20] sm:$0xf]
          %v424 = vld [vmem:[#allocation6] sm:$0xff]
          %v425 = vld [vmem:[#allocation6 + $0x8] sm:$0xff]
          %v426 = vld [vmem:[#allocation6 + $0x10] sm:$0xff]
          %v427 = vld [vmem:[#allocation6 + $0x18] sm:$0xff]
          %v428 = vld [vmem:[#allocation6 + $0x20] sm:$0xff]
          %v429 = vld [vmem:[#allocation6 + $0x28] sm:$0xff]
          %v430 = vld [vmem:[#allocation6 + $0x30] sm:$0xff]
          %v431 = vld [vmem:[#allocation6 + $0x38] sm:$0xff]
          %v432 = vld [vmem:[#allocation6 + $0x40] sm:$0xff]
          %v433 = vld [vmem:[#allocation6 + $0x48] sm:$0xff]
          %v434 = vld [vmem:[#allocation6 + $0x50] sm:$0xff]
          %v435 = vld [vmem:[#allocation6 + $0x58] sm:$0xff]
          %v436 = vld [vmem:[#allocation6 + $0x60] sm:$0xff]
          %v437 = vld [vmem:[#allocation6 + $0x68] sm:$0xff]
          %v438 = vld [vmem:[#allocation6 + $0x70] sm:$0xff]
          %v439 = vld [vmem:[#allocation6 + $0x78] sm:$0xff]
          %v440 = vld [vmem:[#allocation6 + $0x80] sm:$0xff]
          %v441 = vld [vmem:[#allocation6 + $0x88] sm:$0xff]
          %v442 = vld [vmem:[#allocation6 + $0x90] sm:$0xff]
          %v443 = vld [vmem:[#allocation6 + $0x98] sm:$0xff]
          %v444 = vld [vmem:[#allocation6 + $0xa0] sm:$0xff]
          %v445 = vld [vmem:[#allocation6 + $0xa8] sm:$0xff]
          %v446 = vld [vmem:[#allocation6 + $0xb0] sm:$0xff]
          %v447 = vld [vmem:[#allocation6 + $0xb8] sm:$0xff]
          %v448 = vld [vmem:[#allocation6 + $0xc0] sm:$0xff]
          %v449 = vld [vmem:[#allocation6 + $0xc8] sm:$0xff]
          %v450 = vld [vmem:[#allocation6 + $0xd0] sm:$0xff]
          %v451 = vld [vmem:[#allocation6 + $0xd8] sm:$0xff]
          %v452 = vld [vmem:[#allocation6 + $0xe0] sm:$0xff]
          %v453 = vld [vmem:[#allocation6 + $0xe8] sm:$0xff]
          %v454 = vld [vmem:[#allocation6 + $0xf0] sm:$0xff]
          %v455 = vld [vmem:[#allocation6 + $0xf8] sm:$0xff]
          %v456 = vld [vmem:[#allocation6 + $0x100] sm:$0xff]
          %v457 = vld [vmem:[#allocation6 + $0x108] sm:$0xff]
          %v458 = vld [vmem:[#allocation6 + $0x110] sm:$0xff]
          %v459 = vld [vmem:[#allocation6 + $0x118] sm:$0xff]
          %v460 = vld [vmem:[#allocation6 + $0x120] sm:$0xff]
          %v461 = vld [vmem:[#allocation6 + $0x128] sm:$0xff]
          %v462 = vld [vmem:[#allocation6 + $0x130] sm:$0xff]
          %v463 = vld [vmem:[#allocation6 + $0x138] sm:$0xff]
          %v464 = vld [vmem:[#allocation6 + $0x140] sm:$0xff]
          %v465 = vld [vmem:[#allocation6 + $0x148] sm:$0xff]
          %v466 = vld [vmem:[#allocation6 + $0x150] sm:$0xff]
          %v467 = vld [vmem:[#allocation6 + $0x158] sm:$0xff]
          %v468 = vld [vmem:[#allocation6 + $0x160] sm:$0xff]
          %v469 = vld [vmem:[#allocation6 + $0x168] sm:$0xff]
          %v470 = vld [vmem:[#allocation6 + $0x170] sm:$0xff]
          %v471 = vld [vmem:[#allocation6 + $0x178] sm:$0xff]
          %v472 = vld [vmem:[#allocation6 + $0x180] sm:$0xff]
          %v473 = vld [vmem:[#allocation6 + $0x188] sm:$0xff]
          %v474 = vld [vmem:[#allocation6 + $0x190] sm:$0xff]
          %v475 = vld [vmem:[#allocation6 + $0x198] sm:$0xff]
          %v476 = vld [vmem:[#allocation6 + $0x1a0] sm:$0xff]
          %v477 = vld [vmem:[#allocation6 + $0x1a8] sm:$0xff]
          %v478 = vld [vmem:[#allocation6 + $0x1b0] sm:$0xff]
          %v479 = vld [vmem:[#allocation6 + $0x1b8] sm:$0xff]
          %v480 = vld [vmem:[#allocation6 + $0x1c0] sm:$0xff]
          %v481 = vld [vmem:[#allocation6 + $0x1c8] sm:$0xff]
          %v482 = vld [vmem:[#allocation6 + $0x1d0] sm:$0xff]
          %v483 = vld [vmem:[#allocation6 + $0x1d8] sm:$0xff]
          %v484 = vld [vmem:[#allocation6 + $0x1e0] sm:$0xff]
          %v485 = vld [vmem:[#allocation6 + $0x1e8] sm:$0xff]
          %v486 = vld [vmem:[#allocation6 + $0x1f0] sm:$0xff]
          %v487 = vld [vmem:[#allocation6 + $0x1f8] sm:$0xff]
          %v488 = vld [vmem:[#allocation6 + $0x200] sm:$0xff]
          %v489 = vld [vmem:[#allocation6 + $0x208] sm:$0xff]
          %v490 = vld [vmem:[#allocation6 + $0x210] sm:$0xff]
          %v491 = vld [vmem:[#allocation6 + $0x218] sm:$0xff]
          %v492 = vld [vmem:[#allocation6 + $0x220] sm:$0xff]
          %v493 = vld [vmem:[#allocation6 + $0x228] sm:$0xff]
          %v494 = vld [vmem:[#allocation6 + $0x230] sm:$0xff]
          %v495 = vld [vmem:[#allocation6 + $0x238] sm:$0xff]
          %v496 = vld [vmem:[#allocation6 + $0x240] sm:$0xff]
          %v497 = vld [vmem:[#allocation6 + $0x248] sm:$0xff]
          %v498 = vld [vmem:[#allocation6 + $0x250] sm:$0xff]
          %v499 = vld [vmem:[#allocation6 + $0x258] sm:$0xff]
          %v500 = vld [vmem:[#allocation6 + $0x260] sm:$0xff]
          %v501 = vld [vmem:[#allocation6 + $0x268] sm:$0xff]
          %v502 = vld [vmem:[#allocation6 + $0x270] sm:$0xff]
          %v503 = vld [vmem:[#allocation6 + $0x278] sm:$0xff]
          %v504 = vld [vmem:[#allocation6 + $0x280] sm:$0xff]
          %v505 = vld [vmem:[#allocation6 + $0x288] sm:$0xff]
          %v506 = vld [vmem:[#allocation6 + $0x290] sm:$0xff]
          %v507 = vld [vmem:[#allocation6 + $0x298] sm:$0xff]
          %v508 = vld [vmem:[#allocation6 + $0x2a0] sm:$0xff]
          %v509 = vld [vmem:[#allocation6 + $0x2a8] sm:$0xff]
          %v510 = vld [vmem:[#allocation6 + $0x2b0] sm:$0xff]
          %v511 = vld [vmem:[#allocation6 + $0x2b8] sm:$0xff]
          %v512 = vld [vmem:[#allocation6 + $0x2c0] sm:$0xff]
          %v513 = vld [vmem:[#allocation6 + $0x2c8] sm:$0xff]
          %v514 = vld [vmem:[#allocation6 + $0x2d0] sm:$0xff]
          %v515 = vld [vmem:[#allocation6 + $0x2d8] sm:$0xff]
          %v516 = vld [vmem:[#allocation6 + $0x2e0] sm:$0xff]
          %v517 = vld [vmem:[#allocation6 + $0x2e8] sm:$0xff]
          %v518 = vld [vmem:[#allocation6 + $0x2f0] sm:$0xff]
          %v519 = vld [vmem:[#allocation6 + $0x2f8] sm:$0xff]
          %v520 = vld [vmem:[#allocation6 + $0x300] sm:$0xff]
          %v521 = vld [vmem:[#allocation6 + $0x308] sm:$0xff]
          %v522 = vld [vmem:[#allocation6 + $0x310] sm:$0xff]
          %v523 = vld [vmem:[#allocation6 + $0x318] sm:$0xff]
          %v524 = vld [vmem:[#allocation6 + $0x320] sm:$0xff]
          %v525 = vld [vmem:[#allocation6 + $0x328] sm:$0xff]
          %v526 = vld [vmem:[#allocation6 + $0x330] sm:$0xff]
          %v527 = vld [vmem:[#allocation6 + $0x338] sm:$0xff]
          %v528 = vld [vmem:[#allocation6 + $0x340] sm:$0xff]
          %v529 = vld [vmem:[#allocation6 + $0x348] sm:$0xff]
          %v530 = vld [vmem:[#allocation6 + $0x350] sm:$0xff]
          %v531 = vld [vmem:[#allocation6 + $0x358] sm:$0xff]
          %v532 = vld [vmem:[#allocation6 + $0x360] sm:$0xff]
          %v533 = vld [vmem:[#allocation6 + $0x368] sm:$0xff]
          %v534 = vld [vmem:[#allocation6 + $0x370] sm:$0xff]
          %v535 = vld [vmem:[#allocation6 + $0x378] sm:$0xff]
          %v536 = vld [vmem:[#allocation6 + $0x380] sm:$0xff]
          %v537 = vld [vmem:[#allocation6 + $0x388] sm:$0xff]
          %v538 = vld [vmem:[#allocation6 + $0x390] sm:$0xff]
          %v539 = vld [vmem:[#allocation6 + $0x398] sm:$0xff]
          %v540 = vld [vmem:[#allocation6 + $0x3a0] sm:$0xff]
          %v541 = vld [vmem:[#allocation6 + $0x3a8] sm:$0xff]
          %v542 = vld [vmem:[#allocation6 + $0x3b0] sm:$0xff]
          %v543 = vld [vmem:[#allocation6 + $0x3b8] sm:$0xff]
          %v544 = vld [vmem:[#allocation6 + $0x3c0] sm:$0xff]
          %v545 = vld [vmem:[#allocation6 + $0x3c8] sm:$0xff]
          %v546 = vld [vmem:[#allocation6 + $0x3d0] sm:$0xff]
          %v547 = vld [vmem:[#allocation6 + $0x3d8] sm:$0xff]
          %v548 = vld [vmem:[#allocation6 + $0x3e0] sm:$0xff]
          %v549 = vld [vmem:[#allocation6 + $0x3e8] sm:$0xff]
          %v550 = vld [vmem:[#allocation6 + $0x3f0] sm:$0xff]
          %v551 = vld [vmem:[#allocation6 + $0x3f8] sm:$0xff]
          %v552 = vld [vmem:[#allocation6 + $0x400] sm:$0xff]
          %v553 = vld [vmem:[#allocation6 + $0x408] sm:$0xff]
          %v554 = vld [vmem:[#allocation6 + $0x410] sm:$0xff]
          %v555 = vld [vmem:[#allocation6 + $0x418] sm:$0xff]
          %v556 = vld [vmem:[#allocation6 + $0x420] sm:$0xff]
          %v557 = vld [vmem:[#allocation6 + $0x428] sm:$0xff]
          %v558 = vld [vmem:[#allocation6 + $0x430] sm:$0xff]
          %v559 = vld [vmem:[#allocation6 + $0x438] sm:$0xff]
          %v560 = vld [vmem:[#allocation6 + $0x440] sm:$0xff]
          %v561 = vld [vmem:[#allocation6 + $0x448] sm:$0xff]
          %v562 = vld [vmem:[#allocation6 + $0x450] sm:$0xff]
          %v563 = vld [vmem:[#allocation6 + $0x458] sm:$0xff]
          %v564 = vld [vmem:[#allocation6 + $0x460] sm:$0xff]
          %v565 = vld [vmem:[#allocation6 + $0x468] sm:$0xff]
          %v566 = vld [vmem:[#allocation6 + $0x470] sm:$0xff]
          %v567 = vld [vmem:[#allocation6 + $0x478] sm:$0xff]
          %v568 = vld [vmem:[#allocation6 + $0x480] sm:$0xff]
          %v569 = vld [vmem:[#allocation6 + $0x488] sm:$0xff]
          %v570 = vld [vmem:[#allocation6 + $0x490] sm:$0xff]
          %v571 = vld [vmem:[#allocation6 + $0x498] sm:$0xff]
          %v572 = vld [vmem:[#allocation6 + $0x4a0] sm:$0xff]
          %v573 = vld [vmem:[#allocation6 + $0x4a8] sm:$0xff]
          %v574 = vld [vmem:[#allocation6 + $0x4b0] sm:$0xff]
          %v575 = vld [vmem:[#allocation6 + $0x4b8] sm:$0xff]
          %v576 = vld [vmem:[#allocation6 + $0x4c0] sm:$0xff]
          %v577 = vld [vmem:[#allocation6 + $0x4c8] sm:$0xff]
          %v578 = vld [vmem:[#allocation6 + $0x4d0] sm:$0xff]
          %v579 = vld [vmem:[#allocation6 + $0x4d8] sm:$0xff]
          %v580 = vld [vmem:[#allocation6 + $0x4e0] sm:$0xff]
          %v581 = vld [vmem:[#allocation6 + $0x4e8] sm:$0xff]
          %v582 = vld [vmem:[#allocation6 + $0x4f0] sm:$0xff]
          %v583 = vld [vmem:[#allocation6 + $0x4f8] sm:$0xff]
          %v584 = vld [vmem:[#allocation6 + $0x500] sm:$0xff]
          %v585 = vld [vmem:[#allocation6 + $0x508] sm:$0xff]
          %v586 = vld [vmem:[#allocation6 + $0x510] sm:$0xff]
          %v587 = vld [vmem:[#allocation6 + $0x518] sm:$0xff]
          %v588 = vld [vmem:[#allocation6 + $0x520] sm:$0xff]
          %v589 = vld [vmem:[#allocation6 + $0x528] sm:$0xff]
          %v590 = vld [vmem:[#allocation6 + $0x530] sm:$0xff]
          %v591 = vld [vmem:[#allocation6 + $0x538] sm:$0xff]
          %v592 = vld [vmem:[#allocation6 + $0x540] sm:$0xff]
          %v593 = vld [vmem:[#allocation6 + $0x548] sm:$0xff]
          %v594 = vld [vmem:[#allocation6 + $0x550] sm:$0xff]
          %v595 = vld [vmem:[#allocation6 + $0x558] sm:$0xff]
          %v596 = vld [vmem:[#allocation6 + $0x560] sm:$0xff]
          %v597 = vld [vmem:[#allocation6 + $0x568] sm:$0xff]
          %v598 = vld [vmem:[#allocation6 + $0x570] sm:$0xff]
          %v599 = vld [vmem:[#allocation6 + $0x578] sm:$0xff]
          %v600 = vld [vmem:[#allocation6 + $0x580] sm:$0xff]
          %v601 = vld [vmem:[#allocation6 + $0x588] sm:$0xff]
          %v602 = vld [vmem:[#allocation6 + $0x590] sm:$0xff]
          %v603 = vld [vmem:[#allocation6 + $0x598] sm:$0xff]
          %v604 = vld [vmem:[#allocation6 + $0x5a0] sm:$0xff]
          %v605 = vld [vmem:[#allocation6 + $0x5a8] sm:$0xff]
          %v606 = vld [vmem:[#allocation6 + $0x5b0] sm:$0xff]
          %v607 = vld [vmem:[#allocation6 + $0x5b8] sm:$0xff]
          %v608 = vld [vmem:[#allocation6 + $0x5c0] sm:$0xff]
          %v609 = vld [vmem:[#allocation6 + $0x5c8] sm:$0xff]
          %v610 = vld [vmem:[#allocation6 + $0x5d0] sm:$0xff]
          %v611 = vld [vmem:[#allocation6 + $0x5d8] sm:$0xff]
          %v612 = vld [vmem:[#allocation6 + $0x5e0] sm:$0xff]
          %v613 = vld [vmem:[#allocation6 + $0x5e8] sm:$0xff]
          %v614 = vld [vmem:[#allocation6 + $0x5f0] sm:$0xff]
          %v615 = vld [vmem:[#allocation6 + $0x5f8] sm:$0xff]
          %v616 = vld [vmem:[#allocation6 + $0x600] sm:$0xff]
          %v617 = vld [vmem:[#allocation6 + $0x608] sm:$0xff]
          %v618 = vld [vmem:[#allocation6 + $0x610] sm:$0xff]
          %v619 = vld [vmem:[#allocation6 + $0x618] sm:$0xff]
          %v620 = vld [vmem:[#allocation6 + $0x620] sm:$0xff]
          %v621 = vld [vmem:[#allocation6 + $0x628] sm:$0xff]
          %v622 = vld [vmem:[#allocation6 + $0x630] sm:$0xff]
          %v623 = vld [vmem:[#allocation6 + $0x638] sm:$0xff]
          %v624 = vld [vmem:[#allocation8] sm:$0xff]
          %v625 = vld [vmem:[#allocation8 + $0x8] sm:$0x3]
          %v628 = vlaneseq
          %v629 = vshrl.u32 %v628, 7
          %v630 = vsub.s32 0, %v629
          %v631 = vrot.slane %v624, %v630
          %v632 = vlaneseq
          %v633 = vshrl.u32 %v632, 7
          %v634 = vsub.s32 1, %v633
          %v635 = vrot.slane %v624, %v634
          %v636 = vlaneseq
          %v637 = vshrl.u32 %v636, 7
          %v638 = vsub.s32 2, %v637
          %v639 = vrot.slane %v624, %v638
          %v640 = vlaneseq
          %v641 = vshrl.u32 %v640, 7
          %v642 = vsub.s32 3, %v641
          %v643 = vrot.slane %v624, %v642
          %v644 = vlaneseq
          %v645 = vshrl.u32 %v644, 7
          %v646 = vsub.s32 4, %v645
          %v647 = vrot.slane %v624, %v646
          %v648 = vlaneseq
          %v649 = vshrl.u32 %v648, 7
          %v650 = vsub.s32 5, %v649
          %v651 = vrot.slane %v624, %v650
          %v652 = vlaneseq
          %v653 = vshrl.u32 %v652, 7
          %v654 = vsub.s32 6, %v653
          %v655 = vrot.slane %v624, %v654
          %v656 = vlaneseq
          %v657 = vshrl.u32 %v656, 7
          %v658 = vsub.s32 7, %v657
          %v659 = vrot.slane %v624, %v658
          %v660 = vlaneseq
          %v661 = vshrl.u32 %v660, 7
          %v662 = vsub.s32 0, %v661
          %v663 = vrot.slane %v625, %v662
          %v664 = vlaneseq
          %v665 = vshrl.u32 %v664, 7
          %v666 = vsub.s32 1, %v665
          %v667 = vrot.slane %v625, %v666
          %v684 = vunpack.c.l.b16 %v418
          %v685 = vunpack.c.h.b16 %v418
          %v686 = vunpack.c.l.b16 %v419
          %v687 = vunpack.c.l.b16 %v420
          %v688 = vunpack.c.h.b16 %v420
          %v689 = vunpack.c.l.b16 %v421
          %v690 = vunpack.c.l.b16 %v422
          %v691 = vunpack.c.h.b16 %v422
          %v692 = vunpack.c.l.b16 %v423
          %v693 = vpack.c.b16 %v687, %v684
          %v694 = vpack.c.b16 %v688, %v685
          %v695 = vpack.c.b16 %v689, %v686
          %v696 = vpack.c.b16 %v690, %v690
          %v697 = vpack.c.b16 %v691, %v691
          %v698 = vpack.c.b16 %v692, %v692
          %v903 = vunpack.c.l.b16 %v424
          %v904 = vunpack.c.h.b16 %v424
          %v905 = vunpack.c.l.b16 %v425
          %v906 = vunpack.c.h.b16 %v425
          %v907 = vunpack.c.l.b16 %v426
          %v908 = vunpack.c.h.b16 %v426
          %v909 = vunpack.c.l.b16 %v427
          %v910 = vunpack.c.h.b16 %v427
          %v911 = vunpack.c.l.b16 %v428
          %v912 = vunpack.c.h.b16 %v428
          %v913 = vunpack.c.l.b16 %v429
          %v914 = vunpack.c.h.b16 %v429
          %v915 = vunpack.c.l.b16 %v430
          %v916 = vunpack.c.h.b16 %v430
          %v917 = vunpack.c.l.b16 %v431
          %v918 = vunpack.c.h.b16 %v431
          %v919 = vunpack.c.l.b16 %v432
          %v920 = vunpack.c.h.b16 %v432
          %v921 = vunpack.c.l.b16 %v433
          %v922 = vunpack.c.h.b16 %v433
          %v923 = vunpack.c.l.b16 %v434
          %v924 = vunpack.c.h.b16 %v434
          %v925 = vunpack.c.l.b16 %v435
          %v926 = vunpack.c.h.b16 %v435
          %v927 = vunpack.c.l.b16 %v436
          %v928 = vunpack.c.h.b16 %v436
          %v929 = vunpack.c.l.b16 %v437
          %v930 = vunpack.c.h.b16 %v437
          %v931 = vunpack.c.l.b16 %v438
          %v932 = vunpack.c.h.b16 %v438
          %v933 = vunpack.c.l.b16 %v439
          %v934 = vunpack.c.h.b16 %v439
          %v935 = vunpack.c.l.b16 %v440
          %v936 = vunpack.c.h.b16 %v440
          %v937 = vunpack.c.l.b16 %v441
          %v938 = vunpack.c.h.b16 %v441
          %v939 = vunpack.c.l.b16 %v442
          %v940 = vunpack.c.h.b16 %v442
          %v941 = vunpack.c.l.b16 %v443
          %v942 = vunpack.c.h.b16 %v443
          %v943 = vunpack.c.l.b16 %v444
          %v944 = vunpack.c.h.b16 %v444
          %v945 = vunpack.c.l.b16 %v445
          %v946 = vunpack.c.h.b16 %v445
          %v947 = vunpack.c.l.b16 %v446
          %v948 = vunpack.c.h.b16 %v446
          %v949 = vunpack.c.l.b16 %v447
          %v950 = vunpack.c.h.b16 %v447
          %v951 = vunpack.c.l.b16 %v448
          %v952 = vunpack.c.h.b16 %v448
          %v953 = vunpack.c.l.b16 %v449
          %v954 = vunpack.c.h.b16 %v449
          %v955 = vunpack.c.l.b16 %v450
          %v956 = vunpack.c.h.b16 %v450
          %v957 = vunpack.c.l.b16 %v451
          %v958 = vunpack.c.h.b16 %v451
          %v959 = vunpack.c.l.b16 %v452
          %v960 = vunpack.c.h.b16 %v452
          %v961 = vunpack.c.l.b16 %v453
          %v962 = vunpack.c.h.b16 %v453
          %v963 = vunpack.c.l.b16 %v454
          %v964 = vunpack.c.h.b16 %v454
          %v965 = vunpack.c.l.b16 %v455
          %v966 = vunpack.c.h.b16 %v455
          %v967 = vunpack.c.l.b16 %v456
          %v968 = vunpack.c.h.b16 %v456
          %v969 = vunpack.c.l.b16 %v457
          %v970 = vunpack.c.h.b16 %v457
          %v971 = vunpack.c.l.b16 %v458
          %v972 = vunpack.c.h.b16 %v458
          %v973 = vunpack.c.l.b16 %v459
          %v974 = vunpack.c.h.b16 %v459
          %v975 = vunpack.c.l.b16 %v460
          %v976 = vunpack.c.h.b16 %v460
          %v977 = vunpack.c.l.b16 %v461
          %v978 = vunpack.c.h.b16 %v461
          %v979 = vunpack.c.l.b16 %v462
          %v980 = vunpack.c.h.b16 %v462
          %v981 = vunpack.c.l.b16 %v463
          %v982 = vunpack.c.h.b16 %v463
          %v983 = vunpack.c.l.b16 %v464
          %v984 = vunpack.c.h.b16 %v464
          %v985 = vunpack.c.l.b16 %v465
          %v986 = vunpack.c.h.b16 %v465
          %v987 = vunpack.c.l.b16 %v466
          %v988 = vunpack.c.h.b16 %v466
          %v989 = vunpack.c.l.b16 %v467
          %v990 = vunpack.c.h.b16 %v467
          %v991 = vunpack.c.l.b16 %v468
          %v992 = vunpack.c.h.b16 %v468
          %v993 = vunpack.c.l.b16 %v469
          %v994 = vunpack.c.h.b16 %v469
          %v995 = vunpack.c.l.b16 %v470
          %v996 = vunpack.c.h.b16 %v470
          %v997 = vunpack.c.l.b16 %v471
          %v998 = vunpack.c.h.b16 %v471
          %v999 = vunpack.c.l.b16 %v472
          %v1000 = vunpack.c.h.b16 %v472
          %v1001 = vunpack.c.l.b16 %v473
          %v1002 = vunpack.c.h.b16 %v473
          %v1003 = vunpack.c.l.b16 %v474
          %v1004 = vunpack.c.h.b16 %v474
          %v1005 = vunpack.c.l.b16 %v475
          %v1006 = vunpack.c.h.b16 %v475
          %v1007 = vunpack.c.l.b16 %v476
          %v1008 = vunpack.c.h.b16 %v476
          %v1009 = vunpack.c.l.b16 %v477
          %v1010 = vunpack.c.h.b16 %v477
          %v1011 = vunpack.c.l.b16 %v478
          %v1012 = vunpack.c.h.b16 %v478
          %v1013 = vunpack.c.l.b16 %v479
          %v1014 = vunpack.c.h.b16 %v479
          %v1015 = vunpack.c.l.b16 %v480
          %v1016 = vunpack.c.h.b16 %v480
          %v1017 = vunpack.c.l.b16 %v481
          %v1018 = vunpack.c.h.b16 %v481
          %v1019 = vunpack.c.l.b16 %v482
          %v1020 = vunpack.c.h.b16 %v482
          %v1021 = vunpack.c.l.b16 %v483
          %v1022 = vunpack.c.h.b16 %v483
          %v1023 = vunpack.c.l.b16 %v484
          %v1024 = vunpack.c.h.b16 %v484
          %v1025 = vunpack.c.l.b16 %v485
          %v1026 = vunpack.c.h.b16 %v485
          %v1027 = vunpack.c.l.b16 %v486
          %v1028 = vunpack.c.h.b16 %v486
          %v1029 = vunpack.c.l.b16 %v487
          %v1030 = vunpack.c.h.b16 %v487
          %v1031 = vunpack.c.l.b16 %v488
          %v1032 = vunpack.c.h.b16 %v488
          %v1033 = vunpack.c.l.b16 %v489
          %v1034 = vunpack.c.h.b16 %v489
          %v1035 = vunpack.c.l.b16 %v490
          %v1036 = vunpack.c.h.b16 %v490
          %v1037 = vunpack.c.l.b16 %v491
          %v1038 = vunpack.c.h.b16 %v491
          %v1039 = vunpack.c.l.b16 %v492
          %v1040 = vunpack.c.h.b16 %v492
          %v1041 = vunpack.c.l.b16 %v493
          %v1042 = vunpack.c.h.b16 %v493
          %v1043 = vunpack.c.l.b16 %v494
          %v1044 = vunpack.c.h.b16 %v494
          %v1045 = vunpack.c.l.b16 %v495
          %v1046 = vunpack.c.h.b16 %v495
          %v1047 = vunpack.c.l.b16 %v496
          %v1048 = vunpack.c.h.b16 %v496
          %v1049 = vunpack.c.l.b16 %v497
          %v1050 = vunpack.c.h.b16 %v497
          %v1051 = vunpack.c.l.b16 %v498
          %v1052 = vunpack.c.h.b16 %v498
          %v1053 = vunpack.c.l.b16 %v499
          %v1054 = vunpack.c.h.b16 %v499
          %v1055 = vunpack.c.l.b16 %v500
          %v1056 = vunpack.c.h.b16 %v500
          %v1057 = vunpack.c.l.b16 %v501
          %v1058 = vunpack.c.h.b16 %v501
          %v1059 = vunpack.c.l.b16 %v502
          %v1060 = vunpack.c.h.b16 %v502
          %v1061 = vunpack.c.l.b16 %v503
          %v1062 = vunpack.c.h.b16 %v503
          %v1063 = vunpack.c.l.b16 %v504
          %v1064 = vunpack.c.h.b16 %v504
          %v1065 = vunpack.c.l.b16 %v505
          %v1066 = vunpack.c.h.b16 %v505
          %v1067 = vunpack.c.l.b16 %v506
          %v1068 = vunpack.c.h.b16 %v506
          %v1069 = vunpack.c.l.b16 %v507
          %v1070 = vunpack.c.h.b16 %v507
          %v1071 = vunpack.c.l.b16 %v508
          %v1072 = vunpack.c.h.b16 %v508
          %v1073 = vunpack.c.l.b16 %v509
          %v1074 = vunpack.c.h.b16 %v509
          %v1075 = vunpack.c.l.b16 %v510
          %v1076 = vunpack.c.h.b16 %v510
          %v1077 = vunpack.c.l.b16 %v511
          %v1078 = vunpack.c.h.b16 %v511
          %v1079 = vunpack.c.l.b16 %v512
          %v1080 = vunpack.c.h.b16 %v512
          %v1081 = vunpack.c.l.b16 %v513
          %v1082 = vunpack.c.h.b16 %v513
          %v1083 = vunpack.c.l.b16 %v514
          %v1084 = vunpack.c.h.b16 %v514
          %v1085 = vunpack.c.l.b16 %v515
          %v1086 = vunpack.c.h.b16 %v515
          %v1087 = vunpack.c.l.b16 %v516
          %v1088 = vunpack.c.h.b16 %v516
          %v1089 = vunpack.c.l.b16 %v517
          %v1090 = vunpack.c.h.b16 %v517
          %v1091 = vunpack.c.l.b16 %v518
          %v1092 = vunpack.c.h.b16 %v518
          %v1093 = vunpack.c.l.b16 %v519
          %v1094 = vunpack.c.h.b16 %v519
          %v1095 = vunpack.c.l.b16 %v520
          %v1096 = vunpack.c.h.b16 %v520
          %v1097 = vunpack.c.l.b16 %v521
          %v1098 = vunpack.c.h.b16 %v521
          %v1099 = vunpack.c.l.b16 %v522
          %v1100 = vunpack.c.h.b16 %v522
          %v1101 = vunpack.c.l.b16 %v523
          %v1102 = vunpack.c.h.b16 %v523
          %v1103 = vunpack.c.l.b16 %v524
          %v1104 = vunpack.c.h.b16 %v524
          %v1105 = vunpack.c.l.b16 %v525
          %v1106 = vunpack.c.h.b16 %v525
          %v1107 = vunpack.c.l.b16 %v526
          %v1108 = vunpack.c.h.b16 %v526
          %v1109 = vunpack.c.l.b16 %v527
          %v1110 = vunpack.c.h.b16 %v527
          %v1111 = vunpack.c.l.b16 %v528
          %v1112 = vunpack.c.h.b16 %v528
          %v1113 = vunpack.c.l.b16 %v529
          %v1114 = vunpack.c.h.b16 %v529
          %v1115 = vunpack.c.l.b16 %v530
          %v1116 = vunpack.c.h.b16 %v530
          %v1117 = vunpack.c.l.b16 %v531
          %v1118 = vunpack.c.h.b16 %v531
          %v1119 = vunpack.c.l.b16 %v532
          %v1120 = vunpack.c.h.b16 %v532
          %v1121 = vunpack.c.l.b16 %v533
          %v1122 = vunpack.c.h.b16 %v533
          %v1123 = vunpack.c.l.b16 %v534
          %v1124 = vunpack.c.h.b16 %v534
          %v1125 = vunpack.c.l.b16 %v535
          %v1126 = vunpack.c.h.b16 %v535
          %v1127 = vunpack.c.l.b16 %v536
          %v1128 = vunpack.c.h.b16 %v536
          %v1129 = vunpack.c.l.b16 %v537
          %v1130 = vunpack.c.h.b16 %v537
          %v1131 = vunpack.c.l.b16 %v538
          %v1132 = vunpack.c.h.b16 %v538
          %v1133 = vunpack.c.l.b16 %v539
          %v1134 = vunpack.c.h.b16 %v539
          %v1135 = vunpack.c.l.b16 %v540
          %v1136 = vunpack.c.h.b16 %v540
          %v1137 = vunpack.c.l.b16 %v541
          %v1138 = vunpack.c.h.b16 %v541
          %v1139 = vunpack.c.l.b16 %v542
          %v1140 = vunpack.c.h.b16 %v542
          %v1141 = vunpack.c.l.b16 %v543
          %v1142 = vunpack.c.h.b16 %v543
          %v1143 = vunpack.c.l.b16 %v544
          %v1144 = vunpack.c.h.b16 %v544
          %v1145 = vunpack.c.l.b16 %v545
          %v1146 = vunpack.c.h.b16 %v545
          %v1147 = vunpack.c.l.b16 %v546
          %v1148 = vunpack.c.h.b16 %v546
          %v1149 = vunpack.c.l.b16 %v547
          %v1150 = vunpack.c.h.b16 %v547
          %v1151 = vunpack.c.l.b16 %v548
          %v1152 = vunpack.c.h.b16 %v548
          %v1153 = vunpack.c.l.b16 %v549
          %v1154 = vunpack.c.h.b16 %v549
          %v1155 = vunpack.c.l.b16 %v550
          %v1156 = vunpack.c.h.b16 %v550
          %v1157 = vunpack.c.l.b16 %v551
          %v1158 = vunpack.c.h.b16 %v551
          %v1159 = vunpack.c.l.b16 %v552
          %v1160 = vunpack.c.h.b16 %v552
          %v1161 = vunpack.c.l.b16 %v553
          %v1162 = vunpack.c.h.b16 %v553
          %v1163 = vunpack.c.l.b16 %v554
          %v1164 = vunpack.c.h.b16 %v554
          %v1165 = vunpack.c.l.b16 %v555
          %v1166 = vunpack.c.h.b16 %v555
          %v1167 = vunpack.c.l.b16 %v556
          %v1168 = vunpack.c.h.b16 %v556
          %v1169 = vunpack.c.l.b16 %v557
          %v1170 = vunpack.c.h.b16 %v557
          %v1171 = vunpack.c.l.b16 %v558
          %v1172 = vunpack.c.h.b16 %v558
          %v1173 = vunpack.c.l.b16 %v559
          %v1174 = vunpack.c.h.b16 %v559
          %v1175 = vunpack.c.l.b16 %v560
          %v1176 = vunpack.c.h.b16 %v560
          %v1177 = vunpack.c.l.b16 %v561
          %v1178 = vunpack.c.h.b16 %v561
          %v1179 = vunpack.c.l.b16 %v562
          %v1180 = vunpack.c.h.b16 %v562
          %v1181 = vunpack.c.l.b16 %v563
          %v1182 = vunpack.c.h.b16 %v563
          %v1183 = vunpack.c.l.b16 %v564
          %v1184 = vunpack.c.h.b16 %v564
          %v1185 = vunpack.c.l.b16 %v565
          %v1186 = vunpack.c.h.b16 %v565
          %v1187 = vunpack.c.l.b16 %v566
          %v1188 = vunpack.c.h.b16 %v566
          %v1189 = vunpack.c.l.b16 %v567
          %v1190 = vunpack.c.h.b16 %v567
          %v1191 = vunpack.c.l.b16 %v568
          %v1192 = vunpack.c.h.b16 %v568
          %v1193 = vunpack.c.l.b16 %v569
          %v1194 = vunpack.c.h.b16 %v569
          %v1195 = vunpack.c.l.b16 %v570
          %v1196 = vunpack.c.h.b16 %v570
          %v1197 = vunpack.c.l.b16 %v571
          %v1198 = vunpack.c.h.b16 %v571
          %v1199 = vunpack.c.l.b16 %v572
          %v1200 = vunpack.c.h.b16 %v572
          %v1201 = vunpack.c.l.b16 %v573
          %v1202 = vunpack.c.h.b16 %v573
          %v1203 = vunpack.c.l.b16 %v574
          %v1204 = vunpack.c.h.b16 %v574
          %v1205 = vunpack.c.l.b16 %v575
          %v1206 = vunpack.c.h.b16 %v575
          %v1207 = vunpack.c.l.b16 %v576
          %v1208 = vunpack.c.h.b16 %v576
          %v1209 = vunpack.c.l.b16 %v577
          %v1210 = vunpack.c.h.b16 %v577
          %v1211 = vunpack.c.l.b16 %v578
          %v1212 = vunpack.c.h.b16 %v578
          %v1213 = vunpack.c.l.b16 %v579
          %v1214 = vunpack.c.h.b16 %v579
          %v1215 = vunpack.c.l.b16 %v580
          %v1216 = vunpack.c.h.b16 %v580
          %v1217 = vunpack.c.l.b16 %v581
          %v1218 = vunpack.c.h.b16 %v581
          %v1219 = vunpack.c.l.b16 %v582
          %v1220 = vunpack.c.h.b16 %v582
          %v1221 = vunpack.c.l.b16 %v583
          %v1222 = vunpack.c.h.b16 %v583
          %v1223 = vunpack.c.l.b16 %v584
          %v1224 = vunpack.c.h.b16 %v584
          %v1225 = vunpack.c.l.b16 %v585
          %v1226 = vunpack.c.h.b16 %v585
          %v1227 = vunpack.c.l.b16 %v586
          %v1228 = vunpack.c.h.b16 %v586
          %v1229 = vunpack.c.l.b16 %v587
          %v1230 = vunpack.c.h.b16 %v587
          %v1231 = vunpack.c.l.b16 %v588
          %v1232 = vunpack.c.h.b16 %v588
          %v1233 = vunpack.c.l.b16 %v589
          %v1234 = vunpack.c.h.b16 %v589
          %v1235 = vunpack.c.l.b16 %v590
          %v1236 = vunpack.c.h.b16 %v590
          %v1237 = vunpack.c.l.b16 %v591
          %v1238 = vunpack.c.h.b16 %v591
          %v1239 = vunpack.c.l.b16 %v592
          %v1240 = vunpack.c.h.b16 %v592
          %v1241 = vunpack.c.l.b16 %v593
          %v1242 = vunpack.c.h.b16 %v593
          %v1243 = vunpack.c.l.b16 %v594
          %v1244 = vunpack.c.h.b16 %v594
          %v1245 = vunpack.c.l.b16 %v595
          %v1246 = vunpack.c.h.b16 %v595
          %v1247 = vunpack.c.l.b16 %v596
          %v1248 = vunpack.c.h.b16 %v596
          %v1249 = vunpack.c.l.b16 %v597
          %v1250 = vunpack.c.h.b16 %v597
          %v1251 = vunpack.c.l.b16 %v598
          %v1252 = vunpack.c.h.b16 %v598
          %v1253 = vunpack.c.l.b16 %v599
          %v1254 = vunpack.c.h.b16 %v599
          %v1255 = vunpack.c.l.b16 %v600
          %v1256 = vunpack.c.h.b16 %v600
          %v1257 = vunpack.c.l.b16 %v601
          %v1258 = vunpack.c.h.b16 %v601
          %v1259 = vunpack.c.l.b16 %v602
          %v1260 = vunpack.c.h.b16 %v602
          %v1261 = vunpack.c.l.b16 %v603
          %v1262 = vunpack.c.h.b16 %v603
          %v1263 = vunpack.c.l.b16 %v604
          %v1264 = vunpack.c.h.b16 %v604
          %v1265 = vunpack.c.l.b16 %v605
          %v1266 = vunpack.c.h.b16 %v605
          %v1267 = vunpack.c.l.b16 %v606
          %v1268 = vunpack.c.h.b16 %v606
          %v1269 = vunpack.c.l.b16 %v607
          %v1270 = vunpack.c.h.b16 %v607
          %v1271 = vunpack.c.l.b16 %v608
          %v1272 = vunpack.c.h.b16 %v608
          %v1273 = vunpack.c.l.b16 %v609
          %v1274 = vunpack.c.h.b16 %v609
          %v1275 = vunpack.c.l.b16 %v610
          %v1276 = vunpack.c.h.b16 %v610
          %v1277 = vunpack.c.l.b16 %v611
          %v1278 = vunpack.c.h.b16 %v611
          %v1279 = vunpack.c.l.b16 %v612
          %v1280 = vunpack.c.h.b16 %v612
          %v1281 = vunpack.c.l.b16 %v613
          %v1282 = vunpack.c.h.b16 %v613
          %v1283 = vunpack.c.l.b16 %v614
          %v1284 = vunpack.c.h.b16 %v614
          %v1285 = vunpack.c.l.b16 %v615
          %v1286 = vunpack.c.h.b16 %v615
          %v1287 = vunpack.c.l.b16 %v616
          %v1288 = vunpack.c.h.b16 %v616
          %v1289 = vunpack.c.l.b16 %v617
          %v1290 = vunpack.c.h.b16 %v617
          %v1291 = vunpack.c.l.b16 %v618
          %v1292 = vunpack.c.h.b16 %v618
          %v1293 = vunpack.c.l.b16 %v619
          %v1294 = vunpack.c.h.b16 %v619
          %v1295 = vunpack.c.l.b16 %v620
          %v1296 = vunpack.c.h.b16 %v620
          %v1297 = vunpack.c.l.b16 %v621
          %v1298 = vunpack.c.h.b16 %v621
          %v1299 = vunpack.c.l.b16 %v622
          %v1300 = vunpack.c.h.b16 %v622
          %v1301 = vunpack.c.l.b16 %v623
          %v1302 = vunpack.c.h.b16 %v623
          %v1303 = vpack.c.b16 %v913, %v903
          %v1304 = vpack.c.b16 %v914, %v904
          %v1305 = vpack.c.b16 %v915, %v905
          %v1306 = vpack.c.b16 %v916, %v906
          %v1307 = vpack.c.b16 %v917, %v907
          %v1308 = vpack.c.b16 %v918, %v908
          %v1309 = vpack.c.b16 %v919, %v909
          %v1310 = vpack.c.b16 %v920, %v910
          %v1311 = vpack.c.b16 %v921, %v911
          %v1312 = vpack.c.b16 %v922, %v912
          %v1313 = vpack.c.b16 %v933, %v923
          %v1314 = vpack.c.b16 %v934, %v924
          %v1315 = vpack.c.b16 %v935, %v925
          %v1316 = vpack.c.b16 %v936, %v926
          %v1317 = vpack.c.b16 %v937, %v927
          %v1318 = vpack.c.b16 %v938, %v928
          %v1319 = vpack.c.b16 %v939, %v929
          %v1320 = vpack.c.b16 %v940, %v930
          %v1321 = vpack.c.b16 %v941, %v931
          %v1322 = vpack.c.b16 %v942, %v932
          %v1323 = vpack.c.b16 %v953, %v943
          %v1324 = vpack.c.b16 %v954, %v944
          %v1325 = vpack.c.b16 %v955, %v945
          %v1326 = vpack.c.b16 %v956, %v946
          %v1327 = vpack.c.b16 %v957, %v947
          %v1328 = vpack.c.b16 %v958, %v948
          %v1329 = vpack.c.b16 %v959, %v949
          %v1330 = vpack.c.b16 %v960, %v950
          %v1331 = vpack.c.b16 %v961, %v951
          %v1332 = vpack.c.b16 %v962, %v952
          %v1333 = vpack.c.b16 %v973, %v963
          %v1334 = vpack.c.b16 %v974, %v964
          %v1335 = vpack.c.b16 %v975, %v965
          %v1336 = vpack.c.b16 %v976, %v966
          %v1337 = vpack.c.b16 %v977, %v967
          %v1338 = vpack.c.b16 %v978, %v968
          %v1339 = vpack.c.b16 %v979, %v969
          %v1340 = vpack.c.b16 %v980, %v970
          %v1341 = vpack.c.b16 %v981, %v971
          %v1342 = vpack.c.b16 %v982, %v972
          %v1343 = vpack.c.b16 %v993, %v983
          %v1344 = vpack.c.b16 %v994, %v984
          %v1345 = vpack.c.b16 %v995, %v985
          %v1346 = vpack.c.b16 %v996, %v986
          %v1347 = vpack.c.b16 %v997, %v987
          %v1348 = vpack.c.b16 %v998, %v988
          %v1349 = vpack.c.b16 %v999, %v989
          %v1350 = vpack.c.b16 %v1000, %v990
          %v1351 = vpack.c.b16 %v1001, %v991
          %v1352 = vpack.c.b16 %v1002, %v992
          %v1353 = vpack.c.b16 %v1013, %v1003
          %v1354 = vpack.c.b16 %v1014, %v1004
          %v1355 = vpack.c.b16 %v1015, %v1005
          %v1356 = vpack.c.b16 %v1016, %v1006
          %v1357 = vpack.c.b16 %v1017, %v1007
          %v1358 = vpack.c.b16 %v1018, %v1008
          %v1359 = vpack.c.b16 %v1019, %v1009
          %v1360 = vpack.c.b16 %v1020, %v1010
          %v1361 = vpack.c.b16 %v1021, %v1011
          %v1362 = vpack.c.b16 %v1022, %v1012
          %v1363 = vpack.c.b16 %v1033, %v1023
          %v1364 = vpack.c.b16 %v1034, %v1024
          %v1365 = vpack.c.b16 %v1035, %v1025
          %v1366 = vpack.c.b16 %v1036, %v1026
          %v1367 = vpack.c.b16 %v1037, %v1027
          %v1368 = vpack.c.b16 %v1038, %v1028
          %v1369 = vpack.c.b16 %v1039, %v1029
          %v1370 = vpack.c.b16 %v1040, %v1030
          %v1371 = vpack.c.b16 %v1041, %v1031
          %v1372 = vpack.c.b16 %v1042, %v1032
          %v1373 = vpack.c.b16 %v1053, %v1043
          %v1374 = vpack.c.b16 %v1054, %v1044
          %v1375 = vpack.c.b16 %v1055, %v1045
          %v1376 = vpack.c.b16 %v1056, %v1046
          %v1377 = vpack.c.b16 %v1057, %v1047
          %v1378 = vpack.c.b16 %v1058, %v1048
          %v1379 = vpack.c.b16 %v1059, %v1049
          %v1380 = vpack.c.b16 %v1060, %v1050
          %v1381 = vpack.c.b16 %v1061, %v1051
          %v1382 = vpack.c.b16 %v1062, %v1052
          %v1383 = vpack.c.b16 %v1073, %v1063
          %v1384 = vpack.c.b16 %v1074, %v1064
          %v1385 = vpack.c.b16 %v1075, %v1065
          %v1386 = vpack.c.b16 %v1076, %v1066
          %v1387 = vpack.c.b16 %v1077, %v1067
          %v1388 = vpack.c.b16 %v1078, %v1068
          %v1389 = vpack.c.b16 %v1079, %v1069
          %v1390 = vpack.c.b16 %v1080, %v1070
          %v1391 = vpack.c.b16 %v1081, %v1071
          %v1392 = vpack.c.b16 %v1082, %v1072
          %v1393 = vpack.c.b16 %v1093, %v1083
          %v1394 = vpack.c.b16 %v1094, %v1084
          %v1395 = vpack.c.b16 %v1095, %v1085
          %v1396 = vpack.c.b16 %v1096, %v1086
          %v1397 = vpack.c.b16 %v1097, %v1087
          %v1398 = vpack.c.b16 %v1098, %v1088
          %v1399 = vpack.c.b16 %v1099, %v1089
          %v1400 = vpack.c.b16 %v1100, %v1090
          %v1401 = vpack.c.b16 %v1101, %v1091
          %v1402 = vpack.c.b16 %v1102, %v1092
          %v1403 = vpack.c.b16 %v1113, %v1103
          %v1404 = vpack.c.b16 %v1114, %v1104
          %v1405 = vpack.c.b16 %v1115, %v1105
          %v1406 = vpack.c.b16 %v1116, %v1106
          %v1407 = vpack.c.b16 %v1117, %v1107
          %v1408 = vpack.c.b16 %v1118, %v1108
          %v1409 = vpack.c.b16 %v1119, %v1109
          %v1410 = vpack.c.b16 %v1120, %v1110
          %v1411 = vpack.c.b16 %v1121, %v1111
          %v1412 = vpack.c.b16 %v1122, %v1112
          %v1413 = vpack.c.b16 %v1133, %v1123
          %v1414 = vpack.c.b16 %v1134, %v1124
          %v1415 = vpack.c.b16 %v1135, %v1125
          %v1416 = vpack.c.b16 %v1136, %v1126
          %v1417 = vpack.c.b16 %v1137, %v1127
          %v1418 = vpack.c.b16 %v1138, %v1128
          %v1419 = vpack.c.b16 %v1139, %v1129
          %v1420 = vpack.c.b16 %v1140, %v1130
          %v1421 = vpack.c.b16 %v1141, %v1131
          %v1422 = vpack.c.b16 %v1142, %v1132
          %v1423 = vpack.c.b16 %v1153, %v1143
          %v1424 = vpack.c.b16 %v1154, %v1144
          %v1425 = vpack.c.b16 %v1155, %v1145
          %v1426 = vpack.c.b16 %v1156, %v1146
          %v1427 = vpack.c.b16 %v1157, %v1147
          %v1428 = vpack.c.b16 %v1158, %v1148
          %v1429 = vpack.c.b16 %v1159, %v1149
          %v1430 = vpack.c.b16 %v1160, %v1150
          %v1431 = vpack.c.b16 %v1161, %v1151
          %v1432 = vpack.c.b16 %v1162, %v1152
          %v1433 = vpack.c.b16 %v1173, %v1163
          %v1434 = vpack.c.b16 %v1174, %v1164
          %v1435 = vpack.c.b16 %v1175, %v1165
          %v1436 = vpack.c.b16 %v1176, %v1166
          %v1437 = vpack.c.b16 %v1177, %v1167
          %v1438 = vpack.c.b16 %v1178, %v1168
          %v1439 = vpack.c.b16 %v1179, %v1169
          %v1440 = vpack.c.b16 %v1180, %v1170
          %v1441 = vpack.c.b16 %v1181, %v1171
          %v1442 = vpack.c.b16 %v1182, %v1172
          %v1443 = vpack.c.b16 %v1193, %v1183
          %v1444 = vpack.c.b16 %v1194, %v1184
          %v1445 = vpack.c.b16 %v1195, %v1185
          %v1446 = vpack.c.b16 %v1196, %v1186
          %v1447 = vpack.c.b16 %v1197, %v1187
          %v1448 = vpack.c.b16 %v1198, %v1188
          %v1449 = vpack.c.b16 %v1199, %v1189
          %v1450 = vpack.c.b16 %v1200, %v1190
          %v1451 = vpack.c.b16 %v1201, %v1191
          %v1452 = vpack.c.b16 %v1202, %v1192
          %v1453 = vpack.c.b16 %v1213, %v1203
          %v1454 = vpack.c.b16 %v1214, %v1204
          %v1455 = vpack.c.b16 %v1215, %v1205
          %v1456 = vpack.c.b16 %v1216, %v1206
          %v1457 = vpack.c.b16 %v1217, %v1207
          %v1458 = vpack.c.b16 %v1218, %v1208
          %v1459 = vpack.c.b16 %v1219, %v1209
          %v1460 = vpack.c.b16 %v1220, %v1210
          %v1461 = vpack.c.b16 %v1221, %v1211
          %v1462 = vpack.c.b16 %v1222, %v1212
          %v1463 = vpack.c.b16 %v1233, %v1223
          %v1464 = vpack.c.b16 %v1234, %v1224
          %v1465 = vpack.c.b16 %v1235, %v1225
          %v1466 = vpack.c.b16 %v1236, %v1226
          %v1467 = vpack.c.b16 %v1237, %v1227
          %v1468 = vpack.c.b16 %v1238, %v1228
          %v1469 = vpack.c.b16 %v1239, %v1229
          %v1470 = vpack.c.b16 %v1240, %v1230
          %v1471 = vpack.c.b16 %v1241, %v1231
          %v1472 = vpack.c.b16 %v1242, %v1232
          %v1473 = vpack.c.b16 %v1253, %v1243
          %v1474 = vpack.c.b16 %v1254, %v1244
          %v1475 = vpack.c.b16 %v1255, %v1245
          %v1476 = vpack.c.b16 %v1256, %v1246
          %v1477 = vpack.c.b16 %v1257, %v1247
          %v1478 = vpack.c.b16 %v1258, %v1248
          %v1479 = vpack.c.b16 %v1259, %v1249
          %v1480 = vpack.c.b16 %v1260, %v1250
          %v1481 = vpack.c.b16 %v1261, %v1251
          %v1482 = vpack.c.b16 %v1262, %v1252
          %v1483 = vpack.c.b16 %v1273, %v1263
          %v1484 = vpack.c.b16 %v1274, %v1264
          %v1485 = vpack.c.b16 %v1275, %v1265
          %v1486 = vpack.c.b16 %v1276, %v1266
          %v1487 = vpack.c.b16 %v1277, %v1267
          %v1488 = vpack.c.b16 %v1278, %v1268
          %v1489 = vpack.c.b16 %v1279, %v1269
          %v1490 = vpack.c.b16 %v1280, %v1270
          %v1491 = vpack.c.b16 %v1281, %v1271
          %v1492 = vpack.c.b16 %v1282, %v1272
          %v1493 = vpack.c.b16 %v1293, %v1283
          %v1494 = vpack.c.b16 %v1294, %v1284
          %v1495 = vpack.c.b16 %v1295, %v1285
          %v1496 = vpack.c.b16 %v1296, %v1286
          %v1497 = vpack.c.b16 %v1297, %v1287
          %v1498 = vpack.c.b16 %v1298, %v1288
          %v1499 = vpack.c.b16 %v1299, %v1289
          %v1500 = vpack.c.b16 %v1300, %v1290
          %v1501 = vpack.c.b16 %v1301, %v1291
          %v1502 = vpack.c.b16 %v1302, %v1292
          %vm1703 = vcmask 523264
          %v1705 = vsel %vm1703, %v695, 0
          %v1708 = vsel %vm1703, %v698, 0
          %1710 = vmatprep.subr.bf16.mxu0 %v1374
          %1711 = vmatpush1.bf16.msra.mxu0 %v1373
          %1712 = vmatprep.subr.bf16.mxu0 %v1364
          %1713 = vmatpush1.bf16.msra.mxu0 %v1363
          %1714 = vmatprep.subr.bf16.mxu0 %v1354
          %1715 = vmatpush1.bf16.msra.mxu0 %v1353
          %1716 = vmatprep.subr.bf16.mxu0 %v1344
          %1717 = vmatpush1.bf16.msra.mxu0 %v1343
          %1718 = vmatprep.subr.bf16.mxu0 %v1334
          %1719 = vmatpush1.bf16.msra.mxu0 %v1333
          %1720 = vmatprep.subr.bf16.mxu0 %v1324
          %1721 = vmatpush1.bf16.msra.mxu0 %v1323
          %1722 = vmatprep.subr.bf16.mxu0 %v1314
          %1723 = vmatpush1.bf16.msra.mxu0 %v1313
          %1724 = vmatprep.subr.bf16.mxu0 %v1304
          %1725 = vmatpush1.bf16.msra.mxu0 %v1303
          %1726 = vmatprep.subr.bf16.mxu0 %v1454
          %1727 = vmatpush2.bf16.msra.mxu0 %v1453
          %1728 = vmatprep.subr.bf16.mxu0 %v1444
          %1729 = vmatpush2.bf16.msra.mxu0 %v1443
          %1730 = vmatprep.subr.bf16.mxu0 %v1434
          %1731 = vmatpush2.bf16.msra.mxu0 %v1433
          %1732 = vmatprep.subr.bf16.mxu0 %v1424
          %1733 = vmatpush2.bf16.msra.mxu0 %v1423
          %1734 = vmatprep.subr.bf16.mxu0 %v1414
          %1735 = vmatpush2.bf16.msra.mxu0 %v1413
          %1736 = vmatprep.subr.bf16.mxu0 %v1404
          %1737 = vmatpush2.bf16.msra.mxu0 %v1403
          %1738 = vmatprep.subr.bf16.mxu0 %v1394
          %1739 = vmatpush2.bf16.msra.mxu0 %v1393
          %1740 = vmatprep.subr.bf16.mxu0 %v1384
          %1741 = vmatpush2.bf16.msra.mxu0 %v1383
          %1742 = vmatprep.mubr.bf16.mxu0 %v694
          %1743 = vmatmul.mubr.bf16.gmra.mxu0 %v693
          %v1744 = vpop.f32.mrf.mxu0
          %v1745 = vadd.f32 %v631, %v1744
          %v1746 = vpop.f32.mrf.mxu0
          %v1747 = vadd.f32 %v635, %v1746
          %v1748 = vpop.f32.mrf.mxu0
          %v1749 = vadd.f32 %v631, %v1748
          %v1750 = vpop.f32.mrf.mxu0
          %v1751 = vadd.f32 %v635, %v1750
          %1752 = vmatprep.mubr.bf16.mxu0 %v697
          %1753 = vmatmul.mubr.bf16.gmra.mxu0 %v696
          %v1754 = vpop.f32.mrf.mxu0
          %v1755 = vadd.f32 %v631, %v1754
          %v1756 = vpop.f32.mrf.mxu0
          %v1757 = vadd.f32 %v635, %v1756
          %v1758 = vpop.f32.mrf.mxu0
          %v1759 = vpop.f32.mrf.mxu0
          %1760 = vdwg.mxu0
          %1761 = vmatprep.subr.bf16.mxu0 0
          %1762 = vmatpush1.bf16.msra.mxu0 0
          %1763 = vmatprep.subr.bf16.mxu0 0
          %1764 = vmatpush1.bf16.msra.mxu0 0
          %1765 = vmatprep.subr.bf16.mxu0 0
          %1766 = vmatpush1.bf16.msra.mxu0 0
          %1767 = vmatprep.subr.bf16.mxu0 0
          %1768 = vmatpush1.bf16.msra.mxu0 0
          %1769 = vmatprep.subr.bf16.mxu0 %v1494
          %1770 = vmatpush1.bf16.msra.mxu0 %v1493
          %1771 = vmatprep.subr.bf16.mxu0 %v1484
          %1772 = vmatpush1.bf16.msra.mxu0 %v1483
          %1773 = vmatprep.subr.bf16.mxu0 %v1474
          %1774 = vmatpush1.bf16.msra.mxu0 %v1473
          %1775 = vmatprep.subr.bf16.mxu0 %v1464
          %1776 = vmatpush1.bf16.msra.mxu0 %v1463
          %1777 = vmatprep.subr.bf16.mxu0 0
          %1778 = vmatpush2.bf16.msra.mxu0 0
          %1779 = vmatprep.subr.bf16.mxu0 0
          %1780 = vmatpush2.bf16.msra.mxu0 0
          %1781 = vmatprep.subr.bf16.mxu0 0
          %1782 = vmatpush2.bf16.msra.mxu0 0
          %1783 = vmatprep.subr.bf16.mxu0 0
          %1784 = vmatpush2.bf16.msra.mxu0 0
          %1785 = vmatprep.subr.bf16.mxu0 0
          %1786 = vmatpush2.bf16.msra.mxu0 0
          %1787 = vmatprep.subr.bf16.mxu0 0
          %1788 = vmatpush2.bf16.msra.mxu0 0
          %1789 = vmatprep.subr.bf16.mxu0 0
          %1790 = vmatpush2.bf16.msra.mxu0 0
          %1791 = vmatprep.subr.bf16.mxu0 0
          %1792 = vmatpush2.bf16.msra.mxu0 0
          %1793 = vmatprep.mubr.bf16.mxu0 0
          %1794 = vmatmul.mubr.bf16.gmra.mxu0 %v1705
          %v1795 = vpop.f32.mrf.mxu0
          %v1796 = vadd.f32 %v1745, %v1795
          %v1797 = vpop.f32.mrf.mxu0
          %v1798 = vadd.f32 %v1747, %v1797
          %v1799 = vpop.f32.mrf.mxu0
          %v1800 = vadd.f32 %v1749, %v1799
          %v1801 = vpop.f32.mrf.mxu0
          %v1802 = vadd.f32 %v1751, %v1801
          %1803 = vmatprep.mubr.bf16.mxu0 0
          %1804 = vmatmul.mubr.bf16.gmra.mxu0 %v1708
          %v1805 = vpop.f32.mrf.mxu0
          %v1806 = vadd.f32 %v1755, %v1805
          %v1807 = vpop.f32.mrf.mxu0
          %v1808 = vadd.f32 %v1757, %v1807
          %v1809 = vpop.f32.mrf.mxu0
          %v1810 = vpop.f32.mrf.mxu0
          %1811 = vdwg.mxu0
          %1812 = vmatprep.subr.bf16.mxu0 %v1376
          %1813 = vmatpush1.bf16.msra.mxu0 %v1375
          %1814 = vmatprep.subr.bf16.mxu0 %v1366
          %1815 = vmatpush1.bf16.msra.mxu0 %v1365
          %1816 = vmatprep.subr.bf16.mxu0 %v1356
          %1817 = vmatpush1.bf16.msra.mxu0 %v1355
          %1818 = vmatprep.subr.bf16.mxu0 %v1346
          %1819 = vmatpush1.bf16.msra.mxu0 %v1345
          %1820 = vmatprep.subr.bf16.mxu0 %v1336
          %1821 = vmatpush1.bf16.msra.mxu0 %v1335
          %1822 = vmatprep.subr.bf16.mxu0 %v1326
          %1823 = vmatpush1.bf16.msra.mxu0 %v1325
          %1824 = vmatprep.subr.bf16.mxu0 %v1316
          %1825 = vmatpush1.bf16.msra.mxu0 %v1315
          %1826 = vmatprep.subr.bf16.mxu0 %v1306
          %1827 = vmatpush1.bf16.msra.mxu0 %v1305
          %1828 = vmatprep.subr.bf16.mxu0 %v1456
          %1829 = vmatpush2.bf16.msra.mxu0 %v1455
          %1830 = vmatprep.subr.bf16.mxu0 %v1446
          %1831 = vmatpush2.bf16.msra.mxu0 %v1445
          %1832 = vmatprep.subr.bf16.mxu0 %v1436
          %1833 = vmatpush2.bf16.msra.mxu0 %v1435
          %1834 = vmatprep.subr.bf16.mxu0 %v1426
          %1835 = vmatpush2.bf16.msra.mxu0 %v1425
          %1836 = vmatprep.subr.bf16.mxu0 %v1416
          %1837 = vmatpush2.bf16.msra.mxu0 %v1415
          %1838 = vmatprep.subr.bf16.mxu0 %v1406
          %1839 = vmatpush2.bf16.msra.mxu0 %v1405
          %1840 = vmatprep.subr.bf16.mxu0 %v1396
          %1841 = vmatpush2.bf16.msra.mxu0 %v1395
          %1842 = vmatprep.subr.bf16.mxu0 %v1386
          %1843 = vmatpush2.bf16.msra.mxu0 %v1385
          %1844 = vmatprep.mubr.bf16.mxu0 %v694
          %1845 = vmatmul.mubr.bf16.gmra.mxu0 %v693
          %v1846 = vpop.f32.mrf.mxu0
          %v1847 = vadd.f32 %v639, %v1846
          %v1848 = vpop.f32.mrf.mxu0
          %v1849 = vadd.f32 %v643, %v1848
          %v1850 = vpop.f32.mrf.mxu0
          %v1851 = vadd.f32 %v639, %v1850
          %v1852 = vpop.f32.mrf.mxu0
          %v1853 = vadd.f32 %v643, %v1852
          %1854 = vmatprep.mubr.bf16.mxu0 %v697
          %1855 = vmatmul.mubr.bf16.gmra.mxu0 %v696
          %v1856 = vpop.f32.mrf.mxu0
          %v1857 = vadd.f32 %v639, %v1856
          %v1858 = vpop.f32.mrf.mxu0
          %v1859 = vadd.f32 %v643, %v1858
          %v1860 = vpop.f32.mrf.mxu0
          %v1861 = vpop.f32.mrf.mxu0
          %1862 = vdwg.mxu0
          %1863 = vmatprep.subr.bf16.mxu0 0
          %1864 = vmatpush1.bf16.msra.mxu0 0
          %1865 = vmatprep.subr.bf16.mxu0 0
          %1866 = vmatpush1.bf16.msra.mxu0 0
          %1867 = vmatprep.subr.bf16.mxu0 0
          %1868 = vmatpush1.bf16.msra.mxu0 0
          %1869 = vmatprep.subr.bf16.mxu0 0
          %1870 = vmatpush1.bf16.msra.mxu0 0
          %1871 = vmatprep.subr.bf16.mxu0 %v1496
          %1872 = vmatpush1.bf16.msra.mxu0 %v1495
          %1873 = vmatprep.subr.bf16.mxu0 %v1486
          %1874 = vmatpush1.bf16.msra.mxu0 %v1485
          %1875 = vmatprep.subr.bf16.mxu0 %v1476
          %1876 = vmatpush1.bf16.msra.mxu0 %v1475
          %1877 = vmatprep.subr.bf16.mxu0 %v1466
          %1878 = vmatpush1.bf16.msra.mxu0 %v1465
          %1879 = vmatprep.subr.bf16.mxu0 0
          %1880 = vmatpush2.bf16.msra.mxu0 0
          %1881 = vmatprep.subr.bf16.mxu0 0
          %1882 = vmatpush2.bf16.msra.mxu0 0
          %1883 = vmatprep.subr.bf16.mxu0 0
          %1884 = vmatpush2.bf16.msra.mxu0 0
          %1885 = vmatprep.subr.bf16.mxu0 0
          %1886 = vmatpush2.bf16.msra.mxu0 0
          %1887 = vmatprep.subr.bf16.mxu0 0
          %1888 = vmatpush2.bf16.msra.mxu0 0
          %1889 = vmatprep.subr.bf16.mxu0 0
          %1890 = vmatpush2.bf16.msra.mxu0 0
          %1891 = vmatprep.subr.bf16.mxu0 0
          %1892 = vmatpush2.bf16.msra.mxu0 0
          %1893 = vmatprep.subr.bf16.mxu0 0
          %1894 = vmatpush2.bf16.msra.mxu0 0
          %1895 = vmatprep.mubr.bf16.mxu0 0
          %1896 = vmatmul.mubr.bf16.gmra.mxu0 %v1705
          %v1897 = vpop.f32.mrf.mxu0
          %v1898 = vadd.f32 %v1847, %v1897
          %v1899 = vpop.f32.mrf.mxu0
          %v1900 = vadd.f32 %v1849, %v1899
          %v1901 = vpop.f32.mrf.mxu0
          %v1902 = vadd.f32 %v1851, %v1901
          %v1903 = vpop.f32.mrf.mxu0
          %v1904 = vadd.f32 %v1853, %v1903
          %1905 = vmatprep.mubr.bf16.mxu0 0
          %1906 = vmatmul.mubr.bf16.gmra.mxu0 %v1708
          %v1907 = vpop.f32.mrf.mxu0
          %v1908 = vadd.f32 %v1857, %v1907
          %v1909 = vpop.f32.mrf.mxu0
          %v1910 = vadd.f32 %v1859, %v1909
          %v1911 = vpop.f32.mrf.mxu0
          %v1912 = vpop.f32.mrf.mxu0
          %1913 = vdwg.mxu0
          %1914 = vmatprep.subr.bf16.mxu0 %v1378
          %1915 = vmatpush1.bf16.msra.mxu0 %v1377
          %1916 = vmatprep.subr.bf16.mxu0 %v1368
          %1917 = vmatpush1.bf16.msra.mxu0 %v1367
          %1918 = vmatprep.subr.bf16.mxu0 %v1358
          %1919 = vmatpush1.bf16.msra.mxu0 %v1357
          %1920 = vmatprep.subr.bf16.mxu0 %v1348
          %1921 = vmatpush1.bf16.msra.mxu0 %v1347
          %1922 = vmatprep.subr.bf16.mxu0 %v1338
          %1923 = vmatpush1.bf16.msra.mxu0 %v1337
          %1924 = vmatprep.subr.bf16.mxu0 %v1328
          %1925 = vmatpush1.bf16.msra.mxu0 %v1327
          %1926 = vmatprep.subr.bf16.mxu0 %v1318
          %1927 = vmatpush1.bf16.msra.mxu0 %v1317
          %1928 = vmatprep.subr.bf16.mxu0 %v1308
          %1929 = vmatpush1.bf16.msra.mxu0 %v1307
          %1930 = vmatprep.subr.bf16.mxu0 %v1458
          %1931 = vmatpush2.bf16.msra.mxu0 %v1457
          %1932 = vmatprep.subr.bf16.mxu0 %v1448
          %1933 = vmatpush2.bf16.msra.mxu0 %v1447
          %1934 = vmatprep.subr.bf16.mxu0 %v1438
          %1935 = vmatpush2.bf16.msra.mxu0 %v1437
          %1936 = vmatprep.subr.bf16.mxu0 %v1428
          %1937 = vmatpush2.bf16.msra.mxu0 %v1427
          %1938 = vmatprep.subr.bf16.mxu0 %v1418
          %1939 = vmatpush2.bf16.msra.mxu0 %v1417
          %1940 = vmatprep.subr.bf16.mxu0 %v1408
          %1941 = vmatpush2.bf16.msra.mxu0 %v1407
          %1942 = vmatprep.subr.bf16.mxu0 %v1398
          %1943 = vmatpush2.bf16.msra.mxu0 %v1397
          %1944 = vmatprep.subr.bf16.mxu0 %v1388
          %1945 = vmatpush2.bf16.msra.mxu0 %v1387
          %1946 = vmatprep.mubr.bf16.mxu0 %v694
          %1947 = vmatmul.mubr.bf16.gmra.mxu0 %v693
          %v1948 = vpop.f32.mrf.mxu0
          %v1949 = vadd.f32 %v647, %v1948
          %v1950 = vpop.f32.mrf.mxu0
          %v1951 = vadd.f32 %v651, %v1950
          %v1952 = vpop.f32.mrf.mxu0
          %v1953 = vadd.f32 %v647, %v1952
          %v1954 = vpop.f32.mrf.mxu0
          %v1955 = vadd.f32 %v651, %v1954
          %1956 = vmatprep.mubr.bf16.mxu0 %v697
          %1957 = vmatmul.mubr.bf16.gmra.mxu0 %v696
          %v1958 = vpop.f32.mrf.mxu0
          %v1959 = vadd.f32 %v647, %v1958
          %v1960 = vpop.f32.mrf.mxu0
          %v1961 = vadd.f32 %v651, %v1960
          %v1962 = vpop.f32.mrf.mxu0
          %v1963 = vpop.f32.mrf.mxu0
          %1964 = vdwg.mxu0
          %1965 = vmatprep.subr.bf16.mxu0 0
          %1966 = vmatpush1.bf16.msra.mxu0 0
          %1967 = vmatprep.subr.bf16.mxu0 0
          %1968 = vmatpush1.bf16.msra.mxu0 0
          %1969 = vmatprep.subr.bf16.mxu0 0
          %1970 = vmatpush1.bf16.msra.mxu0 0
          %1971 = vmatprep.subr.bf16.mxu0 0
          %1972 = vmatpush1.bf16.msra.mxu0 0
          %1973 = vmatprep.subr.bf16.mxu0 %v1498
          %1974 = vmatpush1.bf16.msra.mxu0 %v1497
          %1975 = vmatprep.subr.bf16.mxu0 %v1488
          %1976 = vmatpush1.bf16.msra.mxu0 %v1487
          %1977 = vmatprep.subr.bf16.mxu0 %v1478
          %1978 = vmatpush1.bf16.msra.mxu0 %v1477
          %1979 = vmatprep.subr.bf16.mxu0 %v1468
          %1980 = vmatpush1.bf16.msra.mxu0 %v1467
          %1981 = vmatprep.subr.bf16.mxu0 0
          %1982 = vmatpush2.bf16.msra.mxu0 0
          %1983 = vmatprep.subr.bf16.mxu0 0
          %1984 = vmatpush2.bf16.msra.mxu0 0
          %1985 = vmatprep.subr.bf16.mxu0 0
          %1986 = vmatpush2.bf16.msra.mxu0 0
          %1987 = vmatprep.subr.bf16.mxu0 0
          %1988 = vmatpush2.bf16.msra.mxu0 0
          %1989 = vmatprep.subr.bf16.mxu0 0
          %1990 = vmatpush2.bf16.msra.mxu0 0
          %1991 = vmatprep.subr.bf16.mxu0 0
          %1992 = vmatpush2.bf16.msra.mxu0 0
          %1993 = vmatprep.subr.bf16.mxu0 0
          %1994 = vmatpush2.bf16.msra.mxu0 0
          %1995 = vmatprep.subr.bf16.mxu0 0
          %1996 = vmatpush2.bf16.msra.mxu0 0
          %1997 = vmatprep.mubr.bf16.mxu0 0
          %1998 = vmatmul.mubr.bf16.gmra.mxu0 %v1705
          %v1999 = vpop.f32.mrf.mxu0
          %v2000 = vadd.f32 %v1949, %v1999
          %v2001 = vpop.f32.mrf.mxu0
          %v2002 = vadd.f32 %v1951, %v2001
          %v2003 = vpop.f32.mrf.mxu0
          %v2004 = vadd.f32 %v1953, %v2003
          %v2005 = vpop.f32.mrf.mxu0
          %v2006 = vadd.f32 %v1955, %v2005
          %2007 = vmatprep.mubr.bf16.mxu0 0
          %2008 = vmatmul.mubr.bf16.gmra.mxu0 %v1708
          %v2009 = vpop.f32.mrf.mxu0
          %v2010 = vadd.f32 %v1959, %v2009
          %v2011 = vpop.f32.mrf.mxu0
          %v2012 = vadd.f32 %v1961, %v2011
          %v2013 = vpop.f32.mrf.mxu0
          %v2014 = vpop.f32.mrf.mxu0
          %2015 = vdwg.mxu0
          %2016 = vmatprep.subr.bf16.mxu0 %v1380
          %2017 = vmatpush1.bf16.msra.mxu0 %v1379
          %2018 = vmatprep.subr.bf16.mxu0 %v1370
          %2019 = vmatpush1.bf16.msra.mxu0 %v1369
          %2020 = vmatprep.subr.bf16.mxu0 %v1360
          %2021 = vmatpush1.bf16.msra.mxu0 %v1359
          %2022 = vmatprep.subr.bf16.mxu0 %v1350
          %2023 = vmatpush1.bf16.msra.mxu0 %v1349
          %2024 = vmatprep.subr.bf16.mxu0 %v1340
          %2025 = vmatpush1.bf16.msra.mxu0 %v1339
          %2026 = vmatprep.subr.bf16.mxu0 %v1330
          %2027 = vmatpush1.bf16.msra.mxu0 %v1329
          %2028 = vmatprep.subr.bf16.mxu0 %v1320
          %2029 = vmatpush1.bf16.msra.mxu0 %v1319
          %2030 = vmatprep.subr.bf16.mxu0 %v1310
          %2031 = vmatpush1.bf16.msra.mxu0 %v1309
          %2032 = vmatprep.subr.bf16.mxu0 %v1460
          %2033 = vmatpush2.bf16.msra.mxu0 %v1459
          %2034 = vmatprep.subr.bf16.mxu0 %v1450
          %2035 = vmatpush2.bf16.msra.mxu0 %v1449
          %2036 = vmatprep.subr.bf16.mxu0 %v1440
          %2037 = vmatpush2.bf16.msra.mxu0 %v1439
          %2038 = vmatprep.subr.bf16.mxu0 %v1430
          %2039 = vmatpush2.bf16.msra.mxu0 %v1429
          %2040 = vmatprep.subr.bf16.mxu0 %v1420
          %2041 = vmatpush2.bf16.msra.mxu0 %v1419
          %2042 = vmatprep.subr.bf16.mxu0 %v1410
          %2043 = vmatpush2.bf16.msra.mxu0 %v1409
          %2044 = vmatprep.subr.bf16.mxu0 %v1400
          %2045 = vmatpush2.bf16.msra.mxu0 %v1399
          %2046 = vmatprep.subr.bf16.mxu0 %v1390
          %2047 = vmatpush2.bf16.msra.mxu0 %v1389
          %2048 = vmatprep.mubr.bf16.mxu0 %v694
          %2049 = vmatmul.mubr.bf16.gmra.mxu0 %v693
          %v2050 = vpop.f32.mrf.mxu0
          %v2051 = vadd.f32 %v655, %v2050
          %v2052 = vpop.f32.mrf.mxu0
          %v2053 = vadd.f32 %v659, %v2052
          %v2054 = vpop.f32.mrf.mxu0
          %v2055 = vadd.f32 %v655, %v2054
          %v2056 = vpop.f32.mrf.mxu0
          %v2057 = vadd.f32 %v659, %v2056
          %2058 = vmatprep.mubr.bf16.mxu0 %v697
          %2059 = vmatmul.mubr.bf16.gmra.mxu0 %v696
          %v2060 = vpop.f32.mrf.mxu0
          %v2061 = vadd.f32 %v655, %v2060
          %v2062 = vpop.f32.mrf.mxu0
          %v2063 = vadd.f32 %v659, %v2062
          %v2064 = vpop.f32.mrf.mxu0
          %v2065 = vpop.f32.mrf.mxu0
          %2066 = vdwg.mxu0
          %2067 = vmatprep.subr.bf16.mxu0 0
          %2068 = vmatpush1.bf16.msra.mxu0 0
          %2069 = vmatprep.subr.bf16.mxu0 0
          %2070 = vmatpush1.bf16.msra.mxu0 0
          %2071 = vmatprep.subr.bf16.mxu0 0
          %2072 = vmatpush1.bf16.msra.mxu0 0
          %2073 = vmatprep.subr.bf16.mxu0 0
          %2074 = vmatpush1.bf16.msra.mxu0 0
          %2075 = vmatprep.subr.bf16.mxu0 %v1500
          %2076 = vmatpush1.bf16.msra.mxu0 %v1499
          %2077 = vmatprep.subr.bf16.mxu0 %v1490
          %2078 = vmatpush1.bf16.msra.mxu0 %v1489
          %2079 = vmatprep.subr.bf16.mxu0 %v1480
          %2080 = vmatpush1.bf16.msra.mxu0 %v1479
          %2081 = vmatprep.subr.bf16.mxu0 %v1470
          %2082 = vmatpush1.bf16.msra.mxu0 %v1469
          %2083 = vmatprep.subr.bf16.mxu0 0
          %2084 = vmatpush2.bf16.msra.mxu0 0
          %2085 = vmatprep.subr.bf16.mxu0 0
          %2086 = vmatpush2.bf16.msra.mxu0 0
          %2087 = vmatprep.subr.bf16.mxu0 0
          %2088 = vmatpush2.bf16.msra.mxu0 0
          %2089 = vmatprep.subr.bf16.mxu0 0
          %2090 = vmatpush2.bf16.msra.mxu0 0
          %2091 = vmatprep.subr.bf16.mxu0 0
          %2092 = vmatpush2.bf16.msra.mxu0 0
          %2093 = vmatprep.subr.bf16.mxu0 0
          %2094 = vmatpush2.bf16.msra.mxu0 0
          %2095 = vmatprep.subr.bf16.mxu0 0
          %2096 = vmatpush2.bf16.msra.mxu0 0
          %2097 = vmatprep.subr.bf16.mxu0 0
          %2098 = vmatpush2.bf16.msra.mxu0 0
          %2099 = vmatprep.mubr.bf16.mxu0 0
          %2100 = vmatmul.mubr.bf16.gmra.mxu0 %v1705
          %v2101 = vpop.f32.mrf.mxu0
          %v2102 = vadd.f32 %v2051, %v2101
          %v2103 = vpop.f32.mrf.mxu0
          %v2104 = vadd.f32 %v2053, %v2103
          %v2105 = vpop.f32.mrf.mxu0
          %v2106 = vadd.f32 %v2055, %v2105
          %v2107 = vpop.f32.mrf.mxu0
          %v2108 = vadd.f32 %v2057, %v2107
          %2109 = vmatprep.mubr.bf16.mxu0 0
          %2110 = vmatmul.mubr.bf16.gmra.mxu0 %v1708
          %v2111 = vpop.f32.mrf.mxu0
          %v2112 = vadd.f32 %v2061, %v2111
          %v2113 = vpop.f32.mrf.mxu0
          %v2114 = vadd.f32 %v2063, %v2113
          %v2115 = vpop.f32.mrf.mxu0
          %v2116 = vpop.f32.mrf.mxu0
          %2117 = vdwg.mxu0
          %2118 = vmatprep.subr.bf16.mxu0 %v1382
          %2119 = vmatpush1.bf16.msra.mxu0 %v1381
          %2120 = vmatprep.subr.bf16.mxu0 %v1372
          %2121 = vmatpush1.bf16.msra.mxu0 %v1371
          %2122 = vmatprep.subr.bf16.mxu0 %v1362
          %2123 = vmatpush1.bf16.msra.mxu0 %v1361
          %2124 = vmatprep.subr.bf16.mxu0 %v1352
          %2125 = vmatpush1.bf16.msra.mxu0 %v1351
          %2126 = vmatprep.subr.bf16.mxu0 %v1342
          %2127 = vmatpush1.bf16.msra.mxu0 %v1341
          %2128 = vmatprep.subr.bf16.mxu0 %v1332
          %2129 = vmatpush1.bf16.msra.mxu0 %v1331
          %2130 = vmatprep.subr.bf16.mxu0 %v1322
          %2131 = vmatpush1.bf16.msra.mxu0 %v1321
          %2132 = vmatprep.subr.bf16.mxu0 %v1312
          %2133 = vmatpush1.bf16.msra.mxu0 %v1311
          %2134 = vmatprep.subr.bf16.mxu0 %v1462
          %2135 = vmatpush2.bf16.msra.mxu0 %v1461
          %2136 = vmatprep.subr.bf16.mxu0 %v1452
          %2137 = vmatpush2.bf16.msra.mxu0 %v1451
          %2138 = vmatprep.subr.bf16.mxu0 %v1442
          %2139 = vmatpush2.bf16.msra.mxu0 %v1441
          %2140 = vmatprep.subr.bf16.mxu0 %v1432
          %2141 = vmatpush2.bf16.msra.mxu0 %v1431
          %2142 = vmatprep.subr.bf16.mxu0 %v1422
          %2143 = vmatpush2.bf16.msra.mxu0 %v1421
          %2144 = vmatprep.subr.bf16.mxu0 %v1412
          %2145 = vmatpush2.bf16.msra.mxu0 %v1411
          %2146 = vmatprep.subr.bf16.mxu0 %v1402
          %2147 = vmatpush2.bf16.msra.mxu0 %v1401
          %2148 = vmatprep.subr.bf16.mxu0 %v1392
          %2149 = vmatpush2.bf16.msra.mxu0 %v1391
          %2150 = vmatprep.mubr.bf16.mxu0 %v694
          %2151 = vmatmul.mubr.bf16.gmra.mxu0 %v693
          %v2152 = vpop.f32.mrf.mxu0
          %v2153 = vadd.f32 %v663, %v2152
          %v2154 = vpop.f32.mrf.mxu0
          %v2155 = vadd.f32 %v667, %v2154
          %v2156 = vpop.f32.mrf.mxu0
          %v2157 = vadd.f32 %v663, %v2156
          %v2158 = vpop.f32.mrf.mxu0
          %v2159 = vadd.f32 %v667, %v2158
          %2160 = vmatprep.mubr.bf16.mxu0 %v697
          %2161 = vmatmul.mubr.bf16.gmra.mxu0 %v696
          %v2162 = vpop.f32.mrf.mxu0
          %v2163 = vadd.f32 %v663, %v2162
          %v2164 = vpop.f32.mrf.mxu0
          %v2165 = vadd.f32 %v667, %v2164
          %v2166 = vpop.f32.mrf.mxu0
          %v2167 = vpop.f32.mrf.mxu0
          %2168 = vdwg.mxu0
          %2169 = vmatprep.subr.bf16.mxu0 0
          %2170 = vmatpush1.bf16.msra.mxu0 0
          %2171 = vmatprep.subr.bf16.mxu0 0
          %2172 = vmatpush1.bf16.msra.mxu0 0
          %2173 = vmatprep.subr.bf16.mxu0 0
          %2174 = vmatpush1.bf16.msra.mxu0 0
          %2175 = vmatprep.subr.bf16.mxu0 0
          %2176 = vmatpush1.bf16.msra.mxu0 0
          %2177 = vmatprep.subr.bf16.mxu0 %v1502
          %2178 = vmatpush1.bf16.msra.mxu0 %v1501
          %2179 = vmatprep.subr.bf16.mxu0 %v1492
          %2180 = vmatpush1.bf16.msra.mxu0 %v1491
          %2181 = vmatprep.subr.bf16.mxu0 %v1482
          %2182 = vmatpush1.bf16.msra.mxu0 %v1481
          %2183 = vmatprep.subr.bf16.mxu0 %v1472
          %2184 = vmatpush1.bf16.msra.mxu0 %v1471
          %2185 = vmatprep.subr.bf16.mxu0 0
          %2186 = vmatpush2.bf16.msra.mxu0 0
          %2187 = vmatprep.subr.bf16.mxu0 0
          %2188 = vmatpush2.bf16.msra.mxu0 0
          %2189 = vmatprep.subr.bf16.mxu0 0
          %2190 = vmatpush2.bf16.msra.mxu0 0
          %2191 = vmatprep.subr.bf16.mxu0 0
          %2192 = vmatpush2.bf16.msra.mxu0 0
          %2193 = vmatprep.subr.bf16.mxu0 0
          %2194 = vmatpush2.bf16.msra.mxu0 0
          %2195 = vmatprep.subr.bf16.mxu0 0
          %2196 = vmatpush2.bf16.msra.mxu0 0
          %2197 = vmatprep.subr.bf16.mxu0 0
          %2198 = vmatpush2.bf16.msra.mxu0 0
          %2199 = vmatprep.subr.bf16.mxu0 0
          %2200 = vmatpush2.bf16.msra.mxu0 0
          %2201 = vmatprep.mubr.bf16.mxu0 0
          %2202 = vmatmul.mubr.bf16.gmra.mxu0 %v1705
          %v2203 = vpop.f32.mrf.mxu0
          %v2204 = vadd.f32 %v2153, %v2203
          %v2205 = vpop.f32.mrf.mxu0
          %v2206 = vadd.f32 %v2155, %v2205
          %v2207 = vpop.f32.mrf.mxu0
          %v2208 = vadd.f32 %v2157, %v2207
          %v2209 = vpop.f32.mrf.mxu0
          %v2210 = vadd.f32 %v2159, %v2209
          %2211 = vmatprep.mubr.bf16.mxu0 0
          %2212 = vmatmul.mubr.bf16.gmra.mxu0 %v1708
          %v2213 = vpop.f32.mrf.mxu0
          %v2214 = vadd.f32 %v2163, %v2213
          %v2215 = vpop.f32.mrf.mxu0
          %v2216 = vadd.f32 %v2165, %v2215
          %v2217 = vpop.f32.mrf.mxu0
          %v2218 = vpop.f32.mrf.mxu0
          %2219 = vdwg.mxu0
          %v2220 = vld [vmem:[#allocation9] sm:$0xff]
          %v2221 = vld [vmem:[#allocation9 + $0x8] sm:$0x3]
          %v2222 = vld [vmem:[#allocation11] sm:$0xff]
          %v2223 = vld [vmem:[#allocation11 + $0x8] sm:$0x3]
          %v2224 = vadd.f32 %v1796, %v1800
          %v2225 = vrot.slane %v2224, 4
          %v2226 = vadd.f32 %v2224, %v2225
          %v2227 = vrot.slane %v2226, 2
          %v2228 = vadd.f32 %v2226, %v2227
          %v2229 = vrot.slane %v2228, 1
          %v2230 = vadd.f32 %v2228, %v2229
          %v2231 = vadd.f32 %v1798, %v1802
          %v2232 = vrot.slane %v2231, 4
          %v2233 = vadd.f32 %v2231, %v2232
          %v2234 = vrot.slane %v2233, 2
          %v2235 = vadd.f32 %v2233, %v2234
          %v2236 = vrot.slane %v2235, 1
          %v2237 = vadd.f32 %v2235, %v2236
          %v2238 = vadd.f32 %v1898, %v1902
          %v2239 = vrot.slane %v2238, 4
          %v2240 = vadd.f32 %v2238, %v2239
          %v2241 = vrot.slane %v2240, 2
          %v2242 = vadd.f32 %v2240, %v2241
          %v2243 = vrot.slane %v2242, 1
          %v2244 = vadd.f32 %v2242, %v2243
          %v2245 = vadd.f32 %v1900, %v1904
          %v2246 = vrot.slane %v2245, 4
          %v2247 = vadd.f32 %v2245, %v2246
          %v2248 = vrot.slane %v2247, 2
          %v2249 = vadd.f32 %v2247, %v2248
          %v2250 = vrot.slane %v2249, 1
          %v2251 = vadd.f32 %v2249, %v2250
          %v2252 = vadd.f32 %v2000, %v2004
          %v2253 = vrot.slane %v2252, 4
          %v2254 = vadd.f32 %v2252, %v2253
          %v2255 = vrot.slane %v2254, 2
          %v2256 = vadd.f32 %v2254, %v2255
          %v2257 = vrot.slane %v2256, 1
          %v2258 = vadd.f32 %v2256, %v2257
          %v2259 = vadd.f32 %v2002, %v2006
          %v2260 = vrot.slane %v2259, 4
          %v2261 = vadd.f32 %v2259, %v2260
          %v2262 = vrot.slane %v2261, 2
          %v2263 = vadd.f32 %v2261, %v2262
          %v2264 = vrot.slane %v2263, 1
          %v2265 = vadd.f32 %v2263, %v2264
          %v2266 = vadd.f32 %v2102, %v2106
          %v2267 = vrot.slane %v2266, 4
          %v2268 = vadd.f32 %v2266, %v2267
          %v2269 = vrot.slane %v2268, 2
          %v2270 = vadd.f32 %v2268, %v2269
          %v2271 = vrot.slane %v2270, 1
          %v2272 = vadd.f32 %v2270, %v2271
          %v2273 = vadd.f32 %v2104, %v2108
          %v2274 = vrot.slane %v2273, 4
          %v2275 = vadd.f32 %v2273, %v2274
          %v2276 = vrot.slane %v2275, 2
          %v2277 = vadd.f32 %v2275, %v2276
          %v2278 = vrot.slane %v2277, 1
          %v2279 = vadd.f32 %v2277, %v2278
          %v2280 = vadd.f32 %v2204, %v2208
          %v2281 = vrot.slane %v2280, 4
          %v2282 = vadd.f32 %v2280, %v2281
          %v2283 = vrot.slane %v2282, 2
          %v2284 = vadd.f32 %v2282, %v2283
          %v2285 = vrot.slane %v2284, 1
          %v2286 = vadd.f32 %v2284, %v2285
          %v2287 = vadd.f32 %v2206, %v2210
          %v2288 = vrot.slane %v2287, 4
          %v2289 = vadd.f32 %v2287, %v2288
          %v2290 = vrot.slane %v2289, 2
          %v2291 = vadd.f32 %v2289, %v2290
          %v2292 = vrot.slane %v2291, 1
          %v2293 = vadd.f32 %v2291, %v2292
          %v2294 = vrcp.pop 16.0
          %v2295 = vmul.f32 %v2230, %v2294
          %v2296 = vmul.f32 %v2237, %v2294
          %v2297 = vmul.f32 %v2244, %v2294
          %v2298 = vmul.f32 %v2251, %v2294
          %v2299 = vmul.f32 %v2258, %v2294
          %v2300 = vmul.f32 %v2265, %v2294
          %v2301 = vmul.f32 %v2272, %v2294
          %v2302 = vmul.f32 %v2279, %v2294
          %v2303 = vmul.f32 %v2286, %v2294
          %v2304 = vmul.f32 %v2293, %v2294
          %v2305 = vsub.f32 %v1796, %v2295
          %v2306 = vsub.f32 %v1798, %v2296
          %v2307 = vsub.f32 %v1898, %v2297
          %v2308 = vsub.f32 %v1900, %v2298
          %v2309 = vsub.f32 %v2000, %v2299
          %v2310 = vsub.f32 %v2002, %v2300
          %v2311 = vsub.f32 %v2102, %v2301
          %v2312 = vsub.f32 %v2104, %v2302
          %v2313 = vsub.f32 %v2204, %v2303
          %v2314 = vsub.f32 %v2206, %v2304
          %v2315 = vsub.f32 %v1800, %v2295
          %v2316 = vsub.f32 %v1802, %v2296
          %v2317 = vsub.f32 %v1902, %v2297
          %v2318 = vsub.f32 %v1904, %v2298
          %v2319 = vsub.f32 %v2004, %v2299
          %v2320 = vsub.f32 %v2006, %v2300
          %v2321 = vsub.f32 %v2106, %v2301
          %v2322 = vsub.f32 %v2108, %v2302
          %v2323 = vsub.f32 %v2208, %v2303
          %v2324 = vsub.f32 %v2210, %v2304
          %v2325 = vmul.f32 %v2305, %v2305
          %v2326 = vmul.f32 %v2306, %v2306
          %v2327 = vmul.f32 %v2307, %v2307
          %v2328 = vmul.f32 %v2308, %v2308
          %v2329 = vmul.f32 %v2309, %v2309
          %v2330 = vmul.f32 %v2310, %v2310
          %v2331 = vmul.f32 %v2311, %v2311
          %v2332 = vmul.f32 %v2312, %v2312
          %v2333 = vmul.f32 %v2313, %v2313
          %v2334 = vmul.f32 %v2314, %v2314
          %v2335 = vmul.f32 %v2315, %v2315
          %v2336 = vmul.f32 %v2316, %v2316
          %v2337 = vmul.f32 %v2317, %v2317
          %v2338 = vmul.f32 %v2318, %v2318
          %v2339 = vmul.f32 %v2319, %v2319
          %v2340 = vmul.f32 %v2320, %v2320
          %v2341 = vmul.f32 %v2321, %v2321
          %v2342 = vmul.f32 %v2322, %v2322
          %v2343 = vmul.f32 %v2323, %v2323
          %v2344 = vmul.f32 %v2324, %v2324
          %v2345 = vadd.f32 %v2325, %v2335
          %v2346 = vrot.slane %v2345, 4
          %v2347 = vadd.f32 %v2345, %v2346
          %v2348 = vrot.slane %v2347, 2
          %v2349 = vadd.f32 %v2347, %v2348
          %v2350 = vrot.slane %v2349, 1
          %v2351 = vadd.f32 %v2349, %v2350
          %v2352 = vadd.f32 %v2326, %v2336
          %v2353 = vrot.slane %v2352, 4
          %v2354 = vadd.f32 %v2352, %v2353
          %v2355 = vrot.slane %v2354, 2
          %v2356 = vadd.f32 %v2354, %v2355
          %v2357 = vrot.slane %v2356, 1
          %v2358 = vadd.f32 %v2356, %v2357
          %v2359 = vadd.f32 %v2327, %v2337
          %v2360 = vrot.slane %v2359, 4
          %v2361 = vadd.f32 %v2359, %v2360
          %v2362 = vrot.slane %v2361, 2
          %v2363 = vadd.f32 %v2361, %v2362
          %v2364 = vrot.slane %v2363, 1
          %v2365 = vadd.f32 %v2363, %v2364
          %v2366 = vadd.f32 %v2328, %v2338
          %v2367 = vrot.slane %v2366, 4
          %v2368 = vadd.f32 %v2366, %v2367
          %v2369 = vrot.slane %v2368, 2
          %v2370 = vadd.f32 %v2368, %v2369
          %v2371 = vrot.slane %v2370, 1
          %v2372 = vadd.f32 %v2370, %v2371
          %v2373 = vadd.f32 %v2329, %v2339
          %v2374 = vrot.slane %v2373, 4
          %v2375 = vadd.f32 %v2373, %v2374
          %v2376 = vrot.slane %v2375, 2
          %v2377 = vadd.f32 %v2375, %v2376
          %v2378 = vrot.slane %v2377, 1
          %v2379 = vadd.f32 %v2377, %v2378
          %v2380 = vadd.f32 %v2330, %v2340
          %v2381 = vrot.slane %v2380, 4
          %v2382 = vadd.f32 %v2380, %v2381
          %v2383 = vrot.slane %v2382, 2
          %v2384 = vadd.f32 %v2382, %v2383
          %v2385 = vrot.slane %v2384, 1
          %v2386 = vadd.f32 %v2384, %v2385
          %v2387 = vadd.f32 %v2331, %v2341
          %v2388 = vrot.slane %v2387, 4
          %v2389 = vadd.f32 %v2387, %v2388
          %v2390 = vrot.slane %v2389, 2
          %v2391 = vadd.f32 %v2389, %v2390
          %v2392 = vrot.slane %v2391, 1
          %v2393 = vadd.f32 %v2391, %v2392
          %v2394 = vadd.f32 %v2332, %v2342
          %v2395 = vrot.slane %v2394, 4
          %v2396 = vadd.f32 %v2394, %v2395
          %v2397 = vrot.slane %v2396, 2
          %v2398 = vadd.f32 %v2396, %v2397
          %v2399 = vrot.slane %v2398, 1
          %v2400 = vadd.f32 %v2398, %v2399
          %v2401 = vadd.f32 %v2333, %v2343
          %v2402 = vrot.slane %v2401, 4
          %v2403 = vadd.f32 %v2401, %v2402
          %v2404 = vrot.slane %v2403, 2
          %v2405 = vadd.f32 %v2403, %v2404
          %v2406 = vrot.slane %v2405, 1
          %v2407 = vadd.f32 %v2405, %v2406
          %v2408 = vadd.f32 %v2334, %v2344
          %v2409 = vrot.slane %v2408, 4
          %v2410 = vadd.f32 %v2408, %v2409
          %v2411 = vrot.slane %v2410, 2
          %v2412 = vadd.f32 %v2410, %v2411
          %v2413 = vrot.slane %v2412, 1
          %v2414 = vadd.f32 %v2412, %v2413
          %v2415 = vmul.f32 %v2351, %v2294
          %v2416 = vmul.f32 %v2358, %v2294
          %v2417 = vmul.f32 %v2365, %v2294
          %v2418 = vmul.f32 %v2372, %v2294
          %v2419 = vmul.f32 %v2379, %v2294
          %v2420 = vmul.f32 %v2386, %v2294
          %v2421 = vmul.f32 %v2393, %v2294
          %v2422 = vmul.f32 %v2400, %v2294
          %v2423 = vmul.f32 %v2407, %v2294
          %v2424 = vmul.f32 %v2414, %v2294
          %v2425 = vadd.f32 %v2415, 1e-05
          %v2426 = vadd.f32 %v2416, 1e-05
          %v2427 = vadd.f32 %v2417, 1e-05
          %v2428 = vadd.f32 %v2418, 1e-05
          %v2429 = vadd.f32 %v2419, 1e-05
          %v2430 = vadd.f32 %v2420, 1e-05
          %v2431 = vadd.f32 %v2421, 1e-05
          %v2432 = vadd.f32 %v2422, 1e-05
          %v2433 = vadd.f32 %v2423, 1e-05
          %v2434 = vadd.f32 %v2424, 1e-05
          %v2435 = vrsqrt.pop %v2425
          %v2436 = vrsqrt.pop %v2426
          %v2437 = vrsqrt.pop %v2427
          %v2438 = vrsqrt.pop %v2428
          %v2439 = vrsqrt.pop %v2429
          %v2440 = vrsqrt.pop %v2430
          %v2441 = vrsqrt.pop %v2431
          %v2442 = vrsqrt.pop %v2432
          %v2443 = vrsqrt.pop %v2433
          %v2444 = vrsqrt.pop %v2434
          %v2445 = vmul.f32 %v2305, %v2435
          %v2446 = vmul.f32 %v2306, %v2436
          %v2447 = vmul.f32 %v2307, %v2437
          %v2448 = vmul.f32 %v2308, %v2438
          %v2449 = vmul.f32 %v2309, %v2439
          %v2450 = vmul.f32 %v2310, %v2440
          %v2451 = vmul.f32 %v2311, %v2441
          %v2452 = vmul.f32 %v2312, %v2442
          %v2453 = vmul.f32 %v2313, %v2443
          %v2454 = vmul.f32 %v2314, %v2444
          %v2455 = vmul.f32 %v2315, %v2435
          %v2456 = vmul.f32 %v2316, %v2436
          %v2457 = vmul.f32 %v2317, %v2437
          %v2458 = vmul.f32 %v2318, %v2438
          %v2459 = vmul.f32 %v2319, %v2439
          %v2460 = vmul.f32 %v2320, %v2440
          %v2461 = vmul.f32 %v2321, %v2441
          %v2462 = vmul.f32 %v2322, %v2442
          %v2463 = vmul.f32 %v2323, %v2443
          %v2464 = vmul.f32 %v2324, %v2444
          %v2467 = vlaneseq
          %v2468 = vshrl.u32 %v2467, 7
          %v2469 = vsub.s32 0, %v2468
          %v2470 = vrot.slane %v2220, %v2469
          %v2471 = vlaneseq
          %v2472 = vshrl.u32 %v2471, 7
          %v2473 = vsub.s32 1, %v2472
          %v2474 = vrot.slane %v2220, %v2473
          %v2475 = vlaneseq
          %v2476 = vshrl.u32 %v2475, 7
          %v2477 = vsub.s32 2, %v2476
          %v2478 = vrot.slane %v2220, %v2477
          %v2479 = vlaneseq
          %v2480 = vshrl.u32 %v2479, 7
          %v2481 = vsub.s32 3, %v2480
          %v2482 = vrot.slane %v2220, %v2481
          %v2483 = vlaneseq
          %v2484 = vshrl.u32 %v2483, 7
          %v2485 = vsub.s32 4, %v2484
          %v2486 = vrot.slane %v2220, %v2485
          %v2487 = vlaneseq
          %v2488 = vshrl.u32 %v2487, 7
          %v2489 = vsub.s32 5, %v2488
          %v2490 = vrot.slane %v2220, %v2489
          %v2491 = vlaneseq
          %v2492 = vshrl.u32 %v2491, 7
          %v2493 = vsub.s32 6, %v2492
          %v2494 = vrot.slane %v2220, %v2493
          %v2495 = vlaneseq
          %v2496 = vshrl.u32 %v2495, 7
          %v2497 = vsub.s32 7, %v2496
          %v2498 = vrot.slane %v2220, %v2497
          %v2499 = vlaneseq
          %v2500 = vshrl.u32 %v2499, 7
          %v2501 = vsub.s32 0, %v2500
          %v2502 = vrot.slane %v2221, %v2501
          %v2503 = vlaneseq
          %v2504 = vshrl.u32 %v2503, 7
          %v2505 = vsub.s32 1, %v2504
          %v2506 = vrot.slane %v2221, %v2505
          %v2517 = vmul.f32 %v2445, %v2470
          %v2518 = vmul.f32 %v2446, %v2474
          %v2519 = vmul.f32 %v2447, %v2478
          %v2520 = vmul.f32 %v2448, %v2482
          %v2521 = vmul.f32 %v2449, %v2486
          %v2522 = vmul.f32 %v2450, %v2490
          %v2523 = vmul.f32 %v2451, %v2494
          %v2524 = vmul.f32 %v2452, %v2498
          %v2525 = vmul.f32 %v2453, %v2502
          %v2526 = vmul.f32 %v2454, %v2506
          %v2527 = vmul.f32 %v2455, %v2470
          %v2528 = vmul.f32 %v2456, %v2474
          %v2529 = vmul.f32 %v2457, %v2478
          %v2530 = vmul.f32 %v2458, %v2482
          %v2531 = vmul.f32 %v2459, %v2486
          %v2532 = vmul.f32 %v2460, %v2490
          %v2533 = vmul.f32 %v2461, %v2494
          %v2534 = vmul.f32 %v2462, %v2498
          %v2535 = vmul.f32 %v2463, %v2502
          %v2536 = vmul.f32 %v2464, %v2506
          %v2539 = vlaneseq
          %v2540 = vshrl.u32 %v2539, 7
          %v2541 = vsub.s32 0, %v2540
          %v2542 = vrot.slane %v2222, %v2541
          %v2543 = vlaneseq
          %v2544 = vshrl.u32 %v2543, 7
          %v2545 = vsub.s32 1, %v2544
          %v2546 = vrot.slane %v2222, %v2545
          %v2547 = vlaneseq
          %v2548 = vshrl.u32 %v2547, 7
          %v2549 = vsub.s32 2, %v2548
          %v2550 = vrot.slane %v2222, %v2549
          %v2551 = vlaneseq
          %v2552 = vshrl.u32 %v2551, 7
          %v2553 = vsub.s32 3, %v2552
          %v2554 = vrot.slane %v2222, %v2553
          %v2555 = vlaneseq
          %v2556 = vshrl.u32 %v2555, 7
          %v2557 = vsub.s32 4, %v2556
          %v2558 = vrot.slane %v2222, %v2557
          %v2559 = vlaneseq
          %v2560 = vshrl.u32 %v2559, 7
          %v2561 = vsub.s32 5, %v2560
          %v2562 = vrot.slane %v2222, %v2561
          %v2563 = vlaneseq
          %v2564 = vshrl.u32 %v2563, 7
          %v2565 = vsub.s32 6, %v2564
          %v2566 = vrot.slane %v2222, %v2565
          %v2567 = vlaneseq
          %v2568 = vshrl.u32 %v2567, 7
          %v2569 = vsub.s32 7, %v2568
          %v2570 = vrot.slane %v2222, %v2569
          %v2571 = vlaneseq
          %v2572 = vshrl.u32 %v2571, 7
          %v2573 = vsub.s32 0, %v2572
          %v2574 = vrot.slane %v2223, %v2573
          %v2575 = vlaneseq
          %v2576 = vshrl.u32 %v2575, 7
          %v2577 = vsub.s32 1, %v2576
          %v2578 = vrot.slane %v2223, %v2577
          %v2589 = vadd.f32 %v2517, %v2542
          %v2590 = vadd.f32 %v2518, %v2546
          %v2591 = vadd.f32 %v2519, %v2550
          %v2592 = vadd.f32 %v2520, %v2554
          %v2593 = vadd.f32 %v2521, %v2558
          %v2594 = vadd.f32 %v2522, %v2562
          %v2595 = vadd.f32 %v2523, %v2566
          %v2596 = vadd.f32 %v2524, %v2570
          %v2597 = vadd.f32 %v2525, %v2574
          %v2598 = vadd.f32 %v2526, %v2578
          %v2599 = vadd.f32 %v2527, %v2542
          %v2600 = vadd.f32 %v2528, %v2546
          %v2601 = vadd.f32 %v2529, %v2550
          %v2602 = vadd.f32 %v2530, %v2554
          %v2603 = vadd.f32 %v2531, %v2558
          %v2604 = vadd.f32 %v2532, %v2562
          %v2605 = vadd.f32 %v2533, %v2566
          %v2606 = vadd.f32 %v2534, %v2570
          %v2607 = vadd.f32 %v2535, %v2574
          %v2608 = vadd.f32 %v2536, %v2578
          %v2609 = vrot.slane %v1806, 4
          %v2610 = vadd.f32 %v1806, %v2609
          %v2611 = vrot.slane %v2610, 2
          %v2612 = vadd.f32 %v2610, %v2611
          %v2613 = vrot.slane %v2612, 1
          %v2614 = vadd.f32 %v2612, %v2613
          %v2615 = vrot.slane %v1808, 4
          %v2616 = vadd.f32 %v1808, %v2615
          %v2617 = vrot.slane %v2616, 2
          %v2618 = vadd.f32 %v2616, %v2617
          %v2619 = vrot.slane %v2618, 1
          %v2620 = vadd.f32 %v2618, %v2619
          %v2621 = vrot.slane %v1908, 4
          %v2622 = vadd.f32 %v1908, %v2621
          %v2623 = vrot.slane %v2622, 2
          %v2624 = vadd.f32 %v2622, %v2623
          %v2625 = vrot.slane %v2624, 1
          %v2626 = vadd.f32 %v2624, %v2625
          %v2627 = vrot.slane %v1910, 4
          %v2628 = vadd.f32 %v1910, %v2627
          %v2629 = vrot.slane %v2628, 2
          %v2630 = vadd.f32 %v2628, %v2629
          %v2631 = vrot.slane %v2630, 1
          %v2632 = vadd.f32 %v2630, %v2631
          %v2633 = vrot.slane %v2010, 4
          %v2634 = vadd.f32 %v2010, %v2633
          %v2635 = vrot.slane %v2634, 2
          %v2636 = vadd.f32 %v2634, %v2635
          %v2637 = vrot.slane %v2636, 1
          %v2638 = vadd.f32 %v2636, %v2637
          %v2639 = vrot.slane %v2012, 4
          %v2640 = vadd.f32 %v2012, %v2639
          %v2641 = vrot.slane %v2640, 2
          %v2642 = vadd.f32 %v2640, %v2641
          %v2643 = vrot.slane %v2642, 1
          %v2644 = vadd.f32 %v2642, %v2643
          %v2645 = vrot.slane %v2112, 4
          %v2646 = vadd.f32 %v2112, %v2645
          %v2647 = vrot.slane %v2646, 2
          %v2648 = vadd.f32 %v2646, %v2647
          %v2649 = vrot.slane %v2648, 1
          %v2650 = vadd.f32 %v2648, %v2649
          %v2651 = vrot.slane %v2114, 4
          %v2652 = vadd.f32 %v2114, %v2651
          %v2653 = vrot.slane %v2652, 2
          %v2654 = vadd.f32 %v2652, %v2653
          %v2655 = vrot.slane %v2654, 1
          %v2656 = vadd.f32 %v2654, %v2655
          %v2657 = vrot.slane %v2214, 4
          %v2658 = vadd.f32 %v2214, %v2657
          %v2659 = vrot.slane %v2658, 2
          %v2660 = vadd.f32 %v2658, %v2659
          %v2661 = vrot.slane %v2660, 1
          %v2662 = vadd.f32 %v2660, %v2661
          %v2663 = vrot.slane %v2216, 4
          %v2664 = vadd.f32 %v2216, %v2663
          %v2665 = vrot.slane %v2664, 2
          %v2666 = vadd.f32 %v2664, %v2665
          %v2667 = vrot.slane %v2666, 1
          %v2668 = vadd.f32 %v2666, %v2667
          %v2669 = vrcp.pop 8.0
          %v2670 = vmul.f32 %v2614, %v2669
          %v2671 = vmul.f32 %v2620, %v2669
          %v2672 = vmul.f32 %v2626, %v2669
          %v2673 = vmul.f32 %v2632, %v2669
          %v2674 = vmul.f32 %v2638, %v2669
          %v2675 = vmul.f32 %v2644, %v2669
          %v2676 = vmul.f32 %v2650, %v2669
          %v2677 = vmul.f32 %v2656, %v2669
          %v2678 = vmul.f32 %v2662, %v2669
          %v2679 = vmul.f32 %v2668, %v2669
          %v2680 = vsub.f32 %v1806, %v2670
          %v2681 = vsub.f32 %v1808, %v2671
          %v2682 = vsub.f32 %v1908, %v2672
          %v2683 = vsub.f32 %v1910, %v2673
          %v2684 = vsub.f32 %v2010, %v2674
          %v2685 = vsub.f32 %v2012, %v2675
          %v2686 = vsub.f32 %v2112, %v2676
          %v2687 = vsub.f32 %v2114, %v2677
          %v2688 = vsub.f32 %v2214, %v2678
          %v2689 = vsub.f32 %v2216, %v2679
          %v2690 = vmul.f32 %v2680, %v2680
          %v2691 = vmul.f32 %v2681, %v2681
          %v2692 = vmul.f32 %v2682, %v2682
          %v2693 = vmul.f32 %v2683, %v2683
          %v2694 = vmul.f32 %v2684, %v2684
          %v2695 = vmul.f32 %v2685, %v2685
          %v2696 = vmul.f32 %v2686, %v2686
          %v2697 = vmul.f32 %v2687, %v2687
          %v2698 = vmul.f32 %v2688, %v2688
          %v2699 = vmul.f32 %v2689, %v2689
          %v2700 = vrot.slane %v2690, 4
          %v2701 = vadd.f32 %v2690, %v2700
          %v2702 = vrot.slane %v2701, 2
          %v2703 = vadd.f32 %v2701, %v2702
          %v2704 = vrot.slane %v2703, 1
          %v2705 = vadd.f32 %v2703, %v2704
          %v2706 = vrot.slane %v2691, 4
          %v2707 = vadd.f32 %v2691, %v2706
          %v2708 = vrot.slane %v2707, 2
          %v2709 = vadd.f32 %v2707, %v2708
          %v2710 = vrot.slane %v2709, 1
          %v2711 = vadd.f32 %v2709, %v2710
          %v2712 = vrot.slane %v2692, 4
          %v2713 = vadd.f32 %v2692, %v2712
          %v2714 = vrot.slane %v2713, 2
          %v2715 = vadd.f32 %v2713, %v2714
          %v2716 = vrot.slane %v2715, 1
          %v2717 = vadd.f32 %v2715, %v2716
          %v2718 = vrot.slane %v2693, 4
          %v2719 = vadd.f32 %v2693, %v2718
          %v2720 = vrot.slane %v2719, 2
          %v2721 = vadd.f32 %v2719, %v2720
          %v2722 = vrot.slane %v2721, 1
          %v2723 = vadd.f32 %v2721, %v2722
          %v2724 = vrot.slane %v2694, 4
          %v2725 = vadd.f32 %v2694, %v2724
          %v2726 = vrot.slane %v2725, 2
          %v2727 = vadd.f32 %v2725, %v2726
          %v2728 = vrot.slane %v2727, 1
          %v2729 = vadd.f32 %v2727, %v2728
          %v2730 = vrot.slane %v2695, 4
          %v2731 = vadd.f32 %v2695, %v2730
          %v2732 = vrot.slane %v2731, 2
          %v2733 = vadd.f32 %v2731, %v2732
          %v2734 = vrot.slane %v2733, 1
          %v2735 = vadd.f32 %v2733, %v2734
          %v2736 = vrot.slane %v2696, 4
          %v2737 = vadd.f32 %v2696, %v2736
          %v2738 = vrot.slane %v2737, 2
          %v2739 = vadd.f32 %v2737, %v2738
          %v2740 = vrot.slane %v2739, 1
          %v2741 = vadd.f32 %v2739, %v2740
          %v2742 = vrot.slane %v2697, 4
          %v2743 = vadd.f32 %v2697, %v2742
          %v2744 = vrot.slane %v2743, 2
          %v2745 = vadd.f32 %v2743, %v2744
          %v2746 = vrot.slane %v2745, 1
          %v2747 = vadd.f32 %v2745, %v2746
          %v2748 = vrot.slane %v2698, 4
          %v2749 = vadd.f32 %v2698, %v2748
          %v2750 = vrot.slane %v2749, 2
          %v2751 = vadd.f32 %v2749, %v2750
          %v2752 = vrot.slane %v2751, 1
          %v2753 = vadd.f32 %v2751, %v2752
          %v2754 = vrot.slane %v2699, 4
          %v2755 = vadd.f32 %v2699, %v2754
          %v2756 = vrot.slane %v2755, 2
          %v2757 = vadd.f32 %v2755, %v2756
          %v2758 = vrot.slane %v2757, 1
          %v2759 = vadd.f32 %v2757, %v2758
          %v2760 = vmul.f32 %v2705, %v2669
          %v2761 = vmul.f32 %v2711, %v2669
          %v2762 = vmul.f32 %v2717, %v2669
          %v2763 = vmul.f32 %v2723, %v2669
          %v2764 = vmul.f32 %v2729, %v2669
          %v2765 = vmul.f32 %v2735, %v2669
          %v2766 = vmul.f32 %v2741, %v2669
          %v2767 = vmul.f32 %v2747, %v2669
          %v2768 = vmul.f32 %v2753, %v2669
          %v2769 = vmul.f32 %v2759, %v2669
          %v2770 = vadd.f32 %v2760, 1e-05
          %v2771 = vadd.f32 %v2761, 1e-05
          %v2772 = vadd.f32 %v2762, 1e-05
          %v2773 = vadd.f32 %v2763, 1e-05
          %v2774 = vadd.f32 %v2764, 1e-05
          %v2775 = vadd.f32 %v2765, 1e-05
          %v2776 = vadd.f32 %v2766, 1e-05
          %v2777 = vadd.f32 %v2767, 1e-05
          %v2778 = vadd.f32 %v2768, 1e-05
          %v2779 = vadd.f32 %v2769, 1e-05
          %v2780 = vrsqrt.pop %v2770
          %v2781 = vrsqrt.pop %v2771
          %v2782 = vrsqrt.pop %v2772
          %v2783 = vrsqrt.pop %v2773
          %v2784 = vrsqrt.pop %v2774
          %v2785 = vrsqrt.pop %v2775
          %v2786 = vrsqrt.pop %v2776
          %v2787 = vrsqrt.pop %v2777
          %v2788 = vrsqrt.pop %v2778
          %v2789 = vrsqrt.pop %v2779
          %v2790 = vmul.f32 %v2680, %v2780
          %v2791 = vmul.f32 %v2681, %v2781
          %v2792 = vmul.f32 %v2682, %v2782
          %v2793 = vmul.f32 %v2683, %v2783
          %v2794 = vmul.f32 %v2684, %v2784
          %v2795 = vmul.f32 %v2685, %v2785
          %v2796 = vmul.f32 %v2686, %v2786
          %v2797 = vmul.f32 %v2687, %v2787
          %v2798 = vmul.f32 %v2688, %v2788
          %v2799 = vmul.f32 %v2689, %v2789
          %v2800 = vmul.f32 %v2790, %v2470
          %v2801 = vmul.f32 %v2791, %v2474
          %v2802 = vmul.f32 %v2792, %v2478
          %v2803 = vmul.f32 %v2793, %v2482
          %v2804 = vmul.f32 %v2794, %v2486
          %v2805 = vmul.f32 %v2795, %v2490
          %v2806 = vmul.f32 %v2796, %v2494
          %v2807 = vmul.f32 %v2797, %v2498
          %v2808 = vmul.f32 %v2798, %v2502
          %v2809 = vmul.f32 %v2799, %v2506
          %v2810 = vadd.f32 %v2800, %v2542
          %v2811 = vadd.f32 %v2801, %v2546
          %v2812 = vadd.f32 %v2802, %v2550
          %v2813 = vadd.f32 %v2803, %v2554
          %v2814 = vadd.f32 %v2804, %v2558
          %v2815 = vadd.f32 %v2805, %v2562
          %v2816 = vadd.f32 %v2806, %v2566
          %v2817 = vadd.f32 %v2807, %v2570
          %v2818 = vadd.f32 %v2808, %v2574
          %v2819 = vadd.f32 %v2809, %v2578
          %v2820 = vmax.f32 %v2589, 0.0
          %v2821 = vmax.f32 %v2590, 0.0
          %v2822 = vmax.f32 %v2591, 0.0
          %v2823 = vmax.f32 %v2592, 0.0
          %v2824 = vmax.f32 %v2593, 0.0
          %v2825 = vmax.f32 %v2594, 0.0
          %v2826 = vmax.f32 %v2595, 0.0
          %v2827 = vmax.f32 %v2596, 0.0
          %v2828 = vmax.f32 %v2597, 0.0
          %v2829 = vmax.f32 %v2598, 0.0
          %v2830 = vmax.f32 %v2599, 0.0
          %v2831 = vmax.f32 %v2600, 0.0
          %v2832 = vmax.f32 %v2601, 0.0
          %v2833 = vmax.f32 %v2602, 0.0
          %v2834 = vmax.f32 %v2603, 0.0
          %v2835 = vmax.f32 %v2604, 0.0
          %v2836 = vmax.f32 %v2605, 0.0
          %v2837 = vmax.f32 %v2606, 0.0
          %v2838 = vmax.f32 %v2607, 0.0
          %v2839 = vmax.f32 %v2608, 0.0
          %v2840 = vmax.f32 %v2810, 0.0
          %v2841 = vmax.f32 %v2811, 0.0
          %v2842 = vmax.f32 %v2812, 0.0
          %v2843 = vmax.f32 %v2813, 0.0
          %v2844 = vmax.f32 %v2814, 0.0
          %v2845 = vmax.f32 %v2815, 0.0
          %v2846 = vmax.f32 %v2816, 0.0
          %v2847 = vmax.f32 %v2817, 0.0
          %v2848 = vmax.f32 %v2818, 0.0
          %v2849 = vmax.f32 %v2819, 0.0
          %v2850 = vpack.c.bf16 %v2830, %v2820
          %v2851 = vpack.c.bf16 %v2831, %v2821
          %v2852 = vpack.c.bf16 %v2832, %v2822
          %v2853 = vpack.c.bf16 %v2833, %v2823
          %v2854 = vpack.c.bf16 %v2834, %v2824
          %v2855 = vpack.c.bf16 %v2835, %v2825
          %v2856 = vpack.c.bf16 %v2836, %v2826
          %v2857 = vpack.c.bf16 %v2837, %v2827
          %v2858 = vpack.c.bf16 %v2838, %v2828
          %v2859 = vpack.c.bf16 %v2839, %v2829
          %v2860 = vpack.c.bf16 %v2840, %v2840
          %v2861 = vpack.c.bf16 %v2841, %v2841
          %v2862 = vpack.c.bf16 %v2842, %v2842
          %v2863 = vpack.c.bf16 %v2843, %v2843
          %v2864 = vpack.c.bf16 %v2844, %v2844
          %v2865 = vpack.c.bf16 %v2845, %v2845
          %v2866 = vpack.c.bf16 %v2846, %v2846
          %v2867 = vpack.c.bf16 %v2847, %v2847
          %v2868 = vpack.c.bf16 %v2848, %v2848
          %v2869 = vpack.c.bf16 %v2849, %v2849
          %v2890 = vunpack.c.l.b16 %v2850
          %v2891 = vunpack.c.l.b16 %v2851
          %v2892 = vunpack.c.l.b16 %v2852
          %v2893 = vunpack.c.l.b16 %v2853
          %v2894 = vunpack.c.l.b16 %v2854
          %v2895 = vunpack.c.l.b16 %v2855
          %v2896 = vunpack.c.l.b16 %v2856
          %v2897 = vunpack.c.l.b16 %v2857
          %v2898 = vunpack.c.l.b16 %v2858
          %v2899 = vunpack.c.l.b16 %v2859
          %v2900 = vunpack.c.h.b16 %v2850
          %v2901 = vunpack.c.h.b16 %v2851
          %v2902 = vunpack.c.h.b16 %v2852
          %v2903 = vunpack.c.h.b16 %v2853
          %v2904 = vunpack.c.h.b16 %v2854
          %v2905 = vunpack.c.h.b16 %v2855
          %v2906 = vunpack.c.h.b16 %v2856
          %v2907 = vunpack.c.h.b16 %v2857
          %v2908 = vunpack.c.h.b16 %v2858
          %v2909 = vunpack.c.h.b16 %v2859
          %v2910 = vunpack.c.l.b16 %v2860
          %v2911 = vunpack.c.l.b16 %v2861
          %v2912 = vunpack.c.l.b16 %v2862
          %v2913 = vunpack.c.l.b16 %v2863
          %v2914 = vunpack.c.l.b16 %v2864
          %v2915 = vunpack.c.l.b16 %v2865
          %v2916 = vunpack.c.l.b16 %v2866
          %v2917 = vunpack.c.l.b16 %v2867
          %v2918 = vunpack.c.l.b16 %v2868
          %v2919 = vunpack.c.l.b16 %v2869
          %v2920 = vpack.c.b16 %v2891, %v2890
          %v2921 = vpack.c.b16 %v2893, %v2892
          %v2922 = vpack.c.b16 %v2895, %v2894
          %v2923 = vpack.c.b16 %v2897, %v2896
          %v2924 = vpack.c.b16 %v2899, %v2898
          %v2925 = vpack.c.b16 %v2901, %v2900
          %v2926 = vpack.c.b16 %v2903, %v2902
          %v2927 = vpack.c.b16 %v2905, %v2904
          %v2928 = vpack.c.b16 %v2907, %v2906
          %v2929 = vpack.c.b16 %v2909, %v2908
          %v2930 = vpack.c.b16 %v2911, %v2910
          %v2931 = vpack.c.b16 %v2913, %v2912
          %v2932 = vpack.c.b16 %v2915, %v2914
          %v2933 = vpack.c.b16 %v2917, %v2916
          %v2934 = vpack.c.b16 %v2919, %v2918
          %2950 = vst [vmem:[#allocation2] sm:$0xff] %v2920
          %2951 = vst [vmem:[#allocation2 + $0x8] sm:$0xff] %v2921
          %2952 = vst [vmem:[#allocation2 + $0x10] sm:$0xff] %v2922
          %2953 = vst [vmem:[#allocation2 + $0x18] sm:$0xff] %v2923
          %2954 = vst [vmem:[#allocation2 + $0x20] sm:$0xff] %v2924
          %2955 = vst [vmem:[#allocation2 + $0x28] sm:$0xff] %v2925
          %2956 = vst [vmem:[#allocation2 + $0x30] sm:$0xff] %v2926
          %2957 = vst [vmem:[#allocation2 + $0x38] sm:$0xff] %v2927
          %2958 = vst [vmem:[#allocation2 + $0x40] sm:$0xff] %v2928
          %2959 = vst [vmem:[#allocation2 + $0x48] sm:$0xff] %v2929
          %2960 = vst [vmem:[#allocation2 + $0x50] sm:$0xff] %v2930
          %2961 = vst [vmem:[#allocation2 + $0x58] sm:$0xff] %v2931
          %2962 = vst [vmem:[#allocation2 + $0x60] sm:$0xff] %v2932
          %2963 = vst [vmem:[#allocation2 + $0x68] sm:$0xff] %v2933
          %2964 = vst [vmem:[#allocation2 + $0x70] sm:$0xff] %v2934
        $region76: #{tpu_custom_call.1} parent=47 // pred_fallthru
          _
        %v2965 = vld [vmem:[#allocation2] sm:$0xff]
        %v2966 = vld [vmem:[#allocation2 + $0x8] sm:$0xff]
        %v2967 = vld [vmem:[#allocation2 + $0x10] sm:$0xff]
        %v2968 = vld [vmem:[#allocation2 + $0x18] sm:$0xff]
        %v2969 = vld [vmem:[#allocation2 + $0x20] sm:$0xff]
        %v2970 = vld [vmem:[#allocation2 + $0x28] sm:$0xff]
        %v2971 = vld [vmem:[#allocation2 + $0x30] sm:$0xff]
        %v2972 = vld [vmem:[#allocation2 + $0x38] sm:$0xff]
        %v2973 = vld [vmem:[#allocation2 + $0x40] sm:$0xff]
        %v2974 = vld [vmem:[#allocation2 + $0x48] sm:$0xff]
        %v2975 = vld [vmem:[#allocation2 + $0x50] sm:$0xff]
        %v2976 = vld [vmem:[#allocation2 + $0x58] sm:$0xff]
        %v2977 = vld [vmem:[#allocation2 + $0x60] sm:$0xff]
        %v2978 = vld [vmem:[#allocation2 + $0x68] sm:$0xff]
        %v2979 = vld [vmem:[#allocation2 + $0x70] sm:$0xff]
        %v2980 = vld [vmem:[%s378] sm:$0xff]
        %v2981 = vld [vmem:[%s378 + $0x8] sm:$0xff]
        %v2982 = vld [vmem:[%s378 + $0x10] sm:$0xff]
        %v2983 = vld [vmem:[%s378 + $0x18] sm:$0xff]
        %v2984 = vld [vmem:[%s378 + $0x20] sm:$0xff]
        %v2985 = vld [vmem:[%s378 + $0x28] sm:$0xff]
        %v2986 = vld [vmem:[%s378 + $0x30] sm:$0xff]
        %v2987 = vld [vmem:[%s378 + $0x38] sm:$0xff]
        %v2988 = vld [vmem:[%s378 + $0x40] sm:$0xff]
        %v2989 = vld [vmem:[%s378 + $0x48] sm:$0xff]
        %v2990 = vld [vmem:[%s378 + $0x50] sm:$0xff]
        %v2991 = vld [vmem:[%s378 + $0x58] sm:$0xff]
        %v2992 = vld [vmem:[%s378 + $0x60] sm:$0xff]
        %v2993 = vld [vmem:[%s378 + $0x68] sm:$0xff]
        %v2994 = vld [vmem:[%s378 + $0x70] sm:$0xff]
        %v2995 = vld [vmem:[%s378 + $0x78] sm:$0xff]
        %v2996 = vld [vmem:[%s378 + $0x80] sm:$0xff]
        %v2997 = vld [vmem:[%s378 + $0x88] sm:$0xff]
        %v2998 = vld [vmem:[%s378 + $0x90] sm:$0xff]
        %v2999 = vld [vmem:[%s378 + $0x98] sm:$0xff]
        %v3000 = vld [vmem:[%s378 + $0xa0] sm:$0xff]
        %v3001 = vld [vmem:[%s378 + $0xa8] sm:$0xff]
        %v3002 = vld [vmem:[%s378 + $0xb0] sm:$0xff]
        %v3003 = vld [vmem:[%s378 + $0xb8] sm:$0xff]
        %v3004 = vld [vmem:[%s378 + $0xc0] sm:$0xff]
        %v3005 = vld [vmem:[%s378 + $0xc8] sm:$0xff]
        %v3006 = vld [vmem:[%s378 + $0xd0] sm:$0xff]
        %v3007 = vld [vmem:[%s378 + $0xd8] sm:$0xff]
        %v3008 = vld [vmem:[%s378 + $0xe0] sm:$0xff]
        %v3009 = vld [vmem:[%s378 + $0xe8] sm:$0xff]
        %v3010 = vld [vmem:[%s378 + $0xf0] sm:$0xff]
        %v3011 = vld [vmem:[%s378 + $0xf8] sm:$0xff]
        %v3012 = vld [vmem:[%s378 + $0x100] sm:$0xff]
        %v3013 = vld [vmem:[%s378 + $0x108] sm:$0xff]
        %v3014 = vld [vmem:[%s378 + $0x110] sm:$0xff]
        %v3015 = vld [vmem:[%s378 + $0x118] sm:$0xff]
        %v3016 = vld [vmem:[%s378 + $0x120] sm:$0xff]
        %v3017 = vld [vmem:[%s378 + $0x128] sm:$0xff]
        %v3018 = vld [vmem:[%s378 + $0x130] sm:$0xff]
        %v3019 = vld [vmem:[%s378 + $0x138] sm:$0xff]
        %v3020 = vld [vmem:[%s378 + $0x140] sm:$0xff]
        %v3021 = vld [vmem:[%s378 + $0x148] sm:$0xff]
        %v3022 = vld [vmem:[%s378 + $0x150] sm:$0xff]
        %v3023 = vld [vmem:[%s378 + $0x158] sm:$0xff]
        %v3024 = vld [vmem:[%s378 + $0x160] sm:$0xff]
        %v3025 = vld [vmem:[%s378 + $0x168] sm:$0xff]
        %v3026 = vld [vmem:[%s378 + $0x170] sm:$0xff]
        %v3027 = vld [vmem:[%s378 + $0x178] sm:$0xff]
        %v3028 = vld [vmem:[%s378 + $0x180] sm:$0xff]
        %v3029 = vld [vmem:[%s378 + $0x188] sm:$0xff]
        %v3030 = vld [vmem:[%s378 + $0x190] sm:$0xff]
        %v3031 = vld [vmem:[%s378 + $0x198] sm:$0xff]
        %v3032 = vld [vmem:[%s378 + $0x1a0] sm:$0xff]
        %v3033 = vld [vmem:[%s378 + $0x1a8] sm:$0xff]
        %v3034 = vld [vmem:[%s378 + $0x1b0] sm:$0xff]
        %v3035 = vld [vmem:[%s378 + $0x1b8] sm:$0xff]
        %v3036 = vld [vmem:[%s378 + $0x1c0] sm:$0xff]
        %v3037 = vld [vmem:[%s378 + $0x1c8] sm:$0xff]
        %v3038 = vld [vmem:[%s378 + $0x1d0] sm:$0xff]
        %v3039 = vld [vmem:[%s378 + $0x1d8] sm:$0xff]
        %v3040 = vld [vmem:[%s378 + $0x1e0] sm:$0xff]
        %v3041 = vld [vmem:[%s378 + $0x1e8] sm:$0xff]
        %v3042 = vld [vmem:[%s378 + $0x1f0] sm:$0xff]
        %v3043 = vld [vmem:[%s378 + $0x1f8] sm:$0xff]
        %v3044 = vld [vmem:[%s378 + $0x200] sm:$0xff]
        %v3045 = vld [vmem:[%s378 + $0x208] sm:$0xff]
        %v3046 = vld [vmem:[%s378 + $0x210] sm:$0xff]
        %v3047 = vld [vmem:[%s378 + $0x218] sm:$0xff]
        %v3048 = vld [vmem:[%s378 + $0x220] sm:$0xff]
        %v3049 = vld [vmem:[%s378 + $0x228] sm:$0xff]
        %v3050 = vld [vmem:[%s378 + $0x230] sm:$0xff]
        %v3051 = vld [vmem:[%s378 + $0x238] sm:$0xff]
        %v3052 = vld [vmem:[%s378 + $0x240] sm:$0xff]
        %v3053 = vld [vmem:[%s378 + $0x248] sm:$0xff]
        %v3054 = vld [vmem:[%s378 + $0x250] sm:$0xff]
        %v3055 = vld [vmem:[%s378 + $0x258] sm:$0xff]
        %v3056 = vld [vmem:[%s378 + $0x260] sm:$0xff]
        %v3057 = vld [vmem:[%s378 + $0x268] sm:$0xff]
        %v3058 = vld [vmem:[%s378 + $0x270] sm:$0xff]
        %v3059 = vld [vmem:[%s378 + $0x278] sm:$0xff]
        %v3060 = vld [vmem:[%s378 + $0x280] sm:$0xff]
        %v3061 = vld [vmem:[%s378 + $0x288] sm:$0xff]
        %v3062 = vld [vmem:[%s378 + $0x290] sm:$0xff]
        %v3063 = vld [vmem:[%s378 + $0x298] sm:$0xff]
        %v3064 = vld [vmem:[%s378 + $0x2a0] sm:$0xff]
        %v3065 = vld [vmem:[%s378 + $0x2a8] sm:$0xff]
        %v3066 = vld [vmem:[%s378 + $0x2b0] sm:$0xff]
        %v3067 = vld [vmem:[%s378 + $0x2b8] sm:$0xff]
        %v3068 = vld [vmem:[%s378 + $0x2c0] sm:$0xff]
        %v3069 = vld [vmem:[%s378 + $0x2c8] sm:$0xff]
        %v3070 = vld [vmem:[%s378 + $0x2d0] sm:$0xff]
        %v3071 = vld [vmem:[%s378 + $0x2d8] sm:$0xff]
        %v3072 = vld [vmem:[%s378 + $0x2e0] sm:$0xff]
        %v3073 = vld [vmem:[%s378 + $0x2e8] sm:$0xff]
        %v3074 = vld [vmem:[%s378 + $0x2f0] sm:$0xff]
        %v3075 = vld [vmem:[%s378 + $0x2f8] sm:$0xff]
        %v3076 = vld [vmem:[%s378 + $0x300] sm:$0xff]
        %v3077 = vld [vmem:[%s378 + $0x308] sm:$0xff]
        %v3078 = vld [vmem:[%s378 + $0x310] sm:$0xff]
        %v3079 = vld [vmem:[%s378 + $0x318] sm:$0xff]
        %v3080 = vld [vmem:[%s378 + $0x320] sm:$0xff]
        %v3081 = vld [vmem:[%s378 + $0x328] sm:$0xff]
        %v3082 = vld [vmem:[%s378 + $0x330] sm:$0xff]
        %v3083 = vld [vmem:[%s378 + $0x338] sm:$0xff]
        %v3084 = vld [vmem:[%s378 + $0x340] sm:$0xff]
        %v3085 = vld [vmem:[%s378 + $0x348] sm:$0xff]
        %v3086 = vld [vmem:[%s378 + $0x350] sm:$0xff]
        %v3087 = vld [vmem:[%s378 + $0x358] sm:$0xff]
        %v3088 = vld [vmem:[%s378 + $0x360] sm:$0xff]
        %v3089 = vld [vmem:[%s378 + $0x368] sm:$0xff]
        %v3090 = vld [vmem:[%s378 + $0x370] sm:$0xff]
        %v3091 = vld [vmem:[%s378 + $0x378] sm:$0xff]
        %v3092 = vld [vmem:[%s378 + $0x380] sm:$0xff]
        %v3093 = vld [vmem:[%s378 + $0x388] sm:$0xff]
        %v3094 = vld [vmem:[%s378 + $0x390] sm:$0xff]
        %v3095 = vld [vmem:[%s378 + $0x398] sm:$0xff]
        %v3096 = vld [vmem:[%s378 + $0x3a0] sm:$0xff]
        %v3097 = vld [vmem:[%s378 + $0x3a8] sm:$0xff]
        %v3098 = vld [vmem:[%s378 + $0x3b0] sm:$0xff]
        %v3099 = vld [vmem:[%s378 + $0x3b8] sm:$0xff]
        %v3100 = vld [vmem:[%s378 + $0x3c0] sm:$0xff]
        %v3101 = vld [vmem:[%s378 + $0x3c8] sm:$0xff]
        %v3102 = vld [vmem:[%s378 + $0x3d0] sm:$0xff]
        %v3103 = vld [vmem:[%s378 + $0x3d8] sm:$0xff]
        %v3104 = vld [vmem:[%s378 + $0x3e0] sm:$0xff]
        %v3105 = vld [vmem:[%s378 + $0x3e8] sm:$0xff]
        %v3106 = vld [vmem:[%s378 + $0x3f0] sm:$0xff]
        %v3107 = vld [vmem:[%s378 + $0x3f8] sm:$0xff]
        %v3108 = vld [vmem:[%s378 + $0x400] sm:$0xff]
        %v3109 = vld [vmem:[%s378 + $0x408] sm:$0xff]
        %v3110 = vld [vmem:[%s378 + $0x410] sm:$0xff]
        %v3111 = vld [vmem:[%s378 + $0x418] sm:$0xff]
        %v3112 = vld [vmem:[%s378 + $0x420] sm:$0xff]
        %v3113 = vld [vmem:[%s378 + $0x428] sm:$0xff]
        %v3114 = vld [vmem:[%s378 + $0x430] sm:$0xff]
        %v3115 = vld [vmem:[%s378 + $0x438] sm:$0xff]
        %v3116 = vld [vmem:[%s378 + $0x440] sm:$0xff]
        %v3117 = vld [vmem:[%s378 + $0x448] sm:$0xff]
        %v3118 = vld [vmem:[%s378 + $0x450] sm:$0xff]
        %v3119 = vld [vmem:[%s378 + $0x458] sm:$0xff]
        %v3120 = vld [vmem:[%s378 + $0x460] sm:$0xff]
        %v3121 = vld [vmem:[%s378 + $0x468] sm:$0xff]
        %v3122 = vld [vmem:[%s378 + $0x470] sm:$0xff]
        %v3123 = vld [vmem:[%s378 + $0x478] sm:$0xff]
        %v3124 = vld [vmem:[%s378 + $0x480] sm:$0xff]
        %v3125 = vld [vmem:[%s378 + $0x488] sm:$0xff]
        %v3126 = vld [vmem:[%s378 + $0x490] sm:$0xff]
        %v3127 = vld [vmem:[%s378 + $0x498] sm:$0xff]
        %v3128 = vld [vmem:[%s378 + $0x4a0] sm:$0xff]
        %v3129 = vld [vmem:[%s378 + $0x4a8] sm:$0xff]
        %v3130 = vld [vmem:[%s378 + $0x4b0] sm:$0xff]
        %v3131 = vld [vmem:[%s378 + $0x4b8] sm:$0xff]
        %v3132 = vld [vmem:[%s378 + $0x4c0] sm:$0xff]
        %v3133 = vld [vmem:[%s378 + $0x4c8] sm:$0xff]
        %v3134 = vld [vmem:[%s378 + $0x4d0] sm:$0xff]
        %v3135 = vld [vmem:[%s378 + $0x4d8] sm:$0xff]
        %v3136 = vld [vmem:[%s378 + $0x4e0] sm:$0xff]
        %v3137 = vld [vmem:[%s378 + $0x4e8] sm:$0xff]
        %v3138 = vld [vmem:[%s378 + $0x4f0] sm:$0xff]
        %v3139 = vld [vmem:[%s378 + $0x4f8] sm:$0xff]
        %v3155 = vunpack.c.l.b16 %v2965
        %v3156 = vunpack.c.h.b16 %v2965
        %v3157 = vunpack.c.l.b16 %v2966
        %v3158 = vunpack.c.h.b16 %v2966
        %v3159 = vunpack.c.l.b16 %v2967
        %v3160 = vunpack.c.h.b16 %v2967
        %v3161 = vunpack.c.l.b16 %v2968
        %v3162 = vunpack.c.h.b16 %v2968
        %v3163 = vunpack.c.l.b16 %v2969
        %v3164 = vunpack.c.h.b16 %v2969
        %v3165 = vunpack.c.l.b16 %v2970
        %v3166 = vunpack.c.h.b16 %v2970
        %v3167 = vunpack.c.l.b16 %v2971
        %v3168 = vunpack.c.h.b16 %v2971
        %v3169 = vunpack.c.l.b16 %v2972
        %v3170 = vunpack.c.h.b16 %v2972
        %v3171 = vunpack.c.l.b16 %v2973
        %v3172 = vunpack.c.h.b16 %v2973
        %v3173 = vunpack.c.l.b16 %v2974
        %v3174 = vunpack.c.h.b16 %v2974
        %v3175 = vunpack.c.l.b16 %v2975
        %v3176 = vunpack.c.h.b16 %v2975
        %v3177 = vunpack.c.l.b16 %v2976
        %v3178 = vunpack.c.h.b16 %v2976
        %v3179 = vunpack.c.l.b16 %v2977
        %v3180 = vunpack.c.h.b16 %v2977
        %v3181 = vunpack.c.l.b16 %v2978
        %v3182 = vunpack.c.h.b16 %v2978
        %v3183 = vunpack.c.l.b16 %v2979
        %v3184 = vunpack.c.h.b16 %v2979
        %v3185 = vpack.c.b16 %v3165, %v3155
        %v3186 = vpack.c.b16 %v3166, %v3156
        %v3187 = vpack.c.b16 %v3167, %v3157
        %v3188 = vpack.c.b16 %v3168, %v3158
        %v3189 = vpack.c.b16 %v3169, %v3159
        %v3190 = vpack.c.b16 %v3170, %v3160
        %v3191 = vpack.c.b16 %v3171, %v3161
        %v3192 = vpack.c.b16 %v3172, %v3162
        %v3193 = vpack.c.b16 %v3173, %v3163
        %v3194 = vpack.c.b16 %v3174, %v3164
        %v3195 = vpack.c.b16 %v3175, %v3175
        %v3196 = vpack.c.b16 %v3176, %v3176
        %v3197 = vpack.c.b16 %v3177, %v3177
        %v3198 = vpack.c.b16 %v3178, %v3178
        %v3199 = vpack.c.b16 %v3179, %v3179
        %v3200 = vpack.c.b16 %v3180, %v3180
        %v3201 = vpack.c.b16 %v3181, %v3181
        %v3202 = vpack.c.b16 %v3182, %v3182
        %v3203 = vpack.c.b16 %v3183, %v3183
        %v3204 = vpack.c.b16 %v3184, %v3184
        %v3385 = vunpack.c.l.b16 %v2980
        %v3386 = vunpack.c.h.b16 %v2980
        %v3387 = vunpack.c.l.b16 %v2981
        %v3388 = vunpack.c.h.b16 %v2981
        %v3389 = vunpack.c.l.b16 %v2982
        %v3390 = vunpack.c.h.b16 %v2982
        %v3391 = vunpack.c.l.b16 %v2983
        %v3392 = vunpack.c.h.b16 %v2983
        %v3393 = vunpack.c.l.b16 %v2984
        %v3394 = vunpack.c.h.b16 %v2984
        %v3395 = vunpack.c.l.b16 %v2985
        %v3396 = vunpack.c.h.b16 %v2985
        %v3397 = vunpack.c.l.b16 %v2986
        %v3398 = vunpack.c.h.b16 %v2986
        %v3399 = vunpack.c.l.b16 %v2987
        %v3400 = vunpack.c.h.b16 %v2987
        %v3401 = vunpack.c.l.b16 %v2988
        %v3402 = vunpack.c.h.b16 %v2988
        %v3403 = vunpack.c.l.b16 %v2989
        %v3404 = vunpack.c.h.b16 %v2989
        %v3405 = vunpack.c.l.b16 %v2990
        %v3406 = vunpack.c.h.b16 %v2990
        %v3407 = vunpack.c.l.b16 %v2991
        %v3408 = vunpack.c.h.b16 %v2991
        %v3409 = vunpack.c.l.b16 %v2992
        %v3410 = vunpack.c.h.b16 %v2992
        %v3411 = vunpack.c.l.b16 %v2993
        %v3412 = vunpack.c.h.b16 %v2993
        %v3413 = vunpack.c.l.b16 %v2994
        %v3414 = vunpack.c.h.b16 %v2994
        %v3415 = vunpack.c.l.b16 %v2995
        %v3416 = vunpack.c.h.b16 %v2995
        %v3417 = vunpack.c.l.b16 %v2996
        %v3418 = vunpack.c.h.b16 %v2996
        %v3419 = vunpack.c.l.b16 %v2997
        %v3420 = vunpack.c.h.b16 %v2997
        %v3421 = vunpack.c.l.b16 %v2998
        %v3422 = vunpack.c.h.b16 %v2998
        %v3423 = vunpack.c.l.b16 %v2999
        %v3424 = vunpack.c.h.b16 %v2999
        %v3425 = vunpack.c.l.b16 %v3000
        %v3426 = vunpack.c.h.b16 %v3000
        %v3427 = vunpack.c.l.b16 %v3001
        %v3428 = vunpack.c.h.b16 %v3001
        %v3429 = vunpack.c.l.b16 %v3002
        %v3430 = vunpack.c.h.b16 %v3002
        %v3431 = vunpack.c.l.b16 %v3003
        %v3432 = vunpack.c.h.b16 %v3003
        %v3433 = vunpack.c.l.b16 %v3004
        %v3434 = vunpack.c.h.b16 %v3004
        %v3435 = vunpack.c.l.b16 %v3005
        %v3436 = vunpack.c.h.b16 %v3005
        %v3437 = vunpack.c.l.b16 %v3006
        %v3438 = vunpack.c.h.b16 %v3006
        %v3439 = vunpack.c.l.b16 %v3007
        %v3440 = vunpack.c.h.b16 %v3007
        %v3441 = vunpack.c.l.b16 %v3008
        %v3442 = vunpack.c.h.b16 %v3008
        %v3443 = vunpack.c.l.b16 %v3009
        %v3444 = vunpack.c.h.b16 %v3009
        %v3445 = vunpack.c.l.b16 %v3010
        %v3446 = vunpack.c.h.b16 %v3010
        %v3447 = vunpack.c.l.b16 %v3011
        %v3448 = vunpack.c.h.b16 %v3011
        %v3449 = vunpack.c.l.b16 %v3012
        %v3450 = vunpack.c.h.b16 %v3012
        %v3451 = vunpack.c.l.b16 %v3013
        %v3452 = vunpack.c.h.b16 %v3013
        %v3453 = vunpack.c.l.b16 %v3014
        %v3454 = vunpack.c.h.b16 %v3014
        %v3455 = vunpack.c.l.b16 %v3015
        %v3456 = vunpack.c.h.b16 %v3015
        %v3457 = vunpack.c.l.b16 %v3016
        %v3458 = vunpack.c.h.b16 %v3016
        %v3459 = vunpack.c.l.b16 %v3017
        %v3460 = vunpack.c.h.b16 %v3017
        %v3461 = vunpack.c.l.b16 %v3018
        %v3462 = vunpack.c.h.b16 %v3018
        %v3463 = vunpack.c.l.b16 %v3019
        %v3464 = vunpack.c.h.b16 %v3019
        %v3465 = vunpack.c.l.b16 %v3020
        %v3466 = vunpack.c.h.b16 %v3020
        %v3467 = vunpack.c.l.b16 %v3021
        %v3468 = vunpack.c.h.b16 %v3021
        %v3469 = vunpack.c.l.b16 %v3022
        %v3470 = vunpack.c.h.b16 %v3022
        %v3471 = vunpack.c.l.b16 %v3023
        %v3472 = vunpack.c.h.b16 %v3023
        %v3473 = vunpack.c.l.b16 %v3024
        %v3474 = vunpack.c.h.b16 %v3024
        %v3475 = vunpack.c.l.b16 %v3025
        %v3476 = vunpack.c.h.b16 %v3025
        %v3477 = vunpack.c.l.b16 %v3026
        %v3478 = vunpack.c.h.b16 %v3026
        %v3479 = vunpack.c.l.b16 %v3027
        %v3480 = vunpack.c.h.b16 %v3027
        %v3481 = vunpack.c.l.b16 %v3028
        %v3482 = vunpack.c.h.b16 %v3028
        %v3483 = vunpack.c.l.b16 %v3029
        %v3484 = vunpack.c.h.b16 %v3029
        %v3485 = vunpack.c.l.b16 %v3030
        %v3486 = vunpack.c.h.b16 %v3030
        %v3487 = vunpack.c.l.b16 %v3031
        %v3488 = vunpack.c.h.b16 %v3031
        %v3489 = vunpack.c.l.b16 %v3032
        %v3490 = vunpack.c.h.b16 %v3032
        %v3491 = vunpack.c.l.b16 %v3033
        %v3492 = vunpack.c.h.b16 %v3033
        %v3493 = vunpack.c.l.b16 %v3034
        %v3494 = vunpack.c.h.b16 %v3034
        %v3495 = vunpack.c.l.b16 %v3035
        %v3496 = vunpack.c.h.b16 %v3035
        %v3497 = vunpack.c.l.b16 %v3036
        %v3498 = vunpack.c.h.b16 %v3036
        %v3499 = vunpack.c.l.b16 %v3037
        %v3500 = vunpack.c.h.b16 %v3037
        %v3501 = vunpack.c.l.b16 %v3038
        %v3502 = vunpack.c.h.b16 %v3038
        %v3503 = vunpack.c.l.b16 %v3039
        %v3504 = vunpack.c.h.b16 %v3039
        %v3505 = vunpack.c.l.b16 %v3040
        %v3506 = vunpack.c.h.b16 %v3040
        %v3507 = vunpack.c.l.b16 %v3041
        %v3508 = vunpack.c.h.b16 %v3041
        %v3509 = vunpack.c.l.b16 %v3042
        %v3510 = vunpack.c.h.b16 %v3042
        %v3511 = vunpack.c.l.b16 %v3043
        %v3512 = vunpack.c.h.b16 %v3043
        %v3513 = vunpack.c.l.b16 %v3044
        %v3514 = vunpack.c.h.b16 %v3044
        %v3515 = vunpack.c.l.b16 %v3045
        %v3516 = vunpack.c.h.b16 %v3045
        %v3517 = vunpack.c.l.b16 %v3046
        %v3518 = vunpack.c.h.b16 %v3046
        %v3519 = vunpack.c.l.b16 %v3047
        %v3520 = vunpack.c.h.b16 %v3047
        %v3521 = vunpack.c.l.b16 %v3048
        %v3522 = vunpack.c.h.b16 %v3048
        %v3523 = vunpack.c.l.b16 %v3049
        %v3524 = vunpack.c.h.b16 %v3049
        %v3525 = vunpack.c.l.b16 %v3050
        %v3526 = vunpack.c.h.b16 %v3050
        %v3527 = vunpack.c.l.b16 %v3051
        %v3528 = vunpack.c.h.b16 %v3051
        %v3529 = vunpack.c.l.b16 %v3052
        %v3530 = vunpack.c.h.b16 %v3052
        %v3531 = vunpack.c.l.b16 %v3053
        %v3532 = vunpack.c.h.b16 %v3053
        %v3533 = vunpack.c.l.b16 %v3054
        %v3534 = vunpack.c.h.b16 %v3054
        %v3535 = vunpack.c.l.b16 %v3055
        %v3536 = vunpack.c.h.b16 %v3055
        %v3537 = vunpack.c.l.b16 %v3056
        %v3538 = vunpack.c.h.b16 %v3056
        %v3539 = vunpack.c.l.b16 %v3057
        %v3540 = vunpack.c.h.b16 %v3057
        %v3541 = vunpack.c.l.b16 %v3058
        %v3542 = vunpack.c.h.b16 %v3058
        %v3543 = vunpack.c.l.b16 %v3059
        %v3544 = vunpack.c.h.b16 %v3059
        %v3545 = vunpack.c.l.b16 %v3060
        %v3546 = vunpack.c.h.b16 %v3060
        %v3547 = vunpack.c.l.b16 %v3061
        %v3548 = vunpack.c.h.b16 %v3061
        %v3549 = vunpack.c.l.b16 %v3062
        %v3550 = vunpack.c.h.b16 %v3062
        %v3551 = vunpack.c.l.b16 %v3063
        %v3552 = vunpack.c.h.b16 %v3063
        %v3553 = vunpack.c.l.b16 %v3064
        %v3554 = vunpack.c.h.b16 %v3064
        %v3555 = vunpack.c.l.b16 %v3065
        %v3556 = vunpack.c.h.b16 %v3065
        %v3557 = vunpack.c.l.b16 %v3066
        %v3558 = vunpack.c.h.b16 %v3066
        %v3559 = vunpack.c.l.b16 %v3067
        %v3560 = vunpack.c.h.b16 %v3067
        %v3561 = vunpack.c.l.b16 %v3068
        %v3562 = vunpack.c.h.b16 %v3068
        %v3563 = vunpack.c.l.b16 %v3069
        %v3564 = vunpack.c.h.b16 %v3069
        %v3565 = vunpack.c.l.b16 %v3070
        %v3566 = vunpack.c.h.b16 %v3070
        %v3567 = vunpack.c.l.b16 %v3071
        %v3568 = vunpack.c.h.b16 %v3071
        %v3569 = vunpack.c.l.b16 %v3072
        %v3570 = vunpack.c.h.b16 %v3072
        %v3571 = vunpack.c.l.b16 %v3073
        %v3572 = vunpack.c.h.b16 %v3073
        %v3573 = vunpack.c.l.b16 %v3074
        %v3574 = vunpack.c.h.b16 %v3074
        %v3575 = vunpack.c.l.b16 %v3075
        %v3576 = vunpack.c.h.b16 %v3075
        %v3577 = vunpack.c.l.b16 %v3076
        %v3578 = vunpack.c.h.b16 %v3076
        %v3579 = vunpack.c.l.b16 %v3077
        %v3580 = vunpack.c.h.b16 %v3077
        %v3581 = vunpack.c.l.b16 %v3078
        %v3582 = vunpack.c.h.b16 %v3078
        %v3583 = vunpack.c.l.b16 %v3079
        %v3584 = vunpack.c.h.b16 %v3079
        %v3585 = vunpack.c.l.b16 %v3080
        %v3586 = vunpack.c.h.b16 %v3080
        %v3587 = vunpack.c.l.b16 %v3081
        %v3588 = vunpack.c.h.b16 %v3081
        %v3589 = vunpack.c.l.b16 %v3082
        %v3590 = vunpack.c.h.b16 %v3082
        %v3591 = vunpack.c.l.b16 %v3083
        %v3592 = vunpack.c.h.b16 %v3083
        %v3593 = vunpack.c.l.b16 %v3084
        %v3594 = vunpack.c.h.b16 %v3084
        %v3595 = vunpack.c.l.b16 %v3085
        %v3596 = vunpack.c.h.b16 %v3085
        %v3597 = vunpack.c.l.b16 %v3086
        %v3598 = vunpack.c.h.b16 %v3086
        %v3599 = vunpack.c.l.b16 %v3087
        %v3600 = vunpack.c.h.b16 %v3087
        %v3601 = vunpack.c.l.b16 %v3088
        %v3602 = vunpack.c.h.b16 %v3088
        %v3603 = vunpack.c.l.b16 %v3089
        %v3604 = vunpack.c.h.b16 %v3089
        %v3605 = vunpack.c.l.b16 %v3090
        %v3606 = vunpack.c.h.b16 %v3090
        %v3607 = vunpack.c.l.b16 %v3091
        %v3608 = vunpack.c.h.b16 %v3091
        %v3609 = vunpack.c.l.b16 %v3092
        %v3610 = vunpack.c.h.b16 %v3092
        %v3611 = vunpack.c.l.b16 %v3093
        %v3612 = vunpack.c.h.b16 %v3093
        %v3613 = vunpack.c.l.b16 %v3094
        %v3614 = vunpack.c.h.b16 %v3094
        %v3615 = vunpack.c.l.b16 %v3095
        %v3616 = vunpack.c.h.b16 %v3095
        %v3617 = vunpack.c.l.b16 %v3096
        %v3618 = vunpack.c.h.b16 %v3096
        %v3619 = vunpack.c.l.b16 %v3097
        %v3620 = vunpack.c.h.b16 %v3097
        %v3621 = vunpack.c.l.b16 %v3098
        %v3622 = vunpack.c.h.b16 %v3098
        %v3623 = vunpack.c.l.b16 %v3099
        %v3624 = vunpack.c.h.b16 %v3099
        %v3625 = vunpack.c.l.b16 %v3100
        %v3626 = vunpack.c.h.b16 %v3100
        %v3627 = vunpack.c.l.b16 %v3101
        %v3628 = vunpack.c.h.b16 %v3101
        %v3629 = vunpack.c.l.b16 %v3102
        %v3630 = vunpack.c.h.b16 %v3102
        %v3631 = vunpack.c.l.b16 %v3103
        %v3632 = vunpack.c.h.b16 %v3103
        %v3633 = vunpack.c.l.b16 %v3104
        %v3634 = vunpack.c.h.b16 %v3104
        %v3635 = vunpack.c.l.b16 %v3105
        %v3636 = vunpack.c.h.b16 %v3105
        %v3637 = vunpack.c.l.b16 %v3106
        %v3638 = vunpack.c.h.b16 %v3106
        %v3639 = vunpack.c.l.b16 %v3107
        %v3640 = vunpack.c.h.b16 %v3107
        %v3641 = vunpack.c.l.b16 %v3108
        %v3642 = vunpack.c.h.b16 %v3108
        %v3643 = vunpack.c.l.b16 %v3109
        %v3644 = vunpack.c.h.b16 %v3109
        %v3645 = vunpack.c.l.b16 %v3110
        %v3646 = vunpack.c.h.b16 %v3110
        %v3647 = vunpack.c.l.b16 %v3111
        %v3648 = vunpack.c.h.b16 %v3111
        %v3649 = vunpack.c.l.b16 %v3112
        %v3650 = vunpack.c.h.b16 %v3112
        %v3651 = vunpack.c.l.b16 %v3113
        %v3652 = vunpack.c.h.b16 %v3113
        %v3653 = vunpack.c.l.b16 %v3114
        %v3654 = vunpack.c.h.b16 %v3114
        %v3655 = vunpack.c.l.b16 %v3115
        %v3656 = vunpack.c.h.b16 %v3115
        %v3657 = vunpack.c.l.b16 %v3116
        %v3658 = vunpack.c.h.b16 %v3116
        %v3659 = vunpack.c.l.b16 %v3117
        %v3660 = vunpack.c.h.b16 %v3117
        %v3661 = vunpack.c.l.b16 %v3118
        %v3662 = vunpack.c.h.b16 %v3118
        %v3663 = vunpack.c.l.b16 %v3119
        %v3664 = vunpack.c.h.b16 %v3119
        %v3665 = vunpack.c.l.b16 %v3120
        %v3666 = vunpack.c.h.b16 %v3120
        %v3667 = vunpack.c.l.b16 %v3121
        %v3668 = vunpack.c.h.b16 %v3121
        %v3669 = vunpack.c.l.b16 %v3122
        %v3670 = vunpack.c.h.b16 %v3122
        %v3671 = vunpack.c.l.b16 %v3123
        %v3672 = vunpack.c.h.b16 %v3123
        %v3673 = vunpack.c.l.b16 %v3124
        %v3674 = vunpack.c.h.b16 %v3124
        %v3675 = vunpack.c.l.b16 %v3125
        %v3676 = vunpack.c.h.b16 %v3125
        %v3677 = vunpack.c.l.b16 %v3126
        %v3678 = vunpack.c.h.b16 %v3126
        %v3679 = vunpack.c.l.b16 %v3127
        %v3680 = vunpack.c.h.b16 %v3127
        %v3681 = vunpack.c.l.b16 %v3128
        %v3682 = vunpack.c.h.b16 %v3128
        %v3683 = vunpack.c.l.b16 %v3129
        %v3684 = vunpack.c.h.b16 %v3129
        %v3685 = vunpack.c.l.b16 %v3130
        %v3686 = vunpack.c.h.b16 %v3130
        %v3687 = vunpack.c.l.b16 %v3131
        %v3688 = vunpack.c.h.b16 %v3131
        %v3689 = vunpack.c.l.b16 %v3132
        %v3690 = vunpack.c.h.b16 %v3132
        %v3691 = vunpack.c.l.b16 %v3133
        %v3692 = vunpack.c.h.b16 %v3133
        %v3693 = vunpack.c.l.b16 %v3134
        %v3694 = vunpack.c.h.b16 %v3134
        %v3695 = vunpack.c.l.b16 %v3135
        %v3696 = vunpack.c.h.b16 %v3135
        %v3697 = vunpack.c.l.b16 %v3136
        %v3698 = vunpack.c.h.b16 %v3136
        %v3699 = vunpack.c.l.b16 %v3137
        %v3700 = vunpack.c.h.b16 %v3137
        %v3701 = vunpack.c.l.b16 %v3138
        %v3702 = vunpack.c.h.b16 %v3138
        %v3703 = vunpack.c.l.b16 %v3139
        %v3704 = vunpack.c.h.b16 %v3139
        %v3705 = vpack.c.b16 %v3387, %v3385
        %v3706 = vpack.c.b16 %v3388, %v3386
        %v3707 = vpack.c.b16 %v3391, %v3389
        %v3708 = vpack.c.b16 %v3392, %v3390
        %v3709 = vpack.c.b16 %v3395, %v3393
        %v3710 = vpack.c.b16 %v3396, %v3394
        %v3711 = vpack.c.b16 %v3399, %v3397
        %v3712 = vpack.c.b16 %v3400, %v3398
        %v3713 = vpack.c.b16 %v3403, %v3401
        %v3714 = vpack.c.b16 %v3404, %v3402
        %v3715 = vpack.c.b16 %v3407, %v3405
        %v3716 = vpack.c.b16 %v3408, %v3406
        %v3717 = vpack.c.b16 %v3411, %v3409
        %v3718 = vpack.c.b16 %v3412, %v3410
        %v3719 = vpack.c.b16 %v3415, %v3413
        %v3720 = vpack.c.b16 %v3416, %v3414
        %v3721 = vpack.c.b16 %v3419, %v3417
        %v3722 = vpack.c.b16 %v3420, %v3418
        %v3723 = vpack.c.b16 %v3423, %v3421
        %v3724 = vpack.c.b16 %v3424, %v3422
        %v3725 = vpack.c.b16 %v3427, %v3425
        %v3726 = vpack.c.b16 %v3428, %v3426
        %v3727 = vpack.c.b16 %v3431, %v3429
        %v3728 = vpack.c.b16 %v3432, %v3430
        %v3729 = vpack.c.b16 %v3435, %v3433
        %v3730 = vpack.c.b16 %v3436, %v3434
        %v3731 = vpack.c.b16 %v3439, %v3437
        %v3732 = vpack.c.b16 %v3440, %v3438
        %v3733 = vpack.c.b16 %v3443, %v3441
        %v3734 = vpack.c.b16 %v3444, %v3442
        %v3735 = vpack.c.b16 %v3447, %v3445
        %v3736 = vpack.c.b16 %v3448, %v3446
        %v3737 = vpack.c.b16 %v3451, %v3449
        %v3738 = vpack.c.b16 %v3452, %v3450
        %v3739 = vpack.c.b16 %v3455, %v3453
        %v3740 = vpack.c.b16 %v3456, %v3454
        %v3741 = vpack.c.b16 %v3459, %v3457
        %v3742 = vpack.c.b16 %v3460, %v3458
        %v3743 = vpack.c.b16 %v3463, %v3461
        %v3744 = vpack.c.b16 %v3464, %v3462
        %v3745 = vpack.c.b16 %v3467, %v3465
        %v3746 = vpack.c.b16 %v3468, %v3466
        %v3747 = vpack.c.b16 %v3471, %v3469
        %v3748 = vpack.c.b16 %v3472, %v3470
        %v3749 = vpack.c.b16 %v3475, %v3473
        %v3750 = vpack.c.b16 %v3476, %v3474
        %v3751 = vpack.c.b16 %v3479, %v3477
        %v3752 = vpack.c.b16 %v3480, %v3478
        %v3753 = vpack.c.b16 %v3483, %v3481
        %v3754 = vpack.c.b16 %v3484, %v3482
        %v3755 = vpack.c.b16 %v3487, %v3485
        %v3756 = vpack.c.b16 %v3488, %v3486
        %v3757 = vpack.c.b16 %v3491, %v3489
        %v3758 = vpack.c.b16 %v3492, %v3490
        %v3759 = vpack.c.b16 %v3495, %v3493
        %v3760 = vpack.c.b16 %v3496, %v3494
        %v3761 = vpack.c.b16 %v3499, %v3497
        %v3762 = vpack.c.b16 %v3500, %v3498
        %v3763 = vpack.c.b16 %v3503, %v3501
        %v3764 = vpack.c.b16 %v3504, %v3502
        %v3765 = vpack.c.b16 %v3507, %v3505
        %v3766 = vpack.c.b16 %v3508, %v3506
        %v3767 = vpack.c.b16 %v3511, %v3509
        %v3768 = vpack.c.b16 %v3512, %v3510
        %v3769 = vpack.c.b16 %v3515, %v3513
        %v3770 = vpack.c.b16 %v3516, %v3514
        %v3771 = vpack.c.b16 %v3519, %v3517
        %v3772 = vpack.c.b16 %v3520, %v3518
        %v3773 = vpack.c.b16 %v3523, %v3521
        %v3774 = vpack.c.b16 %v3524, %v3522
        %v3775 = vpack.c.b16 %v3527, %v3525
        %v3776 = vpack.c.b16 %v3528, %v3526
        %v3777 = vpack.c.b16 %v3531, %v3529
        %v3778 = vpack.c.b16 %v3532, %v3530
        %v3779 = vpack.c.b16 %v3535, %v3533
        %v3780 = vpack.c.b16 %v3536, %v3534
        %v3781 = vpack.c.b16 %v3539, %v3537
        %v3782 = vpack.c.b16 %v3540, %v3538
        %v3783 = vpack.c.b16 %v3543, %v3541
        %v3784 = vpack.c.b16 %v3544, %v3542
        %v3785 = vpack.c.b16 %v3547, %v3545
        %v3786 = vpack.c.b16 %v3548, %v3546
        %v3787 = vpack.c.b16 %v3551, %v3549
        %v3788 = vpack.c.b16 %v3552, %v3550
        %v3789 = vpack.c.b16 %v3555, %v3553
        %v3790 = vpack.c.b16 %v3556, %v3554
        %v3791 = vpack.c.b16 %v3559, %v3557
        %v3792 = vpack.c.b16 %v3560, %v3558
        %v3793 = vpack.c.b16 %v3563, %v3561
        %v3794 = vpack.c.b16 %v3564, %v3562
        %v3795 = vpack.c.b16 %v3567, %v3565
        %v3796 = vpack.c.b16 %v3568, %v3566
        %v3797 = vpack.c.b16 %v3571, %v3569
        %v3798 = vpack.c.b16 %v3572, %v3570
        %v3799 = vpack.c.b16 %v3575, %v3573
        %v3800 = vpack.c.b16 %v3576, %v3574
        %v3801 = vpack.c.b16 %v3579, %v3577
        %v3802 = vpack.c.b16 %v3580, %v3578
        %v3803 = vpack.c.b16 %v3583, %v3581
        %v3804 = vpack.c.b16 %v3584, %v3582
        %v3805 = vpack.c.b16 %v3587, %v3585
        %v3806 = vpack.c.b16 %v3588, %v3586
        %v3807 = vpack.c.b16 %v3591, %v3589
        %v3808 = vpack.c.b16 %v3592, %v3590
        %v3809 = vpack.c.b16 %v3595, %v3593
        %v3810 = vpack.c.b16 %v3596, %v3594
        %v3811 = vpack.c.b16 %v3599, %v3597
        %v3812 = vpack.c.b16 %v3600, %v3598
        %v3813 = vpack.c.b16 %v3603, %v3601
        %v3814 = vpack.c.b16 %v3604, %v3602
        %v3815 = vpack.c.b16 %v3607, %v3605
        %v3816 = vpack.c.b16 %v3608, %v3606
        %v3817 = vpack.c.b16 %v3611, %v3609
        %v3818 = vpack.c.b16 %v3612, %v3610
        %v3819 = vpack.c.b16 %v3615, %v3613
        %v3820 = vpack.c.b16 %v3616, %v3614
        %v3821 = vpack.c.b16 %v3619, %v3617
        %v3822 = vpack.c.b16 %v3620, %v3618
        %v3823 = vpack.c.b16 %v3623, %v3621
        %v3824 = vpack.c.b16 %v3624, %v3622
        %v3825 = vpack.c.b16 %v3627, %v3625
        %v3826 = vpack.c.b16 %v3628, %v3626
        %v3827 = vpack.c.b16 %v3631, %v3629
        %v3828 = vpack.c.b16 %v3632, %v3630
        %v3829 = vpack.c.b16 %v3635, %v3633
        %v3830 = vpack.c.b16 %v3636, %v3634
        %v3831 = vpack.c.b16 %v3639, %v3637
        %v3832 = vpack.c.b16 %v3640, %v3638
        %v3833 = vpack.c.b16 %v3643, %v3641
        %v3834 = vpack.c.b16 %v3644, %v3642
        %v3835 = vpack.c.b16 %v3647, %v3645
        %v3836 = vpack.c.b16 %v3648, %v3646
        %v3837 = vpack.c.b16 %v3651, %v3649
        %v3838 = vpack.c.b16 %v3652, %v3650
        %v3839 = vpack.c.b16 %v3655, %v3653
        %v3840 = vpack.c.b16 %v3656, %v3654
        %v3841 = vpack.c.b16 %v3659, %v3657
        %v3842 = vpack.c.b16 %v3660, %v3658
        %v3843 = vpack.c.b16 %v3663, %v3661
        %v3844 = vpack.c.b16 %v3664, %v3662
        %v3845 = vpack.c.b16 %v3667, %v3665
        %v3846 = vpack.c.b16 %v3668, %v3666
        %v3847 = vpack.c.b16 %v3671, %v3669
        %v3848 = vpack.c.b16 %v3672, %v3670
        %v3849 = vpack.c.b16 %v3675, %v3673
        %v3850 = vpack.c.b16 %v3676, %v3674
        %v3851 = vpack.c.b16 %v3679, %v3677
        %v3852 = vpack.c.b16 %v3680, %v3678
        %v3853 = vpack.c.b16 %v3683, %v3681
        %v3854 = vpack.c.b16 %v3684, %v3682
        %v3855 = vpack.c.b16 %v3687, %v3685
        %v3856 = vpack.c.b16 %v3688, %v3686
        %v3857 = vpack.c.b16 %v3691, %v3689
        %v3858 = vpack.c.b16 %v3692, %v3690
        %v3859 = vpack.c.b16 %v3695, %v3693
        %v3860 = vpack.c.b16 %v3696, %v3694
        %v3861 = vpack.c.b16 %v3699, %v3697
        %v3862 = vpack.c.b16 %v3700, %v3698
        %v3863 = vpack.c.b16 %v3703, %v3701
        %v3864 = vpack.c.b16 %v3704, %v3702
        %4025 = vmatprep.subr.bf16.mxu0 %v3720
        %4026 = vmatpush1.bf16.msra.mxu0 %v3719
        %4027 = vmatprep.subr.bf16.mxu0 %v3718
        %4028 = vmatpush1.bf16.msra.mxu0 %v3717
        %4029 = vmatprep.subr.bf16.mxu0 %v3716
        %4030 = vmatpush1.bf16.msra.mxu0 %v3715
        %4031 = vmatprep.subr.bf16.mxu0 %v3714
        %4032 = vmatpush1.bf16.msra.mxu0 %v3713
        %4033 = vmatprep.subr.bf16.mxu0 %v3712
        %4034 = vmatpush1.bf16.msra.mxu0 %v3711
        %4035 = vmatprep.subr.bf16.mxu0 %v3710
        %4036 = vmatpush1.bf16.msra.mxu0 %v3709
        %4037 = vmatprep.subr.bf16.mxu0 %v3708
        %4038 = vmatpush1.bf16.msra.mxu0 %v3707
        %4039 = vmatprep.subr.bf16.mxu0 %v3706
        %4040 = vmatpush1.bf16.msra.mxu0 %v3705
        %4041 = vmatprep.subr.bf16.mxu0 %v3736
        %4042 = vmatpush2.bf16.msra.mxu0 %v3735
        %4043 = vmatprep.subr.bf16.mxu0 %v3734
        %4044 = vmatpush2.bf16.msra.mxu0 %v3733
        %4045 = vmatprep.subr.bf16.mxu0 %v3732
        %4046 = vmatpush2.bf16.msra.mxu0 %v3731
        %4047 = vmatprep.subr.bf16.mxu0 %v3730
        %4048 = vmatpush2.bf16.msra.mxu0 %v3729
        %4049 = vmatprep.subr.bf16.mxu0 %v3728
        %4050 = vmatpush2.bf16.msra.mxu0 %v3727
        %4051 = vmatprep.subr.bf16.mxu0 %v3726
        %4052 = vmatpush2.bf16.msra.mxu0 %v3725
        %4053 = vmatprep.subr.bf16.mxu0 %v3724
        %4054 = vmatpush2.bf16.msra.mxu0 %v3723
        %4055 = vmatprep.subr.bf16.mxu0 %v3722
        %4056 = vmatpush2.bf16.msra.mxu0 %v3721
        %4057 = vmatprep.mubr.bf16.mxu0 %v3186
        %4058 = vmatmul.mubr.bf16.gmra.mxu0 %v3185
        %v4059 = vpop.f32.mrf.mxu0
        %v4060 = vadd.f32 0.0, %v4059
        %v4061 = vpop.f32.mrf.mxu0
        %v4062 = vadd.f32 0.0, %v4061
        %v4063 = vpop.f32.mrf.mxu0
        %v4064 = vadd.f32 0.0, %v4063
        %v4065 = vpop.f32.mrf.mxu0
        %v4066 = vadd.f32 0.0, %v4065
        %4067 = vmatprep.mubr.bf16.mxu0 %v3196
        %4068 = vmatmul.mubr.bf16.gmra.mxu0 %v3195
        %v4069 = vpop.f32.mrf.mxu0
        %v4070 = vadd.f32 0.0, %v4069
        %v4071 = vpop.f32.mrf.mxu0
        %v4072 = vadd.f32 0.0, %v4071
        %v4073 = vpop.f32.mrf.mxu0
        %v4074 = vpop.f32.mrf.mxu0
        %4075 = vdwg.mxu0
        %4076 = vmatprep.subr.bf16.mxu0 %v3752
        %4077 = vmatpush1.bf16.msra.mxu0 %v3751
        %4078 = vmatprep.subr.bf16.mxu0 %v3750
        %4079 = vmatpush1.bf16.msra.mxu0 %v3749
        %4080 = vmatprep.subr.bf16.mxu0 %v3748
        %4081 = vmatpush1.bf16.msra.mxu0 %v3747
        %4082 = vmatprep.subr.bf16.mxu0 %v3746
        %4083 = vmatpush1.bf16.msra.mxu0 %v3745
        %4084 = vmatprep.subr.bf16.mxu0 %v3744
        %4085 = vmatpush1.bf16.msra.mxu0 %v3743
        %4086 = vmatprep.subr.bf16.mxu0 %v3742
        %4087 = vmatpush1.bf16.msra.mxu0 %v3741
        %4088 = vmatprep.subr.bf16.mxu0 %v3740
        %4089 = vmatpush1.bf16.msra.mxu0 %v3739
        %4090 = vmatprep.subr.bf16.mxu0 %v3738
        %4091 = vmatpush1.bf16.msra.mxu0 %v3737
        %4092 = vmatprep.subr.bf16.mxu0 %v3768
        %4093 = vmatpush2.bf16.msra.mxu0 %v3767
        %4094 = vmatprep.subr.bf16.mxu0 %v3766
        %4095 = vmatpush2.bf16.msra.mxu0 %v3765
        %4096 = vmatprep.subr.bf16.mxu0 %v3764
        %4097 = vmatpush2.bf16.msra.mxu0 %v3763
        %4098 = vmatprep.subr.bf16.mxu0 %v3762
        %4099 = vmatpush2.bf16.msra.mxu0 %v3761
        %4100 = vmatprep.subr.bf16.mxu0 %v3760
        %4101 = vmatpush2.bf16.msra.mxu0 %v3759
        %4102 = vmatprep.subr.bf16.mxu0 %v3758
        %4103 = vmatpush2.bf16.msra.mxu0 %v3757
        %4104 = vmatprep.subr.bf16.mxu0 %v3756
        %4105 = vmatpush2.bf16.msra.mxu0 %v3755
        %4106 = vmatprep.subr.bf16.mxu0 %v3754
        %4107 = vmatpush2.bf16.msra.mxu0 %v3753
        %4108 = vmatprep.mubr.bf16.mxu0 %v3188
        %4109 = vmatmul.mubr.bf16.gmra.mxu0 %v3187
        %v4110 = vpop.f32.mrf.mxu0
        %v4111 = vadd.f32 %v4060, %v4110
        %v4112 = vpop.f32.mrf.mxu0
        %v4113 = vadd.f32 %v4062, %v4112
        %v4114 = vpop.f32.mrf.mxu0
        %v4115 = vadd.f32 %v4064, %v4114
        %v4116 = vpop.f32.mrf.mxu0
        %v4117 = vadd.f32 %v4066, %v4116
        %4118 = vmatprep.mubr.bf16.mxu0 %v3198
        %4119 = vmatmul.mubr.bf16.gmra.mxu0 %v3197
        %v4120 = vpop.f32.mrf.mxu0
        %v4121 = vadd.f32 %v4070, %v4120
        %v4122 = vpop.f32.mrf.mxu0
        %v4123 = vadd.f32 %v4072, %v4122
        %v4124 = vpop.f32.mrf.mxu0
        %v4125 = vpop.f32.mrf.mxu0
        %4126 = vdwg.mxu0
        %4127 = vmatprep.subr.bf16.mxu0 %v3784
        %4128 = vmatpush1.bf16.msra.mxu0 %v3783
        %4129 = vmatprep.subr.bf16.mxu0 %v3782
        %4130 = vmatpush1.bf16.msra.mxu0 %v3781
        %4131 = vmatprep.subr.bf16.mxu0 %v3780
        %4132 = vmatpush1.bf16.msra.mxu0 %v3779
        %4133 = vmatprep.subr.bf16.mxu0 %v3778
        %4134 = vmatpush1.bf16.msra.mxu0 %v3777
        %4135 = vmatprep.subr.bf16.mxu0 %v3776
        %4136 = vmatpush1.bf16.msra.mxu0 %v3775
        %4137 = vmatprep.subr.bf16.mxu0 %v3774
        %4138 = vmatpush1.bf16.msra.mxu0 %v3773
        %4139 = vmatprep.subr.bf16.mxu0 %v3772
        %4140 = vmatpush1.bf16.msra.mxu0 %v3771
        %4141 = vmatprep.subr.bf16.mxu0 %v3770
        %4142 = vmatpush1.bf16.msra.mxu0 %v3769
        %4143 = vmatprep.subr.bf16.mxu0 %v3800
        %4144 = vmatpush2.bf16.msra.mxu0 %v3799
        %4145 = vmatprep.subr.bf16.mxu0 %v3798
        %4146 = vmatpush2.bf16.msra.mxu0 %v3797
        %4147 = vmatprep.subr.bf16.mxu0 %v3796
        %4148 = vmatpush2.bf16.msra.mxu0 %v3795
        %4149 = vmatprep.subr.bf16.mxu0 %v3794
        %4150 = vmatpush2.bf16.msra.mxu0 %v3793
        %4151 = vmatprep.subr.bf16.mxu0 %v3792
        %4152 = vmatpush2.bf16.msra.mxu0 %v3791
        %4153 = vmatprep.subr.bf16.mxu0 %v3790
        %4154 = vmatpush2.bf16.msra.mxu0 %v3789
        %4155 = vmatprep.subr.bf16.mxu0 %v3788
        %4156 = vmatpush2.bf16.msra.mxu0 %v3787
        %4157 = vmatprep.subr.bf16.mxu0 %v3786
        %4158 = vmatpush2.bf16.msra.mxu0 %v3785
        %4159 = vmatprep.mubr.bf16.mxu0 %v3190
        %4160 = vmatmul.mubr.bf16.gmra.mxu0 %v3189
        %v4161 = vpop.f32.mrf.mxu0
        %v4162 = vadd.f32 %v4111, %v4161
        %v4163 = vpop.f32.mrf.mxu0
        %v4164 = vadd.f32 %v4113, %v4163
        %v4165 = vpop.f32.mrf.mxu0
        %v4166 = vadd.f32 %v4115, %v4165
        %v4167 = vpop.f32.mrf.mxu0
        %v4168 = vadd.f32 %v4117, %v4167
        %4169 = vmatprep.mubr.bf16.mxu0 %v3200
        %4170 = vmatmul.mubr.bf16.gmra.mxu0 %v3199
        %v4171 = vpop.f32.mrf.mxu0
        %v4172 = vadd.f32 %v4121, %v4171
        %v4173 = vpop.f32.mrf.mxu0
        %v4174 = vadd.f32 %v4123, %v4173
        %v4175 = vpop.f32.mrf.mxu0
        %v4176 = vpop.f32.mrf.mxu0
        %4177 = vdwg.mxu0
        %4178 = vmatprep.subr.bf16.mxu0 %v3816
        %4179 = vmatpush1.bf16.msra.mxu0 %v3815
        %4180 = vmatprep.subr.bf16.mxu0 %v3814
        %4181 = vmatpush1.bf16.msra.mxu0 %v3813
        %4182 = vmatprep.subr.bf16.mxu0 %v3812
        %4183 = vmatpush1.bf16.msra.mxu0 %v3811
        %4184 = vmatprep.subr.bf16.mxu0 %v3810
        %4185 = vmatpush1.bf16.msra.mxu0 %v3809
        %4186 = vmatprep.subr.bf16.mxu0 %v3808
        %4187 = vmatpush1.bf16.msra.mxu0 %v3807
        %4188 = vmatprep.subr.bf16.mxu0 %v3806
        %4189 = vmatpush1.bf16.msra.mxu0 %v3805
        %4190 = vmatprep.subr.bf16.mxu0 %v3804
        %4191 = vmatpush1.bf16.msra.mxu0 %v3803
        %4192 = vmatprep.subr.bf16.mxu0 %v3802
        %4193 = vmatpush1.bf16.msra.mxu0 %v3801
        %4194 = vmatprep.subr.bf16.mxu0 %v3832
        %4195 = vmatpush2.bf16.msra.mxu0 %v3831
        %4196 = vmatprep.subr.bf16.mxu0 %v3830
        %4197 = vmatpush2.bf16.msra.mxu0 %v3829
        %4198 = vmatprep.subr.bf16.mxu0 %v3828
        %4199 = vmatpush2.bf16.msra.mxu0 %v3827
        %4200 = vmatprep.subr.bf16.mxu0 %v3826
        %4201 = vmatpush2.bf16.msra.mxu0 %v3825
        %4202 = vmatprep.subr.bf16.mxu0 %v3824
        %4203 = vmatpush2.bf16.msra.mxu0 %v3823
        %4204 = vmatprep.subr.bf16.mxu0 %v3822
        %4205 = vmatpush2.bf16.msra.mxu0 %v3821
        %4206 = vmatprep.subr.bf16.mxu0 %v3820
        %4207 = vmatpush2.bf16.msra.mxu0 %v3819
        %4208 = vmatprep.subr.bf16.mxu0 %v3818
        %4209 = vmatpush2.bf16.msra.mxu0 %v3817
        %4210 = vmatprep.mubr.bf16.mxu0 %v3192
        %4211 = vmatmul.mubr.bf16.gmra.mxu0 %v3191
        %v4212 = vpop.f32.mrf.mxu0
        %v4213 = vadd.f32 %v4162, %v4212
        %v4214 = vpop.f32.mrf.mxu0
        %v4215 = vadd.f32 %v4164, %v4214
        %v4216 = vpop.f32.mrf.mxu0
        %v4217 = vadd.f32 %v4166, %v4216
        %v4218 = vpop.f32.mrf.mxu0
        %v4219 = vadd.f32 %v4168, %v4218
        %4220 = vmatprep.mubr.bf16.mxu0 %v3202
        %4221 = vmatmul.mubr.bf16.gmra.mxu0 %v3201
        %v4222 = vpop.f32.mrf.mxu0
        %v4223 = vadd.f32 %v4172, %v4222
        %v4224 = vpop.f32.mrf.mxu0
        %v4225 = vadd.f32 %v4174, %v4224
        %v4226 = vpop.f32.mrf.mxu0
        %v4227 = vpop.f32.mrf.mxu0
        %4228 = vdwg.mxu0
        %4229 = vmatprep.subr.bf16.mxu0 %v3848
        %4230 = vmatpush1.bf16.msra.mxu0 %v3847
        %4231 = vmatprep.subr.bf16.mxu0 %v3846
        %4232 = vmatpush1.bf16.msra.mxu0 %v3845
        %4233 = vmatprep.subr.bf16.mxu0 %v3844
        %4234 = vmatpush1.bf16.msra.mxu0 %v3843
        %4235 = vmatprep.subr.bf16.mxu0 %v3842
        %4236 = vmatpush1.bf16.msra.mxu0 %v3841
        %4237 = vmatprep.subr.bf16.mxu0 %v3840
        %4238 = vmatpush1.bf16.msra.mxu0 %v3839
        %4239 = vmatprep.subr.bf16.mxu0 %v3838
        %4240 = vmatpush1.bf16.msra.mxu0 %v3837
        %4241 = vmatprep.subr.bf16.mxu0 %v3836
        %4242 = vmatpush1.bf16.msra.mxu0 %v3835
        %4243 = vmatprep.subr.bf16.mxu0 %v3834
        %4244 = vmatpush1.bf16.msra.mxu0 %v3833
        %4245 = vmatprep.subr.bf16.mxu0 %v3864
        %4246 = vmatpush2.bf16.msra.mxu0 %v3863
        %4247 = vmatprep.subr.bf16.mxu0 %v3862
        %4248 = vmatpush2.bf16.msra.mxu0 %v3861
        %4249 = vmatprep.subr.bf16.mxu0 %v3860
        %4250 = vmatpush2.bf16.msra.mxu0 %v3859
        %4251 = vmatprep.subr.bf16.mxu0 %v3858
        %4252 = vmatpush2.bf16.msra.mxu0 %v3857
        %4253 = vmatprep.subr.bf16.mxu0 %v3856
        %4254 = vmatpush2.bf16.msra.mxu0 %v3855
        %4255 = vmatprep.subr.bf16.mxu0 %v3854
        %4256 = vmatpush2.bf16.msra.mxu0 %v3853
        %4257 = vmatprep.subr.bf16.mxu0 %v3852
        %4258 = vmatpush2.bf16.msra.mxu0 %v3851
        %4259 = vmatprep.subr.bf16.mxu0 %v3850
        %4260 = vmatpush2.bf16.msra.mxu0 %v3849
        %4261 = vmatprep.mubr.bf16.mxu0 %v3194
        %4262 = vmatmul.mubr.bf16.gmra.mxu0 %v3193
        %v4263 = vpop.f32.mrf.mxu0
        %v4264 = vadd.f32 %v4213, %v4263
        %v4265 = vpop.f32.mrf.mxu0
        %v4266 = vadd.f32 %v4215, %v4265
        %v4267 = vpop.f32.mrf.mxu0
        %v4268 = vadd.f32 %v4217, %v4267
        %v4269 = vpop.f32.mrf.mxu0
        %v4270 = vadd.f32 %v4219, %v4269
        %4271 = vmatprep.mubr.bf16.mxu0 %v3204
        %4272 = vmatmul.mubr.bf16.gmra.mxu0 %v3203
        %v4273 = vpop.f32.mrf.mxu0
        %v4274 = vadd.f32 %v4223, %v4273
        %v4275 = vpop.f32.mrf.mxu0
        %v4276 = vadd.f32 %v4225, %v4275
        %v4277 = vpop.f32.mrf.mxu0
        %v4278 = vpop.f32.mrf.mxu0
        %4279 = vdwg.mxu0
        %v4280 = vld [vmem:[%s1] sm:$0xff]
        %4282 = vset.pattern.permute.xlu0 0
        %4283 = vperm.xlu0 %4282, %v4280
        %v4284 = vpop.permute.xlu0 %4283
        %v4286 = vmul.f32 %v4284, %v4264
        %v4287 = vmul.f32 %v4284, %v4266
        %v4288 = vsub.f32 1.0, %v4280
        %4290 = vset.pattern.permute.xlu0 0
        %4291 = vperm.xlu0 %4290, %v4288
        %v4292 = vpop.permute.xlu0 %4291
        %v4294 = vmul.f32 %v4292, %v4268
        %v4295 = vmul.f32 %v4292, %v4270
        %v4296 = vadd.f32 %v4286, %v4294
        %v4297 = vadd.f32 %v4287, %v4295
        %v4298 = vsub.f32 %v4274, %v4296
        %v4299 = vsub.f32 %v4276, %v4297
        %v4300 = vmul.f32 %v4298, %v4298
        %v4301 = vmul.f32 %v4299, %v4299
        %v4302 = vadd.f32 %v4300, %v4301
        %4303 = vadd.xlane.f32.xlu0 %v4302
        %v4304 = vpop.xlane.xlu0 %4303
        %v4305 = vrot.slane %v4304, 4
        %v4306 = vadd.f32 %v4304, %v4305
        %v4307 = vrot.slane %v4306, 2
        %v4308 = vadd.f32 %v4306, %v4307
        %v4309 = vrot.slane %v4308, 1
        %v4310 = vadd.f32 %v4308, %v4309
        %v4311 = vrot.slane %v4264, 4
        %v4312 = vadd.f32 %v4264, %v4311
        %v4313 = vrot.slane %v4312, 2
        %v4314 = vadd.f32 %v4312, %v4313
        %v4315 = vrot.slane %v4314, 1
        %v4316 = vadd.f32 %v4314, %v4315
        %v4317 = vrot.slane %v4266, 4
        %v4318 = vadd.f32 %v4266, %v4317
        %v4319 = vrot.slane %v4318, 2
        %v4320 = vadd.f32 %v4318, %v4319
        %v4321 = vrot.slane %v4320, 1
        %v4322 = vadd.f32 %v4320, %v4321
        %v4323 = vrcp.pop 8.0
        %v4324 = vmul.f32 %v4316, %v4323
        %v4325 = vmul.f32 %v4322, %v4323
        %v4326 = vsub.f32 %v4264, %v4324
        %v4327 = vsub.f32 %v4266, %v4325
        %v4328 = vrot.slane %v4268, 4
        %v4329 = vadd.f32 %v4268, %v4328
        %v4330 = vrot.slane %v4329, 2
        %v4331 = vadd.f32 %v4329, %v4330
        %v4332 = vrot.slane %v4331, 1
        %v4333 = vadd.f32 %v4331, %v4332
        %v4334 = vrot.slane %v4270, 4
        %v4335 = vadd.f32 %v4270, %v4334
        %v4336 = vrot.slane %v4335, 2
        %v4337 = vadd.f32 %v4335, %v4336
        %v4338 = vrot.slane %v4337, 1
        %v4339 = vadd.f32 %v4337, %v4338
        %v4340 = vmul.f32 %v4333, %v4323
        %v4341 = vmul.f32 %v4339, %v4323
        %v4342 = vsub.f32 %v4268, %v4340
        %v4343 = vsub.f32 %v4270, %v4341
        %v4344 = vmul.f32 %v4326, %v4326
        %v4345 = vmul.f32 %v4327, %v4327
        %v4346 = vrot.slane %v4344, 4
        %v4347 = vadd.f32 %v4344, %v4346
        %v4348 = vrot.slane %v4347, 2
        %v4349 = vadd.f32 %v4347, %v4348
        %v4350 = vrot.slane %v4349, 1
        %v4351 = vadd.f32 %v4349, %v4350
        %v4352 = vrot.slane %v4345, 4
        %v4353 = vadd.f32 %v4345, %v4352
        %v4354 = vrot.slane %v4353, 2
        %v4355 = vadd.f32 %v4353, %v4354
        %v4356 = vrot.slane %v4355, 1
        %v4357 = vadd.f32 %v4355, %v4356
        %v4358 = vmul.f32 %v4351, 0.14285715
        %v4359 = vmul.f32 %v4357, 0.14285715
        %v4360 = vmul.f32 %v4342, %v4342
        %v4361 = vmul.f32 %v4343, %v4343
        %v4362 = vrot.slane %v4360, 4
        %v4363 = vadd.f32 %v4360, %v4362
        %v4364 = vrot.slane %v4363, 2
        %v4365 = vadd.f32 %v4363, %v4364
        %v4366 = vrot.slane %v4365, 1
        %v4367 = vadd.f32 %v4365, %v4366
        %v4368 = vrot.slane %v4361, 4
        %v4369 = vadd.f32 %v4361, %v4368
        %v4370 = vrot.slane %v4369, 2
        %v4371 = vadd.f32 %v4369, %v4370
        %v4372 = vrot.slane %v4371, 1
        %v4373 = vadd.f32 %v4371, %v4372
        %v4374 = vmul.f32 %v4367, 0.14285715
        %v4375 = vmul.f32 %v4373, 0.14285715
        %v4376 = vadd.f32 %v4358, 0.0001
        %v4377 = vadd.f32 %v4359, 0.0001
        %v4378 = vrsqrt.pop %v4376
        %v4379 = vmul.f32 %v4376, %v4378
        %vm4380 = vcmp.eq.f32.partialorder %v4376, inf
        %v4381 = vsel %vm4380, %v4376, %v4379
        %vm4382 = vcmp.eq.f32.partialorder %v4376, 0.0
        %v4383 = vand.u32 %v4376, 2147483648
        %v4384 = vsel %vm4382, %v4383, %v4381
        %v4385 = vrsqrt.pop %v4377
        %v4386 = vmul.f32 %v4377, %v4385
        %vm4387 = vcmp.eq.f32.partialorder %v4377, inf
        %v4388 = vsel %vm4387, %v4377, %v4386
        %vm4389 = vcmp.eq.f32.partialorder %v4377, 0.0
        %v4390 = vand.u32 %v4377, 2147483648
        %v4391 = vsel %vm4389, %v4390, %v4388
        %v4392 = vsub.f32 1.0, %v4384
        %v4393 = vsub.f32 1.0, %v4391
        %v4394 = vmax.f32 %v4392, 0.0
        %v4395 = vmax.f32 %v4393, 0.0
        %v4396 = vadd.f32 %v4394, %v4395
        %4397 = vadd.xlane.f32.xlu0 %v4396
        %v4398 = vpop.xlane.xlu0 %4397
        %v4399 = vadd.f32 %v4374, 0.0001
        %v4400 = vadd.f32 %v4375, 0.0001
        %v4401 = vrsqrt.pop %v4399
        %v4402 = vmul.f32 %v4399, %v4401
        %vm4403 = vcmp.eq.f32.partialorder %v4399, inf
        %v4404 = vsel %vm4403, %v4399, %v4402
        %vm4405 = vcmp.eq.f32.partialorder %v4399, 0.0
        %v4406 = vand.u32 %v4399, 2147483648
        %v4407 = vsel %vm4405, %v4406, %v4404
        %v4408 = vrsqrt.pop %v4400
        %v4409 = vmul.f32 %v4400, %v4408
        %vm4410 = vcmp.eq.f32.partialorder %v4400, inf
        %v4411 = vsel %vm4410, %v4400, %v4409
        %vm4412 = vcmp.eq.f32.partialorder %v4400, 0.0
        %v4413 = vand.u32 %v4400, 2147483648
        %v4414 = vsel %vm4412, %v4413, %v4411
        %v4415 = vsub.f32 1.0, %v4407
        %v4416 = vsub.f32 1.0, %v4414
        %v4417 = vmax.f32 %v4415, 0.0
        %v4418 = vmax.f32 %v4416, 0.0
        %v4419 = vadd.f32 %v4417, %v4418
        %4420 = vadd.xlane.f32.xlu0 %v4419
        %v4421 = vpop.xlane.xlu0 %4420
        %v4422 = vmul.f32 %v4358, %v4358
        %v4423 = vmul.f32 %v4359, %v4359
        %v4424 = vadd.f32 %v4422, %v4423
        %4425 = vadd.xlane.f32.xlu0 %v4424
        %v4426 = vpop.xlane.xlu0 %4425
        %v4427 = vmul.f32 %v4374, %v4374
        %v4428 = vmul.f32 %v4375, %v4375
        %v4429 = vadd.f32 %v4427, %v4428
        %4430 = vadd.xlane.f32.xlu0 %v4429
        %v4431 = vpop.xlane.xlu0 %4430
        %v4432 = vld [vmem:[#allocation15] sm:$0xff]
        %v4433 = vld [vmem:[#allocation15 + $0x8] sm:$0xff]
        %4434 = vmatprep.subr.mxu0 0.0
        %4435 = vmatpush1.xpose.msra.mxu0 0.0
        %4436 = vmatprep.subr.mxu0 0.0
        %4437 = vmatpush1.xpose.msra.mxu0 0.0
        %4438 = vmatprep.subr.mxu0 0.0
        %4439 = vmatpush1.xpose.msra.mxu0 0.0
        %4440 = vmatprep.subr.mxu0 0.0
        %4441 = vmatpush1.xpose.msra.mxu0 0.0
        %4442 = vmatprep.subr.mxu0 0.0
        %4443 = vmatpush1.xpose.msra.mxu0 0.0
        %4444 = vmatprep.subr.mxu0 0.0
        %4445 = vmatpush1.xpose.msra.mxu0 0.0
        %4446 = vmatprep.subr.mxu0 0.0
        %4447 = vmatpush1.xpose.msra.mxu0 0.0
        %4448 = vmatprep.subr.mxu0 0.0
        %4449 = vmatpush1.xpose.msra.mxu0 0.0
        %4450 = vmatprep.subr.mxu0 0.0
        %4451 = vmatpush1.xpose.msra.mxu0 0.0
        %4452 = vmatprep.subr.mxu0 0.0
        %4453 = vmatpush1.xpose.msra.mxu0 0.0
        %4454 = vmatprep.subr.mxu0 0.0
        %4455 = vmatpush1.xpose.msra.mxu0 0.0
        %4456 = vmatprep.subr.mxu0 0.0
        %4457 = vmatpush1.xpose.msra.mxu0 0.0
        %4458 = vmatprep.subr.mxu0 0.0
        %4459 = vmatpush1.xpose.msra.mxu0 0.0
        %4460 = vmatprep.subr.mxu0 0.0
        %4461 = vmatpush1.xpose.msra.mxu0 0.0
        %4462 = vmatprep.subr.mxu0 %v4343
        %4463 = vmatpush1.xpose.msra.mxu0 %v4342
        %4464 = vmatprep.subr.mxu0 %v4327
        %4465 = vmatpush1.xpose.msra.mxu0 %v4326
        %4466 = vmatprep.subr.mxu0 0.0
        %4467 = vmatpush2.xpose.msra.mxu0 0.0
        %4468 = vmatprep.subr.mxu0 0.0
        %4469 = vmatpush2.xpose.msra.mxu0 0.0
        %4470 = vmatprep.subr.mxu0 0.0
        %4471 = vmatpush2.xpose.msra.mxu0 0.0
        %4472 = vmatprep.subr.mxu0 0.0
        %4473 = vmatpush2.xpose.msra.mxu0 0.0
        %4474 = vmatprep.subr.mxu0 0.0
        %4475 = vmatpush2.xpose.msra.mxu0 0.0
        %4476 = vmatprep.subr.mxu0 0.0
        %4477 = vmatpush2.xpose.msra.mxu0 0.0
        %4478 = vmatprep.subr.mxu0 0.0
        %4479 = vmatpush2.xpose.msra.mxu0 0.0
        %4480 = vmatprep.subr.mxu0 0.0
        %4481 = vmatpush2.xpose.msra.mxu0 0.0
        %4482 = vmatprep.subr.mxu0 0.0
        %4483 = vmatpush2.xpose.msra.mxu0 0.0
        %4484 = vmatprep.subr.mxu0 0.0
        %4485 = vmatpush2.xpose.msra.mxu0 0.0
        %4486 = vmatprep.subr.mxu0 0.0
        %4487 = vmatpush2.xpose.msra.mxu0 0.0
        %4488 = vmatprep.subr.mxu0 0.0
        %4489 = vmatpush2.xpose.msra.mxu0 0.0
        %4490 = vmatprep.subr.mxu0 0.0
        %4491 = vmatpush2.xpose.msra.mxu0 0.0
        %4492 = vmatprep.subr.mxu0 0.0
        %4493 = vmatpush2.xpose.msra.mxu0 0.0
        %4494 = vmatprep.subr.mxu0 0.0
        %4495 = vmatpush2.xpose.msra.mxu0 0.0
        %4496 = vmatprep.subr.mxu0 0.0
        %4497 = vmatpush2.xpose.msra.mxu0 0.0
        %4498 = vmatprep.mubr.f32.mxu0 %v4327
        %4499 = vmatmul.mubr.f32.gmra.mxu0 %v4326
        %v4500 = vpop.f32.mrf.mxu0
        %v4501 = vadd.f32 0.0, %v4500
        %v4502 = vpop.f32.mrf.mxu0
        %4503 = vmatprep.mubr.f32.mxu0 %v4343
        %4504 = vmatmul.mubr.f32.gmra.mxu0 %v4342
        %v4505 = vpop.f32.mrf.mxu0
        %v4506 = vadd.f32 0.0, %v4505
        %v4507 = vpop.f32.mrf.mxu0
        %4508 = vdwg.mxu0
        %v4509 = vadd.f32 %v4432, %v4501
        %v4510 = vadd.f32 %v4433, %v4506
        %vm4511 = vcmask 130048
        %4512 = vst.msk [vmem:[#allocation15] sm:$0xff] %vm4511, %v4509
        %4513 = vst.msk [vmem:[#allocation15 + $0x8] sm:$0xff] %vm4511, %v4510
        %v4514 = vlaneseq
        %v4515 = vand.u32 %v4514, 127
        %v4516 = vld [vmem:[#allocation14] sm:$0x1]
        %vm4517 = vcmp.eq.s32.totalorder %v4515, 0
        %v4518 = vsel %vm4517, %v4310, 0.0
        %vm4519 = vcmp.eq.s32.totalorder %v4515, 1
        %v4520 = vsel %vm4519, %v4398, 0.0
        %v4521 = vadd.f32 %v4518, %v4520
        %vm4522 = vcmp.eq.s32.totalorder %v4515, 2
        %v4523 = vsel %vm4522, %v4421, 0.0
        %v4524 = vadd.f32 %v4521, %v4523
        %vm4525 = vcmp.eq.s32.totalorder %v4515, 3
        %v4526 = vsel %vm4525, %v4426, 0.0
        %v4527 = vadd.f32 %v4524, %v4526
        %vm4528 = vcmp.eq.s32.totalorder %v4515, 4
        %v4529 = vsel %vm4528, %v4431, 0.0
        %v4530 = vadd.f32 %v4527, %v4529
        %v4531 = vadd.f32 %v4516, %v4530
        %4532 = vst [vmem:[#allocation14] sm:$0x1] %v4531
        // Predicated region
        $region77: #{tpu_custom_call.1} parent=47 // pred_check
          %p4533 = pneg %p214
        $region78: #{tpu_custom_call.1} parent=47 // pred_check_branch
          %4535 = sbr.rel (%p4533) target = $region80
        $region79: #{tpu_custom_call.1} parent=47 // pred_region
          %s4537 = ssub.s32 16, 16
          %4538 = vsyncadd [#allocation5], %s4537
          %s4539 = smul.addr %s32, 16
          %s4540 = scalar_lea.hbm %s7, %s4539
          %s4542 = sshll.u32 [#allocation14], 4
          %s4543 = int_to_ptr.vmem [resolvable:$true] %s4542
          %4545 = dma.vmem_to_hbm [thread:$0]  %s4543, 16, %s4540, [#allocation5]
        $region80: #{tpu_custom_call.1} parent=47 // pred_fallthru
          _
        // Predicated region
        $region81: #{tpu_custom_call.1} parent=47 // pred_check
          %p4546 = pneg %p240
        $region82: #{tpu_custom_call.1} parent=47 // pred_check_branch
          %4548 = sbr.rel (%p4546) target = $region84
        $region83: #{tpu_custom_call.1} parent=47 // pred_region
          %s4550 = ssub.s32 256, 256
          %4551 = vsyncadd [#allocation16], %s4550
          %s4552 = smul.addr %s32, 2
          %s4553 = smul.addr %s4552, 128
          %s4554 = scalar_lea.hbm %s8, %s4553
          %s4555 = sshll.u32 [#allocation15], 4
          %s4556 = int_to_ptr.vmem [resolvable:$true] %s4555
          %4561 = dma.vmem_to_hbm [thread:$0]  %s4556, 256, %s4554, [#allocation16], 128, 128, 8
        $region84: #{tpu_custom_call.1} parent=47 // pred_fallthru
          _
        // Predicated region
        $region85: #{tpu_custom_call.1} parent=47 // pred_check
          %p4562 = pneg %p214
        $region86: #{tpu_custom_call.1} parent=47 // pred_check_branch
          %4564 = sbr.rel (%p4562) target = $region88
        $region87: #{tpu_custom_call.1} parent=47 // pred_region
          %4565 = dma.done [#allocation5], 16
        $region88: #{tpu_custom_call.1} parent=47 // pred_fallthru
          _
        // Predicated region
        $region89: #{tpu_custom_call.1} parent=47 // pred_check
          %p4566 = pneg %p240
        $region90: #{tpu_custom_call.1} parent=47 // pred_check_branch
          %4568 = sbr.rel (%p4566) target = $region92
        $region91: #{tpu_custom_call.1} parent=47 // pred_region
          %4569 = dma.done [#allocation16], 256
        $region92: #{tpu_custom_call.1} parent=47 // pred_fallthru
          _
      $region48: #{tpu_custom_call.1} parent=5 // pred_fallthru
        _
      %p4570 = scmp.le.s32.totalorder 2, %s23
      // Predicated region
      $region93: #{tpu_custom_call.1} parent=5 // pred_check
        %p4571 = pneg %p4570
      $region94: #{tpu_custom_call.1} parent=5 // pred_check_branch
        %4573 = sbr.rel (%p4571) target = $region96
      $region95: #{tpu_custom_call.1} parent=5 // pred_region
        %s4574 = ssub.s32 %s23, 2
      $region96: #{tpu_custom_call.1} parent=5 // pred_fallthru
        _
    $region6: #{tpu_custom_call.1} parent=1 // loop_footer
      %s27 = sadd.s32 1, %s23
    $region7: #{tpu_custom_call.1} parent=1 // loop_footer_branch
      %22 = sbr.rel target = $region3
    $region8: #{tpu_custom_call.1} parent=1 // loop_exit
      _
    %4575 = vsyncpa [#allocation4], 1
    %s4576 = scalar_lea.sflag [#allocation4], 1
    %4577 = vsyncpa %s4576, 1
    %4578 = vsyncpa [#allocation7], 1
    %4579 = vsyncpa [#allocation10], 1
    %4580 = vsyncpa [#allocation13], 1
    %s4581 = scalar_lea.sflag [#allocation13], 1
    %4582 = vsyncpa %s4581, 1
    %4583 = vsyncpa [#allocation5], 1
    %s4584 = scalar_lea.sflag [#allocation5], 1
    %4585 = vsyncpa %s4584, 1
    %4586 = vsyncpa [#allocation16], 1

</llo_original>
